<compile_context>
chip_gen: v5e
topology: v5e:2x2
jax: 0.10.0
libtpu: 0.0.40
codegen_flags: <defaults>
</compile_context>

<pallas_src>
import functools

import jax
import jax.numpy as jnp
from jax.experimental import pallas as pl
from jax.experimental.pallas import tpu as pltpu


LANE = 128  # TPU lane width; final-layer output channels are padded to this.


def _fused_same_conv_kernel(*refs, H, W, K, C, cin0, num_layers):
    """Fused SameConv stack; one image per grid step.

    refs = (x_ref, w_ref_0, ..., w_ref_{L-1}, o_ref, pad_ref, patch_ref)

    x_ref:     (1, H, W, cin0)     input image (VMEM)
    w_ref_l:   (K*K*C, ncols_l)    flattened weight; ncols = C for intermediate
                                   layers, lane-padded (128-mult) for the last
    o_ref:     (1, H*W, Npad)      lane-dense output tile
    pad_ref:   (H+2p, W+2p, C)     zero-padded activation scratch (VMEM)
    patch_ref: (H*W, K*K*C)        im2col operand scratch (VMEM)
    """
    x_ref = refs[0]
    w_refs = refs[1:1 + num_layers]
    o_ref = refs[1 + num_layers]
    pad_ref = refs[2 + num_layers]
    patch_ref = refs[3 + num_layers]

    p = K // 2

    # Zero the padded activation buffer every step (scratch persists across
    # grid steps and is per-core under megacore sharding), then place the
    # image in its interior.  Channels >= cin0 stay zero; the layer-0 weight
    # is zero-padded on the input-channel axis to match, so this is exact.
    pad_ref[...] = jnp.zeros_like(pad_ref)
    pad_ref[p:p + H, p:p + W, :cin0] = x_ref[0]

    for l in range(num_layers):
        # im2col: pack the K*K shifted windows into one (H*W, K*K*C) operand
        # so the whole layer is a single MXU matmul.
        for kh in range(K):
            for kw in range(K):
                c0 = (kh * K + kw) * C
                win = pad_ref[kh:kh + H, kw:kw + W, :]          # (H, W, C)
                patch_ref[:, c0:c0 + C] = win.reshape(H * W, C)

        y = jnp.dot(patch_ref[...], w_refs[l][...],
                    preferred_element_type=jnp.float32)          # (H*W, ncols)

        if l + 1 < num_layers:
            # Intermediate activation stays in VMEM: write it straight back
            # into the interior of the padded buffer for the next layer.
            pad_ref[p:p + H, p:p + W, :] = y.reshape(H, W, C)
        else:
            o_ref[0] = y.astype(o_ref.dtype)                     # lane-dense store


def _prep_weights(params, C, nout_pad):
    """Zero-pad channel dims and flatten conv weights for the fused kernel.

    params[l]: (K, K, cin_l, cout_l) in HWIO layout.
    Returns a list of (K*K*C, ncols_l) float32 arrays where ncols_l = C for
    intermediate layers and nout_pad (multiple of 128) for the last layer.
    """
    L = len(params)
    flats = []
    for l, w in enumerate(params):
        K, K2, cin, cout = w.shape
        ncols = nout_pad if l == L - 1 else C
        wp = jnp.zeros((K, K, C, ncols), jnp.float32)
        wp = wp.at[:, :, :cin, :cout].set(w.astype(jnp.float32))
        flats.append(wp.reshape(K * K * C, ncols))
    return flats


@jax.jit
def same_conv_forward(x_nchw, params):
    """SameConv.forward: sequential 'same' convs, no bias. NCHW in/out."""
    B, cin0, H, W = x_nchw.shape
    L = len(params)
    K = params[0].shape[0]
    assert all(w.shape[0] == w.shape[1] == K for w in params), \
        "only square kernels supported"
    assert K % 2 == 1, "padding=int(kernel_size/2) is only 'same' for odd K"
    cout = params[-1].shape[3]

    # Uniform internal channel width (zero-padded) so every layer uses the
    # same K*K*C contraction and the same VMEM pad buffer.
    C = max(max(w.shape[2], w.shape[3]) for w in params)
    nout_pad = ((cout + LANE - 1) // LANE) * LANE   # lane-dense final store

    w_flats = _prep_weights(params, C, nout_pad)
    x_nhwc = jnp.transpose(x_nchw, (0, 2, 3, 1)).astype(jnp.float32)

    p = K // 2
    Hp, Wp = H + 2 * p, W + 2 * p

    kernel = functools.partial(
        _fused_same_conv_kernel,
        H=H, W=W, K=K, C=C, cin0=cin0, num_layers=L)

    in_specs = [pl.BlockSpec((1, H, W, cin0), lambda b: (b, 0, 0, 0))]
    for wf in w_flats:
        kk, nc = wf.shape
        in_specs.append(pl.BlockSpec((kk, nc), lambda b: (0, 0)))

    out = pl.pallas_call(
        kernel,
        out_shape=jax.ShapeDtypeStruct((B, H * W, nout_pad), jnp.float32),
        grid_spec=pltpu.PrefetchScalarGridSpec(
            num_scalar_prefetch=0,
            grid=(B,),
            in_specs=in_specs,
            out_specs=pl.BlockSpec((1, H * W, nout_pad), lambda b: (b, 0, 0)),
            scratch_shapes=[
                pltpu.VMEM((Hp, Wp, C), jnp.float32),          # padded act
                pltpu.VMEM((H * W, K * K * C), jnp.float32),   # im2col operand
            ]),
        compiler_params=pltpu.CompilerParams(
            dimension_semantics=("parallel",)),
    )(x_nhwc, *w_flats)

    out = out[:, :, :cout].reshape(B, H, W, cout)
    return jnp.transpose(out, (0, 3, 1, 2))


def make_same_conv_params(key, num_layers, kernel_size, in_channels,
                          out_channels):
    """Deterministic weights in (KH, KW, Cin, Cout) (HWIO) layout."""
    params = []
    cin = in_channels
    for _ in range(num_layers):
        key, sub = jax.random.split(key)
        fan_in = cin * kernel_size * kernel_size
        bound = 1.0 / (fan_in ** 0.5)  # PyTorch kaiming_uniform-ish bound
        w = jax.random.uniform(
            sub, (kernel_size, kernel_size, cin, out_channels),
            dtype=jnp.float32, minval=-bound, maxval=bound)
        params.append(w)
        cin = out_channels
    return params


def _reference_forward(x_nchw, params):
    x = x_nchw
    for w in params:
        x = jax.lax.conv_general_dilated(
            x, w, window_strides=(1, 1),
            padding=[(w.shape[0] // 2, w.shape[0] // 2)] * 2,
            dimension_numbers=("NCHW", "HWIO", "NCHW"),
            precision=jax.lax.Precision.HIGHEST)
    return x


if __name__ == "__main__":
    num_layers = 2
    kernel_size = 3
    in_channels = 4
    out_channels = 8

    key = jax.random.PRNGKey(0)
    key, xkey = jax.random.split(key)
    x = jax.random.normal(xkey, (2, in_channels, 16, 16), dtype=jnp.float32)

    params = make_same_conv_params(key, num_layers, kernel_size,
                                   in_channels, out_channels)

    out = same_conv_forward(x, params)
    out = jax.block_until_ready(out)

    ref = _reference_forward(x, params)
    assert out.shape == ref.shape == (2, out_channels, 16, 16)
    assert jnp.allclose(out, ref, atol=2e-3, rtol=2e-3), float(
        jnp.max(jnp.abs(out - ref)))

    print("KERNEL_OK")
</pallas_src>

<mosaic_0001>
module attributes {stable_mosaic.version = 11 : i64} {
  func.func @_fused_same_conv_kernel(%arg0: i32, %arg1: memref<1x16x16x4xf32, #tpu.memory_space<vmem>>, %arg2: memref<72x8xf32, #tpu.memory_space<vmem>>, %arg3: memref<72x128xf32, #tpu.memory_space<vmem>>, %arg4: memref<1x256x128xf32, #tpu.memory_space<vmem>>, %arg5: memref<18x18x8xf32, #tpu.memory_space<vmem>>, %arg6: memref<256x72xf32, #tpu.memory_space<vmem>>) attributes {dimension_semantics = [#tpu.dimension_semantics<parallel>], iteration_bounds = array<i64: 2>, scalar_prefetch = 0 : i64, scratch_operands = 2 : i64, tpu.core_type = #tpu.core_type<tc>, window_params = [{transform_indices = @transform_0, window_bounds = array<i64: 1, 16, 16, 4>}, {pipeline_mode = #tpu.pipeline_mode<synchronous>, transform_indices = @transform_1, window_bounds = array<i64: 72, 8>}, {pipeline_mode = #tpu.pipeline_mode<synchronous>, transform_indices = @transform_2, window_bounds = array<i64: 72, 128>}, {transform_indices = @transform_3, window_bounds = array<i64: 1, 256, 128>}]} {
    %cst = arith.constant 0.000000e+00 : f32
    %0 = vector.broadcast %cst : f32 to vector<18x18x8xf32>
    %c0 = arith.constant 0 : index
    %c0_0 = arith.constant 0 : index
    %c0_1 = arith.constant 0 : index
    %1 = vector.load %arg5[%c0, %c0_0, %c0_1] : memref<18x18x8xf32, #tpu.memory_space<vmem>>, vector<18x18x8xf32>
    tpu.vector_store %arg5[%c0, %c0_0, %c0_1], %0 {strides = array<i32>} : memref<18x18x8xf32, #tpu.memory_space<vmem>>, vector<18x18x8xf32>,
    %c0_2 = arith.constant 0 : index
    %c0_3 = arith.constant 0 : index
    %c0_4 = arith.constant 0 : index
    %c0_5 = arith.constant 0 : index
    %2 = vector.load %arg1[%c0_2, %c0_3, %c0_4, %c0_5] : memref<1x16x16x4xf32, #tpu.memory_space<vmem>>, vector<1x16x16x4xf32>
    %3 = vector.shape_cast %2 : vector<1x16x16x4xf32> to vector<16x16x4xf32>
    %c1 = arith.constant 1 : index
    %c1_6 = arith.constant 1 : index
    %c0_7 = arith.constant 0 : index
    %4 = vector.load %arg5[%c1, %c1_6, %c0_7] : memref<18x18x8xf32, #tpu.memory_space<vmem>>, vector<16x16x4xf32>
    tpu.vector_store %arg5[%c1, %c1_6, %c0_7], %3 {strides = array<i32>} : memref<18x18x8xf32, #tpu.memory_space<vmem>>, vector<16x16x4xf32>,
    %c0_8 = arith.constant 0 : index
    %c0_9 = arith.constant 0 : index
    %c0_10 = arith.constant 0 : index
    %5 = vector.load %arg5[%c0_8, %c0_9, %c0_10] : memref<18x18x8xf32, #tpu.memory_space<vmem>>, vector<16x16x8xf32>
    %6 = vector.shape_cast %5 : vector<16x16x8xf32> to vector<256x8xf32>
    %c0_11 = arith.constant 0 : index
    %c0_12 = arith.constant 0 : index
    %7 = vector.load %arg6[%c0_11, %c0_12] : memref<256x72xf32, #tpu.memory_space<vmem>>, vector<256x8xf32>
    tpu.vector_store %arg6[%c0_11, %c0_12], %6 {strides = array<i32>} : memref<256x72xf32, #tpu.memory_space<vmem>>, vector<256x8xf32>,
    %c0_13 = arith.constant 0 : index
    %c1_14 = arith.constant 1 : index
    %c0_15 = arith.constant 0 : index
    %8 = vector.load %arg5[%c0_13, %c1_14, %c0_15] : memref<18x18x8xf32, #tpu.memory_space<vmem>>, vector<16x16x8xf32>
    %9 = vector.shape_cast %8 : vector<16x16x8xf32> to vector<256x8xf32>
    %c0_16 = arith.constant 0 : index
    %c8 = arith.constant 8 : index
    %10 = vector.load %arg6[%c0_16, %c8] : memref<256x72xf32, #tpu.memory_space<vmem>>, vector<256x8xf32>
    tpu.vector_store %arg6[%c0_16, %c8], %9 {strides = array<i32>} : memref<256x72xf32, #tpu.memory_space<vmem>>, vector<256x8xf32>,
    %c0_17 = arith.constant 0 : index
    %c2 = arith.constant 2 : index
    %c0_18 = arith.constant 0 : index
    %11 = vector.load %arg5[%c0_17, %c2, %c0_18] : memref<18x18x8xf32, #tpu.memory_space<vmem>>, vector<16x16x8xf32>
    %12 = vector.shape_cast %11 : vector<16x16x8xf32> to vector<256x8xf32>
    %c0_19 = arith.constant 0 : index
    %c16 = arith.constant 16 : index
    %13 = vector.load %arg6[%c0_19, %c16] : memref<256x72xf32, #tpu.memory_space<vmem>>, vector<256x8xf32>
    tpu.vector_store %arg6[%c0_19, %c16], %12 {strides = array<i32>} : memref<256x72xf32, #tpu.memory_space<vmem>>, vector<256x8xf32>,
    %c1_20 = arith.constant 1 : index
    %c0_21 = arith.constant 0 : index
    %c0_22 = arith.constant 0 : index
    %14 = vector.load %arg5[%c1_20, %c0_21, %c0_22] : memref<18x18x8xf32, #tpu.memory_space<vmem>>, vector<16x16x8xf32>
    %15 = vector.shape_cast %14 : vector<16x16x8xf32> to vector<256x8xf32>
    %c0_23 = arith.constant 0 : index
    %c24 = arith.constant 24 : index
    %16 = vector.load %arg6[%c0_23, %c24] : memref<256x72xf32, #tpu.memory_space<vmem>>, vector<256x8xf32>
    tpu.vector_store %arg6[%c0_23, %c24], %15 {strides = array<i32>} : memref<256x72xf32, #tpu.memory_space<vmem>>, vector<256x8xf32>,
    %c1_24 = arith.constant 1 : index
    %c1_25 = arith.constant 1 : index
    %c0_26 = arith.constant 0 : index
    %17 = vector.load %arg5[%c1_24, %c1_25, %c0_26] : memref<18x18x8xf32, #tpu.memory_space<vmem>>, vector<16x16x8xf32>
    %18 = vector.shape_cast %17 : vector<16x16x8xf32> to vector<256x8xf32>
    %c0_27 = arith.constant 0 : index
    %c32 = arith.constant 32 : index
    %19 = vector.load %arg6[%c0_27, %c32] : memref<256x72xf32, #tpu.memory_space<vmem>>, vector<256x8xf32>
    tpu.vector_store %arg6[%c0_27, %c32], %18 {strides = array<i32>} : memref<256x72xf32, #tpu.memory_space<vmem>>, vector<256x8xf32>,
    %c1_28 = arith.constant 1 : index
    %c2_29 = arith.constant 2 : index
    %c0_30 = arith.constant 0 : index
    %20 = vector.load %arg5[%c1_28, %c2_29, %c0_30] : memref<18x18x8xf32, #tpu.memory_space<vmem>>, vector<16x16x8xf32>
    %21 = vector.shape_cast %20 : vector<16x16x8xf32> to vector<256x8xf32>
    %c0_31 = arith.constant 0 : index
    %c40 = arith.constant 40 : index
    %22 = vector.load %arg6[%c0_31, %c40] : memref<256x72xf32, #tpu.memory_space<vmem>>, vector<256x8xf32>
    tpu.vector_store %arg6[%c0_31, %c40], %21 {strides = array<i32>} : memref<256x72xf32, #tpu.memory_space<vmem>>, vector<256x8xf32>,
    %c2_32 = arith.constant 2 : index
    %c0_33 = arith.constant 0 : index
    %c0_34 = arith.constant 0 : index
    %23 = vector.load %arg5[%c2_32, %c0_33, %c0_34] : memref<18x18x8xf32, #tpu.memory_space<vmem>>, vector<16x16x8xf32>
    %24 = vector.shape_cast %23 : vector<16x16x8xf32> to vector<256x8xf32>
    %c0_35 = arith.constant 0 : index
    %c48 = arith.constant 48 : index
    %25 = vector.load %arg6[%c0_35, %c48] : memref<256x72xf32, #tpu.memory_space<vmem>>, vector<256x8xf32>
    tpu.vector_store %arg6[%c0_35, %c48], %24 {strides = array<i32>} : memref<256x72xf32, #tpu.memory_space<vmem>>, vector<256x8xf32>,
    %c2_36 = arith.constant 2 : index
    %c1_37 = arith.constant 1 : index
    %c0_38 = arith.constant 0 : index
    %26 = vector.load %arg5[%c2_36, %c1_37, %c0_38] : memref<18x18x8xf32, #tpu.memory_space<vmem>>, vector<16x16x8xf32>
    %27 = vector.shape_cast %26 : vector<16x16x8xf32> to vector<256x8xf32>
    %c0_39 = arith.constant 0 : index
    %c56 = arith.constant 56 : index
    %28 = vector.load %arg6[%c0_39, %c56] : memref<256x72xf32, #tpu.memory_space<vmem>>, vector<256x8xf32>
    tpu.vector_store %arg6[%c0_39, %c56], %27 {strides = array<i32>} : memref<256x72xf32, #tpu.memory_space<vmem>>, vector<256x8xf32>,
    %c2_40 = arith.constant 2 : index
    %c2_41 = arith.constant 2 : index
    %c0_42 = arith.constant 0 : index
    %29 = vector.load %arg5[%c2_40, %c2_41, %c0_42] : memref<18x18x8xf32, #tpu.memory_space<vmem>>, vector<16x16x8xf32>
    %30 = vector.shape_cast %29 : vector<16x16x8xf32> to vector<256x8xf32>
    %c0_43 = arith.constant 0 : index
    %c64 = arith.constant 64 : index
    %31 = vector.load %arg6[%c0_43, %c64] : memref<256x72xf32, #tpu.memory_space<vmem>>, vector<256x8xf32>
    tpu.vector_store %arg6[%c0_43, %c64], %30 {strides = array<i32>} : memref<256x72xf32, #tpu.memory_space<vmem>>, vector<256x8xf32>,
    %c0_44 = arith.constant 0 : index
    %c0_45 = arith.constant 0 : index
    %32 = vector.load %arg6[%c0_44, %c0_45] : memref<256x72xf32, #tpu.memory_space<vmem>>, vector<256x72xf32>
    %c0_46 = arith.constant 0 : index
    %c0_47 = arith.constant 0 : index
    %33 = vector.load %arg2[%c0_46, %c0_47] : memref<72x8xf32, #tpu.memory_space<vmem>>, vector<72x8xf32>
    %cst_48 = arith.constant dense<0.000000e+00> : vector<256x8xf32>
    %34 = tpu.matmul %32, %33, %cst_48 {dimension_numbers = #tpu.dot_dimension_numbers<[1], [0], [0], [1], [0, 0, 1, 1], [], []>} : vector<256x72xf32>, vector<72x8xf32>, vector<256x8xf32> -> vector<256x8xf32>
    %35 = vector.shape_cast %34 : vector<256x8xf32> to vector<16x16x8xf32>
    %c1_49 = arith.constant 1 : index
    %c1_50 = arith.constant 1 : index
    %c0_51 = arith.constant 0 : index
    %36 = vector.load %arg5[%c1_49, %c1_50, %c0_51] : memref<18x18x8xf32, #tpu.memory_space<vmem>>, vector<16x16x8xf32>
    tpu.vector_store %arg5[%c1_49, %c1_50, %c0_51], %35 {strides = array<i32>} : memref<18x18x8xf32, #tpu.memory_space<vmem>>, vector<16x16x8xf32>,
    %c0_52 = arith.constant 0 : index
    %c0_53 = arith.constant 0 : index
    %c0_54 = arith.constant 0 : index
    %37 = vector.load %arg5[%c0_52, %c0_53, %c0_54] : memref<18x18x8xf32, #tpu.memory_space<vmem>>, vector<16x16x8xf32>
    %38 = vector.shape_cast %37 : vector<16x16x8xf32> to vector<256x8xf32>
    %c0_55 = arith.constant 0 : index
    %c0_56 = arith.constant 0 : index
    %39 = vector.load %arg6[%c0_55, %c0_56] : memref<256x72xf32, #tpu.memory_space<vmem>>, vector<256x8xf32>
    tpu.vector_store %arg6[%c0_55, %c0_56], %38 {strides = array<i32>} : memref<256x72xf32, #tpu.memory_space<vmem>>, vector<256x8xf32>,
    %c0_57 = arith.constant 0 : index
    %c1_58 = arith.constant 1 : index
    %c0_59 = arith.constant 0 : index
    %40 = vector.load %arg5[%c0_57, %c1_58, %c0_59] : memref<18x18x8xf32, #tpu.memory_space<vmem>>, vector<16x16x8xf32>
    %41 = vector.shape_cast %40 : vector<16x16x8xf32> to vector<256x8xf32>
    %c0_60 = arith.constant 0 : index
    %c8_61 = arith.constant 8 : index
    %42 = vector.load %arg6[%c0_60, %c8_61] : memref<256x72xf32, #tpu.memory_space<vmem>>, vector<256x8xf32>
    tpu.vector_store %arg6[%c0_60, %c8_61], %41 {strides = array<i32>} : memref<256x72xf32, #tpu.memory_space<vmem>>, vector<256x8xf32>,
    %c0_62 = arith.constant 0 : index
    %c2_63 = arith.constant 2 : index
    %c0_64 = arith.constant 0 : index
    %43 = vector.load %arg5[%c0_62, %c2_63, %c0_64] : memref<18x18x8xf32, #tpu.memory_space<vmem>>, vector<16x16x8xf32>
    %44 = vector.shape_cast %43 : vector<16x16x8xf32> to vector<256x8xf32>
    %c0_65 = arith.constant 0 : index
    %c16_66 = arith.constant 16 : index
    %45 = vector.load %arg6[%c0_65, %c16_66] : memref<256x72xf32, #tpu.memory_space<vmem>>, vector<256x8xf32>
    tpu.vector_store %arg6[%c0_65, %c16_66], %44 {strides = array<i32>} : memref<256x72xf32, #tpu.memory_space<vmem>>, vector<256x8xf32>,
    %c1_67 = arith.constant 1 : index
    %c0_68 = arith.constant 0 : index
    %c0_69 = arith.constant 0 : index
    %46 = vector.load %arg5[%c1_67, %c0_68, %c0_69] : memref<18x18x8xf32, #tpu.memory_space<vmem>>, vector<16x16x8xf32>
    %47 = vector.shape_cast %46 : vector<16x16x8xf32> to vector<256x8xf32>
    %c0_70 = arith.constant 0 : index
    %c24_71 = arith.constant 24 : index
    %48 = vector.load %arg6[%c0_70, %c24_71] : memref<256x72xf32, #tpu.memory_space<vmem>>, vector<256x8xf32>
    tpu.vector_store %arg6[%c0_70, %c24_71], %47 {strides = array<i32>} : memref<256x72xf32, #tpu.memory_space<vmem>>, vector<256x8xf32>,
    %c1_72 = arith.constant 1 : index
    %c1_73 = arith.constant 1 : index
    %c0_74 = arith.constant 0 : index
    %49 = vector.load %arg5[%c1_72, %c1_73, %c0_74] : memref<18x18x8xf32, #tpu.memory_space<vmem>>, vector<16x16x8xf32>
    %50 = vector.shape_cast %49 : vector<16x16x8xf32> to vector<256x8xf32>
    %c0_75 = arith.constant 0 : index
    %c32_76 = arith.constant 32 : index
    %51 = vector.load %arg6[%c0_75, %c32_76] : memref<256x72xf32, #tpu.memory_space<vmem>>, vector<256x8xf32>
    tpu.vector_store %arg6[%c0_75, %c32_76], %50 {strides = array<i32>} : memref<256x72xf32, #tpu.memory_space<vmem>>, vector<256x8xf32>,
    %c1_77 = arith.constant 1 : index
    %c2_78 = arith.constant 2 : index
    %c0_79 = arith.constant 0 : index
    %52 = vector.load %arg5[%c1_77, %c2_78, %c0_79] : memref<18x18x8xf32, #tpu.memory_space<vmem>>, vector<16x16x8xf32>
    %53 = vector.shape_cast %52 : vector<16x16x8xf32> to vector<256x8xf32>
    %c0_80 = arith.constant 0 : index
    %c40_81 = arith.constant 40 : index
    %54 = vector.load %arg6[%c0_80, %c40_81] : memref<256x72xf32, #tpu.memory_space<vmem>>, vector<256x8xf32>
    tpu.vector_store %arg6[%c0_80, %c40_81], %53 {strides = array<i32>} : memref<256x72xf32, #tpu.memory_space<vmem>>, vector<256x8xf32>,
    %c2_82 = arith.constant 2 : index
    %c0_83 = arith.constant 0 : index
    %c0_84 = arith.constant 0 : index
    %55 = vector.load %arg5[%c2_82, %c0_83, %c0_84] : memref<18x18x8xf32, #tpu.memory_space<vmem>>, vector<16x16x8xf32>
    %56 = vector.shape_cast %55 : vector<16x16x8xf32> to vector<256x8xf32>
    %c0_85 = arith.constant 0 : index
    %c48_86 = arith.constant 48 : index
    %57 = vector.load %arg6[%c0_85, %c48_86] : memref<256x72xf32, #tpu.memory_space<vmem>>, vector<256x8xf32>
    tpu.vector_store %arg6[%c0_85, %c48_86], %56 {strides = array<i32>} : memref<256x72xf32, #tpu.memory_space<vmem>>, vector<256x8xf32>,
    %c2_87 = arith.constant 2 : index
    %c1_88 = arith.constant 1 : index
    %c0_89 = arith.constant 0 : index
    %58 = vector.load %arg5[%c2_87, %c1_88, %c0_89] : memref<18x18x8xf32, #tpu.memory_space<vmem>>, vector<16x16x8xf32>
    %59 = vector.shape_cast %58 : vector<16x16x8xf32> to vector<256x8xf32>
    %c0_90 = arith.constant 0 : index
    %c56_91 = arith.constant 56 : index
    %60 = vector.load %arg6[%c0_90, %c56_91] : memref<256x72xf32, #tpu.memory_space<vmem>>, vector<256x8xf32>
    tpu.vector_store %arg6[%c0_90, %c56_91], %59 {strides = array<i32>} : memref<256x72xf32, #tpu.memory_space<vmem>>, vector<256x8xf32>,
    %c2_92 = arith.constant 2 : index
    %c2_93 = arith.constant 2 : index
    %c0_94 = arith.constant 0 : index
    %61 = vector.load %arg5[%c2_92, %c2_93, %c0_94] : memref<18x18x8xf32, #tpu.memory_space<vmem>>, vector<16x16x8xf32>
    %62 = vector.shape_cast %61 : vector<16x16x8xf32> to vector<256x8xf32>
    %c0_95 = arith.constant 0 : index
    %c64_96 = arith.constant 64 : index
    %63 = vector.load %arg6[%c0_95, %c64_96] : memref<256x72xf32, #tpu.memory_space<vmem>>, vector<256x8xf32>
    tpu.vector_store %arg6[%c0_95, %c64_96], %62 {strides = array<i32>} : memref<256x72xf32, #tpu.memory_space<vmem>>, vector<256x8xf32>,
    %c0_97 = arith.constant 0 : index
    %c0_98 = arith.constant 0 : index
    %64 = vector.load %arg6[%c0_97, %c0_98] : memref<256x72xf32, #tpu.memory_space<vmem>>, vector<256x72xf32>
    %c0_99 = arith.constant 0 : index
    %c0_100 = arith.constant 0 : index
    %65 = vector.load %arg3[%c0_99, %c0_100] : memref<72x128xf32, #tpu.memory_space<vmem>>, vector<72x128xf32>
    %cst_101 = arith.constant dense<0.000000e+00> : vector<256x128xf32>
    %66 = tpu.matmul %64, %65, %cst_101 {dimension_numbers = #tpu.dot_dimension_numbers<[1], [0], [0], [1], [0, 0, 1, 1], [], []>} : vector<256x72xf32>, vector<72x128xf32>, vector<256x128xf32> -> vector<256x128xf32>
    %c0_102 = arith.constant 0 : index
    %c0_103 = arith.constant 0 : index
    %c0_104 = arith.constant 0 : index
    %67 = vector.load %arg4[%c0_102, %c0_103, %c0_104] : memref<1x256x128xf32, #tpu.memory_space<vmem>>, vector<1x256x128xf32>
    %68 = vector.shape_cast %67 : vector<1x256x128xf32> to vector<256x128xf32>
    %69 = vector.shape_cast %66 : vector<256x128xf32> to vector<1x256x128xf32>
    tpu.vector_store %arg4[%c0_102, %c0_103, %c0_104], %69 {strides = array<i32>} : memref<1x256x128xf32, #tpu.memory_space<vmem>>, vector<1x256x128xf32>,
    return
  }
  func.func @transform_0(%arg0: i32) -> (i32, i32, i32, i32) {
    %c0_i32 = arith.constant 0 : i32
    %c0_i32_0 = arith.constant 0 : i32
    %c0_i32_1 = arith.constant 0 : i32
    %c0_i32_2 = arith.constant 0 : i32
    return %arg0, %c0_i32, %c0_i32_0, %c0_i32_1 : i32, i32, i32, i32
  }
  func.func @transform_1(%arg0: i32) -> (i32, i32) {
    %c0_i32 = arith.constant 0 : i32
    %c0_i32_0 = arith.constant 0 : i32
    %c0_i32_1 = arith.constant 0 : i32
    return %c0_i32, %c0_i32_0 : i32, i32
  }
  func.func @transform_2(%arg0: i32) -> (i32, i32) {
    %c0_i32 = arith.constant 0 : i32
    %c0_i32_0 = arith.constant 0 : i32
    %c0_i32_1 = arith.constant 0 : i32
    return %c0_i32, %c0_i32_0 : i32, i32
  }
  func.func @transform_3(%arg0: i32) -> (i32, i32, i32) {
    %c0_i32 = arith.constant 0 : i32
    %c0_i32_0 = arith.constant 0 : i32
    %c0_i32_1 = arith.constant 0 : i32
    return %arg0, %c0_i32, %c0_i32_0 : i32, i32, i32
  }
}

</mosaic_0001>

<llo_original>
// kernel: same_conv_forward.1
$region0: #{same_conv_forward.1}
  #allocation0 [shape = 'u32[]', space=smem, size = 0x4, offset = 0x4, fixed_abs, tag = 'smem constant byte address 0x4 - core index']
  #allocation1 [shape = 'u32[72,128]{1,0:T(1,128)}', space=vmem, size = 0x9000, scoped, tag = 'internal scratch']
  #allocation2 [shape = 'f32[18,18,8]{2,1,0:T(8,128)}', space=vmem, size = 0x36000, scoped, tag = 'scratch operand']
  #allocation3 [shape = 'f32[256,72]{1,0:T(8,128)}', space=vmem, size = 0x20000, scoped, tag = 'scratch operand']
  %s0 = inlined_call_operand.vmem [shape: f32[2,16,16,4], index: 0, kind: input, shape index: {}]
  %s1 = inlined_call_operand.vmem [shape: f32[72,8], index: 1, kind: input, shape index: {}]
  %s2 = inlined_call_operand.vmem [shape: f32[72,128], index: 2, kind: input, shape index: {}]
  %s3 = inlined_call_operand.vmem [shape: f32[2,256,128], index: 3, kind: output, shape index: {}]
  %s4 = sld [smem:[#allocation0]]
  $region45: #{same_conv_forward.1} parent=0
    _
  %s6 = ssub.s32 1, %s4
  %s7 = scalar_select 0, %s6, %s4
  loop: start=0, step=1, limit=4
  $region2: #{same_conv_forward.1} parent=0 // loop_pre_header
    _
  $region3: #{same_conv_forward.1} parent=0 // loop_header
    %s9 = sphi 0, %s13
    %p10 = scmp.ge.s32.totalorder %s9, 4
    %s19 = sphi 0, %s21
    %s22 = sphi 0, %s19
    %s23 = sphi 0, %s22
    %s39 = sphi 0, %s23
    %s43 = sphi 0, %s43
    %s45 = sphi 0, %s43
    %s46 = sphi 0, %s45
    %s60 = sphi 0, %s46
    %s64 = sphi 0, %s64
    %s66 = sphi 0, %s64
    %s67 = sphi 0, %s66
    %s81 = sphi 0, %s67
    %s87 = sphi 0, %s89
    %s90 = sphi 0, %s87
    %s91 = sphi 0, %s90
    %s107 = sphi 0, %s91
  $region4: #{same_conv_forward.1} parent=0 // loop_header_branch
    %12 = sbr.rel (%p10) target = $region8
  $region5: #{same_conv_forward.1} parent=0 // loop_body
    %s14 = ssub.s32 %s9, 1
    %s15 = ssub.s32 %s9, 2
    %s16 = sadd.s32 %s9, 1
    %s17 = ssub.s32 %s9, %s16
    %p18 = scmp.eq.s32.totalorder %s17, 0
    %s20 = sadd.s32 %s19, 1
    %s21 = scalar_select %p18, %s19, %s20
    %p24 = pneg %p18
    %p25 = scmp.eq.s32.totalorder %s9, 1
    %p26 = por %p24, %p25
    %p27 = scmp.ne.s32.totalorder %s19, %s22
    %p28 = scmp.eq.s32.totalorder %s9, 0
    %p29 = por %p27, %p28
    %p30 = scmp.ne.s32.totalorder %s19, %s22
    %p31 = scmp.eq.s32.totalorder %s14, 1
    %p32 = por %p30, %p31
    %p33 = scmp.ne.s32.totalorder %s22, %s23
    %p34 = scmp.eq.s32.totalorder %s14, 0
    %p35 = por %p33, %p34
    %p36 = scmp.ne.s32.totalorder %s22, %s23
    %p37 = scmp.eq.s32.totalorder %s15, 1
    %p38 = por %p36, %p37
    %p40 = scmp.ne.s32.totalorder %s23, %s39
    %p41 = scmp.eq.s32.totalorder %s15, 0
    %p42 = por %p40, %p41
    %s44 = sadd.s32 %s43, 1
    %p47 = scmp.eq.s32.totalorder %s9, 1
    %p48 = scmp.ne.s32.totalorder %s43, %s45
    %p49 = scmp.eq.s32.totalorder %s9, 0
    %p50 = por %p48, %p49
    %p51 = scmp.ne.s32.totalorder %s43, %s45
    %p52 = scmp.eq.s32.totalorder %s14, 1
    %p53 = por %p51, %p52
    %p54 = scmp.ne.s32.totalorder %s45, %s46
    %p55 = scmp.eq.s32.totalorder %s14, 0
    %p56 = por %p54, %p55
    %p57 = scmp.ne.s32.totalorder %s45, %s46
    %p58 = scmp.eq.s32.totalorder %s15, 1
    %p59 = por %p57, %p58
    %p61 = scmp.ne.s32.totalorder %s46, %s60
    %p62 = scmp.eq.s32.totalorder %s15, 0
    %p63 = por %p61, %p62
    %s65 = sadd.s32 %s64, 1
    %p68 = scmp.eq.s32.totalorder %s9, 1
    %p69 = scmp.ne.s32.totalorder %s64, %s66
    %p70 = scmp.eq.s32.totalorder %s9, 0
    %p71 = por %p69, %p70
    %p72 = scmp.ne.s32.totalorder %s64, %s66
    %p73 = scmp.eq.s32.totalorder %s14, 1
    %p74 = por %p72, %p73
    %p75 = scmp.ne.s32.totalorder %s66, %s67
    %p76 = scmp.eq.s32.totalorder %s14, 0
    %p77 = por %p75, %p76
    %p78 = scmp.ne.s32.totalorder %s66, %s67
    %p79 = scmp.eq.s32.totalorder %s15, 1
    %p80 = por %p78, %p79
    %p82 = scmp.ne.s32.totalorder %s67, %s81
    %p83 = scmp.eq.s32.totalorder %s15, 0
    %p84 = por %p82, %p83
    %s85 = ssub.s32 %s9, %s16
    %p86 = scmp.eq.s32.totalorder %s85, 0
    %s88 = sadd.s32 %s87, 1
    %s89 = scalar_select %p86, %s87, %s88
    %p92 = pneg %p86
    %p93 = scmp.eq.s32.totalorder %s9, 1
    %p94 = por %p92, %p93
    %p95 = scmp.ne.s32.totalorder %s87, %s90
    %p96 = scmp.eq.s32.totalorder %s9, 0
    %p97 = por %p95, %p96
    %p98 = scmp.ne.s32.totalorder %s87, %s90
    %p99 = scmp.eq.s32.totalorder %s14, 1
    %p100 = por %p98, %p99
    %p101 = scmp.ne.s32.totalorder %s90, %s91
    %p102 = scmp.eq.s32.totalorder %s14, 0
    %p103 = por %p101, %p102
    %p104 = scmp.ne.s32.totalorder %s90, %s91
    %p105 = scmp.eq.s32.totalorder %s15, 1
    %p106 = por %p104, %p105
    %p108 = scmp.ne.s32.totalorder %s91, %s107
    %p109 = scmp.eq.s32.totalorder %s15, 0
    %p110 = por %p108, %p109
    %p111 = scmp.le.s32.totalorder 1, %s9
    %p112 = scmp.lt.s32.totalorder %s9, 3
    %p113 = pnand %p111, %p112
    %p114 = pneg %p113
    // Predicated region
    $region9: #{same_conv_forward.1} parent=5 // pred_check
      _
    $region10: #{same_conv_forward.1} parent=5 // pred_check_branch
      %116 = sbr.rel (%p113) target = $region12
    $region11: #{same_conv_forward.1} parent=5 // pred_region
      %s117 = ssub.s32 %s9, 1
      // Predicated region
      $region13: #{same_conv_forward.1} parent=11 // pred_check
        %p118 = pneg %p56
      $region14: #{same_conv_forward.1} parent=11 // pred_check_branch
        %120 = sbr.rel (%p118) target = $region16
      $region15: #{same_conv_forward.1} parent=11 // pred_region
        _
      $region16: #{same_conv_forward.1} parent=11 // pred_fallthru
        _
      // Predicated region
      $region17: #{same_conv_forward.1} parent=11 // pred_check
        %p121 = pneg %p77
      $region18: #{same_conv_forward.1} parent=11 // pred_check_branch
        %123 = sbr.rel (%p121) target = $region20
      $region19: #{same_conv_forward.1} parent=11 // pred_region
        _
      $region20: #{same_conv_forward.1} parent=11 // pred_fallthru
        _
    $region12: #{same_conv_forward.1} parent=5 // pred_fallthru
      _
    %p124 = scmp.lt.s32.totalorder %s9, 2
    // Predicated region
    $region21: #{same_conv_forward.1} parent=5 // pred_check
      %p125 = pneg %p124
    $region22: #{same_conv_forward.1} parent=5 // pred_check_branch
      %127 = sbr.rel (%p125) target = $region24
    $region23: #{same_conv_forward.1} parent=5 // pred_region
      // Predicated region
      $region25: #{same_conv_forward.1} parent=23 // pred_check
        %p128 = pneg %p29
      $region26: #{same_conv_forward.1} parent=23 // pred_check_branch
        %130 = sbr.rel (%p128) target = $region28
      $region27: #{same_conv_forward.1} parent=23 // pred_region
        %p131 = scmp.lt.s32.totalorder %s9, 1
        %s132 = scalar_select %p131, %s9, 1
        %s133 = smul.addr %s132, 32
        %s134 = smul.addr %s133, 8
        %s135 = scalar_lea.vmem %s0, %s134
      $region28: #{same_conv_forward.1} parent=23 // pred_fallthru
        _
    $region24: #{same_conv_forward.1} parent=5 // pred_fallthru
      _
    %p136 = scmp.le.s32.totalorder 1, %s9
    %p137 = scmp.lt.s32.totalorder %s9, 3
    %p138 = pnand %p136, %p137
    %p139 = pneg %p138
    // Predicated region
    $region29: #{same_conv_forward.1} parent=5 // pred_check
      _
    $region30: #{same_conv_forward.1} parent=5 // pred_check_branch
      %141 = sbr.rel (%p138) target = $region32
    $region31: #{same_conv_forward.1} parent=5 // pred_region
      %s142 = ssub.s32 %s9, 1
      %p143 = scmp.lt.s32.totalorder %s14, 1
      %s144 = scalar_select %p143, %s14, 1
      %s145 = smul.addr %s144, 32
      %s146 = smul.addr %s145, 8
      %s147 = scalar_lea.vmem %s0, %s146
      %p148 = pneg %p35
      %p149 = pneg %p32
      %p150 = pneg %p56
      %p151 = pneg %p53
      %p152 = pneg %p77
      %p153 = pneg %p74
      %p154 = pneg %p103
      %p155 = pneg %p100
      %p156 = scmp.lt.s32.totalorder %s14, 1
      %s157 = scalar_select %p156, %s14, 1
      %s158 = smul.addr %s157, 32
      %s159 = smul.addr %s158, 8
      %s160 = scalar_lea.vmem %s3, %s159
      %p161 = scmp.lt.s32.totalorder %s14, 1
      %s162 = scalar_select %p161, %s14, 1
      %s163 = smul.addr %s162, 32
      %s164 = smul.addr %s163, 8
      %s165 = scalar_lea.vmem %s0, %s164
      %p166 = scmp.lt.s32.totalorder %s14, 1
      %s167 = scalar_select %p166, %s14, 1
      %s168 = smul.addr %s167, 32
      %s169 = smul.addr %s168, 8
      %s170 = scalar_lea.vmem %s3, %s169
      %vm171 = vcmask 64512
      %172 = vst.msk [vmem:[#allocation2] sm:$0xff] %vm171, 0.0
      %173 = vst.msk [vmem:[#allocation2 + $0x8] sm:$0xff] %vm171, 0.0
      %vm174 = vcmask 58368
      %175 = vst.msk [vmem:[#allocation2 + $0x10] sm:$0x3] %vm174, 0.0
      %176 = vst.msk [vmem:[#allocation2 + $0x18] sm:$0xff] %vm171, 0.0
      %177 = vst.msk [vmem:[#allocation2 + $0x20] sm:$0xff] %vm171, 0.0
      %178 = vst.msk [vmem:[#allocation2 + $0x28] sm:$0x3] %vm174, 0.0
      %179 = vst.msk [vmem:[#allocation2 + $0x30] sm:$0xff] %vm171, 0.0
      %180 = vst.msk [vmem:[#allocation2 + $0x38] sm:$0xff] %vm171, 0.0
      %181 = vst.msk [vmem:[#allocation2 + $0x40] sm:$0x3] %vm174, 0.0
      %182 = vst.msk [vmem:[#allocation2 + $0x48] sm:$0xff] %vm171, 0.0
      %183 = vst.msk [vmem:[#allocation2 + $0x50] sm:$0xff] %vm171, 0.0
      %184 = vst.msk [vmem:[#allocation2 + $0x58] sm:$0x3] %vm174, 0.0
      %185 = vst.msk [vmem:[#allocation2 + $0x60] sm:$0xff] %vm171, 0.0
      %186 = vst.msk [vmem:[#allocation2 + $0x68] sm:$0xff] %vm171, 0.0
      %187 = vst.msk [vmem:[#allocation2 + $0x70] sm:$0x3] %vm174, 0.0
      %188 = vst.msk [vmem:[#allocation2 + $0x78] sm:$0xff] %vm171, 0.0
      %189 = vst.msk [vmem:[#allocation2 + $0x80] sm:$0xff] %vm171, 0.0
      %190 = vst.msk [vmem:[#allocation2 + $0x88] sm:$0x3] %vm174, 0.0
      %191 = vst.msk [vmem:[#allocation2 + $0x90] sm:$0xff] %vm171, 0.0
      %192 = vst.msk [vmem:[#allocation2 + $0x98] sm:$0xff] %vm171, 0.0
      %193 = vst.msk [vmem:[#allocation2 + $0xa0] sm:$0x3] %vm174, 0.0
      %194 = vst.msk [vmem:[#allocation2 + $0xa8] sm:$0xff] %vm171, 0.0
      %195 = vst.msk [vmem:[#allocation2 + $0xb0] sm:$0xff] %vm171, 0.0
      %196 = vst.msk [vmem:[#allocation2 + $0xb8] sm:$0x3] %vm174, 0.0
      %197 = vst.msk [vmem:[#allocation2 + $0xc0] sm:$0xff] %vm171, 0.0
      %198 = vst.msk [vmem:[#allocation2 + $0xc8] sm:$0xff] %vm171, 0.0
      %199 = vst.msk [vmem:[#allocation2 + $0xd0] sm:$0x3] %vm174, 0.0
      %200 = vst.msk [vmem:[#allocation2 + $0xd8] sm:$0xff] %vm171, 0.0
      %201 = vst.msk [vmem:[#allocation2 + $0xe0] sm:$0xff] %vm171, 0.0
      %202 = vst.msk [vmem:[#allocation2 + $0xe8] sm:$0x3] %vm174, 0.0
      %203 = vst.msk [vmem:[#allocation2 + $0xf0] sm:$0xff] %vm171, 0.0
      %204 = vst.msk [vmem:[#allocation2 + $0xf8] sm:$0xff] %vm171, 0.0
      %205 = vst.msk [vmem:[#allocation2 + $0x100] sm:$0x3] %vm174, 0.0
      %206 = vst.msk [vmem:[#allocation2 + $0x108] sm:$0xff] %vm171, 0.0
      %207 = vst.msk [vmem:[#allocation2 + $0x110] sm:$0xff] %vm171, 0.0
      %208 = vst.msk [vmem:[#allocation2 + $0x118] sm:$0x3] %vm174, 0.0
      %209 = vst.msk [vmem:[#allocation2 + $0x120] sm:$0xff] %vm171, 0.0
      %210 = vst.msk [vmem:[#allocation2 + $0x128] sm:$0xff] %vm171, 0.0
      %211 = vst.msk [vmem:[#allocation2 + $0x130] sm:$0x3] %vm174, 0.0
      %212 = vst.msk [vmem:[#allocation2 + $0x138] sm:$0xff] %vm171, 0.0
      %213 = vst.msk [vmem:[#allocation2 + $0x140] sm:$0xff] %vm171, 0.0
      %214 = vst.msk [vmem:[#allocation2 + $0x148] sm:$0x3] %vm174, 0.0
      %215 = vst.msk [vmem:[#allocation2 + $0x150] sm:$0xff] %vm171, 0.0
      %216 = vst.msk [vmem:[#allocation2 + $0x158] sm:$0xff] %vm171, 0.0
      %217 = vst.msk [vmem:[#allocation2 + $0x160] sm:$0x3] %vm174, 0.0
      %218 = vst.msk [vmem:[#allocation2 + $0x168] sm:$0xff] %vm171, 0.0
      %219 = vst.msk [vmem:[#allocation2 + $0x170] sm:$0xff] %vm171, 0.0
      %220 = vst.msk [vmem:[#allocation2 + $0x178] sm:$0x3] %vm174, 0.0
      %221 = vst.msk [vmem:[#allocation2 + $0x180] sm:$0xff] %vm171, 0.0
      %222 = vst.msk [vmem:[#allocation2 + $0x188] sm:$0xff] %vm171, 0.0
      %223 = vst.msk [vmem:[#allocation2 + $0x190] sm:$0x3] %vm174, 0.0
      %224 = vst.msk [vmem:[#allocation2 + $0x198] sm:$0xff] %vm171, 0.0
      %225 = vst.msk [vmem:[#allocation2 + $0x1a0] sm:$0xff] %vm171, 0.0
      %226 = vst.msk [vmem:[#allocation2 + $0x1a8] sm:$0x3] %vm174, 0.0
      %v227 = vld [vmem:[%s165] sm:$0xff]
      %v228 = vld [vmem:[%s165 + $0x8] sm:$0xff]
      %v229 = vld [vmem:[%s165 + $0x10] sm:$0xff]
      %v230 = vld [vmem:[%s165 + $0x18] sm:$0xff]
      %v231 = vld [vmem:[%s165 + $0x20] sm:$0xff]
      %v232 = vld [vmem:[%s165 + $0x28] sm:$0xff]
      %v233 = vld [vmem:[%s165 + $0x30] sm:$0xff]
      %v234 = vld [vmem:[%s165 + $0x38] sm:$0xff]
      %v235 = vld [vmem:[%s165 + $0x40] sm:$0xff]
      %v236 = vld [vmem:[%s165 + $0x48] sm:$0xff]
      %v237 = vld [vmem:[%s165 + $0x50] sm:$0xff]
      %v238 = vld [vmem:[%s165 + $0x58] sm:$0xff]
      %v239 = vld [vmem:[%s165 + $0x60] sm:$0xff]
      %v240 = vld [vmem:[%s165 + $0x68] sm:$0xff]
      %v241 = vld [vmem:[%s165 + $0x70] sm:$0xff]
      %v242 = vld [vmem:[%s165 + $0x78] sm:$0xff]
      %v243 = vld [vmem:[%s165 + $0x80] sm:$0xff]
      %v244 = vld [vmem:[%s165 + $0x88] sm:$0xff]
      %v245 = vld [vmem:[%s165 + $0x90] sm:$0xff]
      %v246 = vld [vmem:[%s165 + $0x98] sm:$0xff]
      %v247 = vld [vmem:[%s165 + $0xa0] sm:$0xff]
      %v248 = vld [vmem:[%s165 + $0xa8] sm:$0xff]
      %v249 = vld [vmem:[%s165 + $0xb0] sm:$0xff]
      %v250 = vld [vmem:[%s165 + $0xb8] sm:$0xff]
      %v251 = vld [vmem:[%s165 + $0xc0] sm:$0xff]
      %v252 = vld [vmem:[%s165 + $0xc8] sm:$0xff]
      %v253 = vld [vmem:[%s165 + $0xd0] sm:$0xff]
      %v254 = vld [vmem:[%s165 + $0xd8] sm:$0xff]
      %v255 = vld [vmem:[%s165 + $0xe0] sm:$0xff]
      %v256 = vld [vmem:[%s165 + $0xe8] sm:$0xff]
      %v257 = vld [vmem:[%s165 + $0xf0] sm:$0xff]
      %v258 = vld [vmem:[%s165 + $0xf8] sm:$0xff]
      %s259 = scalar_lea.vmem [#allocation2], 24
      %vm260 = vcmask 31744
      %261 = vst.msk [vmem:[%s259 + $0x1] sm:$0xff] %vm260, %v227
      %262 = vst.msk [vmem:[%s259 + $0x9] sm:$0xff] %vm260, %v228
      %263 = vst.msk [vmem:[%s259 + $0x19] sm:$0xff] %vm260, %v229
      %264 = vst.msk [vmem:[%s259 + $0x21] sm:$0xff] %vm260, %v230
      %265 = vst.msk [vmem:[%s259 + $0x31] sm:$0xff] %vm260, %v231
      %266 = vst.msk [vmem:[%s259 + $0x39] sm:$0xff] %vm260, %v232
      %267 = vst.msk [vmem:[%s259 + $0x49] sm:$0xff] %vm260, %v233
      %268 = vst.msk [vmem:[%s259 + $0x51] sm:$0xff] %vm260, %v234
      %269 = vst.msk [vmem:[%s259 + $0x61] sm:$0xff] %vm260, %v235
      %270 = vst.msk [vmem:[%s259 + $0x69] sm:$0xff] %vm260, %v236
      %271 = vst.msk [vmem:[%s259 + $0x79] sm:$0xff] %vm260, %v237
      %272 = vst.msk [vmem:[%s259 + $0x81] sm:$0xff] %vm260, %v238
      %273 = vst.msk [vmem:[%s259 + $0x91] sm:$0xff] %vm260, %v239
      %274 = vst.msk [vmem:[%s259 + $0x99] sm:$0xff] %vm260, %v240
      %275 = vst.msk [vmem:[%s259 + $0xa9] sm:$0xff] %vm260, %v241
      %276 = vst.msk [vmem:[%s259 + $0xb1] sm:$0xff] %vm260, %v242
      %277 = vst.msk [vmem:[%s259 + $0xc1] sm:$0xff] %vm260, %v243
      %278 = vst.msk [vmem:[%s259 + $0xc9] sm:$0xff] %vm260, %v244
      %279 = vst.msk [vmem:[%s259 + $0xd9] sm:$0xff] %vm260, %v245
      %280 = vst.msk [vmem:[%s259 + $0xe1] sm:$0xff] %vm260, %v246
      %281 = vst.msk [vmem:[%s259 + $0xf1] sm:$0xff] %vm260, %v247
      %282 = vst.msk [vmem:[%s259 + $0xf9] sm:$0xff] %vm260, %v248
      %283 = vst.msk [vmem:[%s259 + $0x109] sm:$0xff] %vm260, %v249
      %284 = vst.msk [vmem:[%s259 + $0x111] sm:$0xff] %vm260, %v250
      %285 = vst.msk [vmem:[%s259 + $0x121] sm:$0xff] %vm260, %v251
      %286 = vst.msk [vmem:[%s259 + $0x129] sm:$0xff] %vm260, %v252
      %287 = vst.msk [vmem:[%s259 + $0x139] sm:$0xff] %vm260, %v253
      %288 = vst.msk [vmem:[%s259 + $0x141] sm:$0xff] %vm260, %v254
      %289 = vst.msk [vmem:[%s259 + $0x151] sm:$0xff] %vm260, %v255
      %290 = vst.msk [vmem:[%s259 + $0x159] sm:$0xff] %vm260, %v256
      %291 = vst.msk [vmem:[%s259 + $0x169] sm:$0xff] %vm260, %v257
      %292 = vst.msk [vmem:[%s259 + $0x171] sm:$0xff] %vm260, %v258
      %v293 = vld [vmem:[#allocation2] sm:$0xff]
      %v294 = vld [vmem:[#allocation2 + $0x8] sm:$0xff]
      %v295 = vld [vmem:[#allocation2 + $0x18] sm:$0xff]
      %v296 = vld [vmem:[#allocation2 + $0x20] sm:$0xff]
      %v297 = vld [vmem:[#allocation2 + $0x30] sm:$0xff]
      %v298 = vld [vmem:[#allocation2 + $0x38] sm:$0xff]
      %v299 = vld [vmem:[#allocation2 + $0x48] sm:$0xff]
      %v300 = vld [vmem:[#allocation2 + $0x50] sm:$0xff]
      %v301 = vld [vmem:[#allocation2 + $0x60] sm:$0xff]
      %v302 = vld [vmem:[#allocation2 + $0x68] sm:$0xff]
      %v303 = vld [vmem:[#allocation2 + $0x78] sm:$0xff]
      %v304 = vld [vmem:[#allocation2 + $0x80] sm:$0xff]
      %v305 = vld [vmem:[#allocation2 + $0x90] sm:$0xff]
      %v306 = vld [vmem:[#allocation2 + $0x98] sm:$0xff]
      %v307 = vld [vmem:[#allocation2 + $0xa8] sm:$0xff]
      %v308 = vld [vmem:[#allocation2 + $0xb0] sm:$0xff]
      %v309 = vld [vmem:[#allocation2 + $0xc0] sm:$0xff]
      %v310 = vld [vmem:[#allocation2 + $0xc8] sm:$0xff]
      %v311 = vld [vmem:[#allocation2 + $0xd8] sm:$0xff]
      %v312 = vld [vmem:[#allocation2 + $0xe0] sm:$0xff]
      %v313 = vld [vmem:[#allocation2 + $0xf0] sm:$0xff]
      %v314 = vld [vmem:[#allocation2 + $0xf8] sm:$0xff]
      %v315 = vld [vmem:[#allocation2 + $0x108] sm:$0xff]
      %v316 = vld [vmem:[#allocation2 + $0x110] sm:$0xff]
      %v317 = vld [vmem:[#allocation2 + $0x120] sm:$0xff]
      %v318 = vld [vmem:[#allocation2 + $0x128] sm:$0xff]
      %v319 = vld [vmem:[#allocation2 + $0x138] sm:$0xff]
      %v320 = vld [vmem:[#allocation2 + $0x140] sm:$0xff]
      %v321 = vld [vmem:[#allocation2 + $0x150] sm:$0xff]
      %v322 = vld [vmem:[#allocation2 + $0x158] sm:$0xff]
      %v323 = vld [vmem:[#allocation2 + $0x168] sm:$0xff]
      %v324 = vld [vmem:[#allocation2 + $0x170] sm:$0xff]
      %325 = vst.msk [vmem:[#allocation3] sm:$0xff] %vm171, %v293
      %326 = vst.msk [vmem:[#allocation3 + $0x8] sm:$0xff] %vm171, %v294
      %327 = vst.msk [vmem:[#allocation3 + $0x10] sm:$0xff] %vm171, %v295
      %328 = vst.msk [vmem:[#allocation3 + $0x18] sm:$0xff] %vm171, %v296
      %329 = vst.msk [vmem:[#allocation3 + $0x20] sm:$0xff] %vm171, %v297
      %330 = vst.msk [vmem:[#allocation3 + $0x28] sm:$0xff] %vm171, %v298
      %331 = vst.msk [vmem:[#allocation3 + $0x30] sm:$0xff] %vm171, %v299
      %332 = vst.msk [vmem:[#allocation3 + $0x38] sm:$0xff] %vm171, %v300
      %333 = vst.msk [vmem:[#allocation3 + $0x40] sm:$0xff] %vm171, %v301
      %334 = vst.msk [vmem:[#allocation3 + $0x48] sm:$0xff] %vm171, %v302
      %335 = vst.msk [vmem:[#allocation3 + $0x50] sm:$0xff] %vm171, %v303
      %336 = vst.msk [vmem:[#allocation3 + $0x58] sm:$0xff] %vm171, %v304
      %337 = vst.msk [vmem:[#allocation3 + $0x60] sm:$0xff] %vm171, %v305
      %338 = vst.msk [vmem:[#allocation3 + $0x68] sm:$0xff] %vm171, %v306
      %339 = vst.msk [vmem:[#allocation3 + $0x70] sm:$0xff] %vm171, %v307
      %340 = vst.msk [vmem:[#allocation3 + $0x78] sm:$0xff] %vm171, %v308
      %341 = vst.msk [vmem:[#allocation3 + $0x80] sm:$0xff] %vm171, %v309
      %342 = vst.msk [vmem:[#allocation3 + $0x88] sm:$0xff] %vm171, %v310
      %343 = vst.msk [vmem:[#allocation3 + $0x90] sm:$0xff] %vm171, %v311
      %344 = vst.msk [vmem:[#allocation3 + $0x98] sm:$0xff] %vm171, %v312
      %345 = vst.msk [vmem:[#allocation3 + $0xa0] sm:$0xff] %vm171, %v313
      %346 = vst.msk [vmem:[#allocation3 + $0xa8] sm:$0xff] %vm171, %v314
      %347 = vst.msk [vmem:[#allocation3 + $0xb0] sm:$0xff] %vm171, %v315
      %348 = vst.msk [vmem:[#allocation3 + $0xb8] sm:$0xff] %vm171, %v316
      %349 = vst.msk [vmem:[#allocation3 + $0xc0] sm:$0xff] %vm171, %v317
      %350 = vst.msk [vmem:[#allocation3 + $0xc8] sm:$0xff] %vm171, %v318
      %351 = vst.msk [vmem:[#allocation3 + $0xd0] sm:$0xff] %vm171, %v319
      %352 = vst.msk [vmem:[#allocation3 + $0xd8] sm:$0xff] %vm171, %v320
      %353 = vst.msk [vmem:[#allocation3 + $0xe0] sm:$0xff] %vm171, %v321
      %354 = vst.msk [vmem:[#allocation3 + $0xe8] sm:$0xff] %vm171, %v322
      %355 = vst.msk [vmem:[#allocation3 + $0xf0] sm:$0xff] %vm171, %v323
      %356 = vst.msk [vmem:[#allocation3 + $0xf8] sm:$0xff] %vm171, %v324
      %v357 = vld [vmem:[#allocation2 + $0x1] sm:$0xff]
      %v358 = vld [vmem:[#allocation2 + $0x9] sm:$0xff]
      %v359 = vld [vmem:[#allocation2 + $0x19] sm:$0xff]
      %v360 = vld [vmem:[#allocation2 + $0x21] sm:$0xff]
      %v361 = vld [vmem:[#allocation2 + $0x31] sm:$0xff]
      %v362 = vld [vmem:[#allocation2 + $0x39] sm:$0xff]
      %v363 = vld [vmem:[#allocation2 + $0x49] sm:$0xff]
      %v364 = vld [vmem:[#allocation2 + $0x51] sm:$0xff]
      %v365 = vld [vmem:[#allocation2 + $0x61] sm:$0xff]
      %v366 = vld [vmem:[#allocation2 + $0x69] sm:$0xff]
      %v367 = vld [vmem:[#allocation2 + $0x79] sm:$0xff]
      %v368 = vld [vmem:[#allocation2 + $0x81] sm:$0xff]
      %v369 = vld [vmem:[#allocation2 + $0x91] sm:$0xff]
      %v370 = vld [vmem:[#allocation2 + $0x99] sm:$0xff]
      %v371 = vld [vmem:[#allocation2 + $0xa9] sm:$0xff]
      %v372 = vld [vmem:[#allocation2 + $0xb1] sm:$0xff]
      %v373 = vld [vmem:[#allocation2 + $0xc1] sm:$0xff]
      %v374 = vld [vmem:[#allocation2 + $0xc9] sm:$0xff]
      %v375 = vld [vmem:[#allocation2 + $0xd9] sm:$0xff]
      %v376 = vld [vmem:[#allocation2 + $0xe1] sm:$0xff]
      %v377 = vld [vmem:[#allocation2 + $0xf1] sm:$0xff]
      %v378 = vld [vmem:[#allocation2 + $0xf9] sm:$0xff]
      %v379 = vld [vmem:[#allocation2 + $0x109] sm:$0xff]
      %v380 = vld [vmem:[#allocation2 + $0x111] sm:$0xff]
      %v381 = vld [vmem:[#allocation2 + $0x121] sm:$0xff]
      %v382 = vld [vmem:[#allocation2 + $0x129] sm:$0xff]
      %v383 = vld [vmem:[#allocation2 + $0x139] sm:$0xff]
      %v384 = vld [vmem:[#allocation2 + $0x141] sm:$0xff]
      %v385 = vld [vmem:[#allocation2 + $0x151] sm:$0xff]
      %v386 = vld [vmem:[#allocation2 + $0x159] sm:$0xff]
      %v387 = vld [vmem:[#allocation2 + $0x169] sm:$0xff]
      %v388 = vld [vmem:[#allocation2 + $0x171] sm:$0xff]
      %421 = vrot.lane.b32.xlu0 %v357, 8
      %v422 = vpop.permute.xlu0 %421
      %423 = vrot.lane.b32.xlu0 %v358, 8
      %v424 = vpop.permute.xlu0 %423
      %425 = vrot.lane.b32.xlu0 %v359, 8
      %v426 = vpop.permute.xlu0 %425
      %427 = vrot.lane.b32.xlu0 %v360, 8
      %v428 = vpop.permute.xlu0 %427
      %429 = vrot.lane.b32.xlu0 %v361, 8
      %v430 = vpop.permute.xlu0 %429
      %431 = vrot.lane.b32.xlu0 %v362, 8
      %v432 = vpop.permute.xlu0 %431
      %433 = vrot.lane.b32.xlu0 %v363, 8
      %v434 = vpop.permute.xlu0 %433
      %435 = vrot.lane.b32.xlu0 %v364, 8
      %v436 = vpop.permute.xlu0 %435
      %437 = vrot.lane.b32.xlu0 %v365, 8
      %v438 = vpop.permute.xlu0 %437
      %439 = vrot.lane.b32.xlu0 %v366, 8
      %v440 = vpop.permute.xlu0 %439
      %441 = vrot.lane.b32.xlu0 %v367, 8
      %v442 = vpop.permute.xlu0 %441
      %443 = vrot.lane.b32.xlu0 %v368, 8
      %v444 = vpop.permute.xlu0 %443
      %445 = vrot.lane.b32.xlu0 %v369, 8
      %v446 = vpop.permute.xlu0 %445
      %447 = vrot.lane.b32.xlu0 %v370, 8
      %v448 = vpop.permute.xlu0 %447
      %449 = vrot.lane.b32.xlu0 %v371, 8
      %v450 = vpop.permute.xlu0 %449
      %451 = vrot.lane.b32.xlu0 %v372, 8
      %v452 = vpop.permute.xlu0 %451
      %453 = vrot.lane.b32.xlu0 %v373, 8
      %v454 = vpop.permute.xlu0 %453
      %455 = vrot.lane.b32.xlu0 %v374, 8
      %v456 = vpop.permute.xlu0 %455
      %457 = vrot.lane.b32.xlu0 %v375, 8
      %v458 = vpop.permute.xlu0 %457
      %459 = vrot.lane.b32.xlu0 %v376, 8
      %v460 = vpop.permute.xlu0 %459
      %461 = vrot.lane.b32.xlu0 %v377, 8
      %v462 = vpop.permute.xlu0 %461
      %463 = vrot.lane.b32.xlu0 %v378, 8
      %v464 = vpop.permute.xlu0 %463
      %465 = vrot.lane.b32.xlu0 %v379, 8
      %v466 = vpop.permute.xlu0 %465
      %467 = vrot.lane.b32.xlu0 %v380, 8
      %v468 = vpop.permute.xlu0 %467
      %469 = vrot.lane.b32.xlu0 %v381, 8
      %v470 = vpop.permute.xlu0 %469
      %471 = vrot.lane.b32.xlu0 %v382, 8
      %v472 = vpop.permute.xlu0 %471
      %473 = vrot.lane.b32.xlu0 %v383, 8
      %v474 = vpop.permute.xlu0 %473
      %475 = vrot.lane.b32.xlu0 %v384, 8
      %v476 = vpop.permute.xlu0 %475
      %477 = vrot.lane.b32.xlu0 %v385, 8
      %v478 = vpop.permute.xlu0 %477
      %479 = vrot.lane.b32.xlu0 %v386, 8
      %v480 = vpop.permute.xlu0 %479
      %481 = vrot.lane.b32.xlu0 %v387, 8
      %v482 = vpop.permute.xlu0 %481
      %483 = vrot.lane.b32.xlu0 %v388, 8
      %v484 = vpop.permute.xlu0 %483
      %vm517 = vcmask 130112
      %518 = vst.msk [vmem:[#allocation3] sm:$0xff] %vm517, %v422
      %519 = vst.msk [vmem:[#allocation3 + $0x8] sm:$0xff] %vm517, %v424
      %520 = vst.msk [vmem:[#allocation3 + $0x10] sm:$0xff] %vm517, %v426
      %521 = vst.msk [vmem:[#allocation3 + $0x18] sm:$0xff] %vm517, %v428
      %522 = vst.msk [vmem:[#allocation3 + $0x20] sm:$0xff] %vm517, %v430
      %523 = vst.msk [vmem:[#allocation3 + $0x28] sm:$0xff] %vm517, %v432
      %524 = vst.msk [vmem:[#allocation3 + $0x30] sm:$0xff] %vm517, %v434
      %525 = vst.msk [vmem:[#allocation3 + $0x38] sm:$0xff] %vm517, %v436
      %526 = vst.msk [vmem:[#allocation3 + $0x40] sm:$0xff] %vm517, %v438
      %527 = vst.msk [vmem:[#allocation3 + $0x48] sm:$0xff] %vm517, %v440
      %528 = vst.msk [vmem:[#allocation3 + $0x50] sm:$0xff] %vm517, %v442
      %529 = vst.msk [vmem:[#allocation3 + $0x58] sm:$0xff] %vm517, %v444
      %530 = vst.msk [vmem:[#allocation3 + $0x60] sm:$0xff] %vm517, %v446
      %531 = vst.msk [vmem:[#allocation3 + $0x68] sm:$0xff] %vm517, %v448
      %532 = vst.msk [vmem:[#allocation3 + $0x70] sm:$0xff] %vm517, %v450
      %533 = vst.msk [vmem:[#allocation3 + $0x78] sm:$0xff] %vm517, %v452
      %534 = vst.msk [vmem:[#allocation3 + $0x80] sm:$0xff] %vm517, %v454
      %535 = vst.msk [vmem:[#allocation3 + $0x88] sm:$0xff] %vm517, %v456
      %536 = vst.msk [vmem:[#allocation3 + $0x90] sm:$0xff] %vm517, %v458
      %537 = vst.msk [vmem:[#allocation3 + $0x98] sm:$0xff] %vm517, %v460
      %538 = vst.msk [vmem:[#allocation3 + $0xa0] sm:$0xff] %vm517, %v462
      %539 = vst.msk [vmem:[#allocation3 + $0xa8] sm:$0xff] %vm517, %v464
      %540 = vst.msk [vmem:[#allocation3 + $0xb0] sm:$0xff] %vm517, %v466
      %541 = vst.msk [vmem:[#allocation3 + $0xb8] sm:$0xff] %vm517, %v468
      %542 = vst.msk [vmem:[#allocation3 + $0xc0] sm:$0xff] %vm517, %v470
      %543 = vst.msk [vmem:[#allocation3 + $0xc8] sm:$0xff] %vm517, %v472
      %544 = vst.msk [vmem:[#allocation3 + $0xd0] sm:$0xff] %vm517, %v474
      %545 = vst.msk [vmem:[#allocation3 + $0xd8] sm:$0xff] %vm517, %v476
      %546 = vst.msk [vmem:[#allocation3 + $0xe0] sm:$0xff] %vm517, %v478
      %547 = vst.msk [vmem:[#allocation3 + $0xe8] sm:$0xff] %vm517, %v480
      %548 = vst.msk [vmem:[#allocation3 + $0xf0] sm:$0xff] %vm517, %v482
      %549 = vst.msk [vmem:[#allocation3 + $0xf8] sm:$0xff] %vm517, %v484
      %v550 = vld [vmem:[#allocation2 + $0x2] sm:$0xff]
      %v551 = vld [vmem:[#allocation2 + $0xa] sm:$0xff]
      %v552 = vld [vmem:[#allocation2 + $0x1a] sm:$0xff]
      %v553 = vld [vmem:[#allocation2 + $0x22] sm:$0xff]
      %v554 = vld [vmem:[#allocation2 + $0x32] sm:$0xff]
      %v555 = vld [vmem:[#allocation2 + $0x3a] sm:$0xff]
      %v556 = vld [vmem:[#allocation2 + $0x4a] sm:$0xff]
      %v557 = vld [vmem:[#allocation2 + $0x52] sm:$0xff]
      %v558 = vld [vmem:[#allocation2 + $0x62] sm:$0xff]
      %v559 = vld [vmem:[#allocation2 + $0x6a] sm:$0xff]
      %v560 = vld [vmem:[#allocation2 + $0x7a] sm:$0xff]
      %v561 = vld [vmem:[#allocation2 + $0x82] sm:$0xff]
      %v562 = vld [vmem:[#allocation2 + $0x92] sm:$0xff]
      %v563 = vld [vmem:[#allocation2 + $0x9a] sm:$0xff]
      %v564 = vld [vmem:[#allocation2 + $0xaa] sm:$0xff]
      %v565 = vld [vmem:[#allocation2 + $0xb2] sm:$0xff]
      %v566 = vld [vmem:[#allocation2 + $0xc2] sm:$0xff]
      %v567 = vld [vmem:[#allocation2 + $0xca] sm:$0xff]
      %v568 = vld [vmem:[#allocation2 + $0xda] sm:$0xff]
      %v569 = vld [vmem:[#allocation2 + $0xe2] sm:$0xff]
      %v570 = vld [vmem:[#allocation2 + $0xf2] sm:$0xff]
      %v571 = vld [vmem:[#allocation2 + $0xfa] sm:$0xff]
      %v572 = vld [vmem:[#allocation2 + $0x10a] sm:$0xff]
      %v573 = vld [vmem:[#allocation2 + $0x112] sm:$0xff]
      %v574 = vld [vmem:[#allocation2 + $0x122] sm:$0xff]
      %v575 = vld [vmem:[#allocation2 + $0x12a] sm:$0xff]
      %v576 = vld [vmem:[#allocation2 + $0x13a] sm:$0xff]
      %v577 = vld [vmem:[#allocation2 + $0x142] sm:$0xff]
      %v578 = vld [vmem:[#allocation2 + $0x152] sm:$0xff]
      %v579 = vld [vmem:[#allocation2 + $0x15a] sm:$0xff]
      %v580 = vld [vmem:[#allocation2 + $0x16a] sm:$0xff]
      %v581 = vld [vmem:[#allocation2 + $0x172] sm:$0xff]
      %614 = vrot.lane.b32.xlu0 %v550, 16
      %v615 = vpop.permute.xlu0 %614
      %616 = vrot.lane.b32.xlu0 %v551, 16
      %v617 = vpop.permute.xlu0 %616
      %618 = vrot.lane.b32.xlu0 %v552, 16
      %v619 = vpop.permute.xlu0 %618
      %620 = vrot.lane.b32.xlu0 %v553, 16
      %v621 = vpop.permute.xlu0 %620
      %622 = vrot.lane.b32.xlu0 %v554, 16
      %v623 = vpop.permute.xlu0 %622
      %624 = vrot.lane.b32.xlu0 %v555, 16
      %v625 = vpop.permute.xlu0 %624
      %626 = vrot.lane.b32.xlu0 %v556, 16
      %v627 = vpop.permute.xlu0 %626
      %628 = vrot.lane.b32.xlu0 %v557, 16
      %v629 = vpop.permute.xlu0 %628
      %630 = vrot.lane.b32.xlu0 %v558, 16
      %v631 = vpop.permute.xlu0 %630
      %632 = vrot.lane.b32.xlu0 %v559, 16
      %v633 = vpop.permute.xlu0 %632
      %634 = vrot.lane.b32.xlu0 %v560, 16
      %v635 = vpop.permute.xlu0 %634
      %636 = vrot.lane.b32.xlu0 %v561, 16
      %v637 = vpop.permute.xlu0 %636
      %638 = vrot.lane.b32.xlu0 %v562, 16
      %v639 = vpop.permute.xlu0 %638
      %640 = vrot.lane.b32.xlu0 %v563, 16
      %v641 = vpop.permute.xlu0 %640
      %642 = vrot.lane.b32.xlu0 %v564, 16
      %v643 = vpop.permute.xlu0 %642
      %644 = vrot.lane.b32.xlu0 %v565, 16
      %v645 = vpop.permute.xlu0 %644
      %646 = vrot.lane.b32.xlu0 %v566, 16
      %v647 = vpop.permute.xlu0 %646
      %648 = vrot.lane.b32.xlu0 %v567, 16
      %v649 = vpop.permute.xlu0 %648
      %650 = vrot.lane.b32.xlu0 %v568, 16
      %v651 = vpop.permute.xlu0 %650
      %652 = vrot.lane.b32.xlu0 %v569, 16
      %v653 = vpop.permute.xlu0 %652
      %654 = vrot.lane.b32.xlu0 %v570, 16
      %v655 = vpop.permute.xlu0 %654
      %656 = vrot.lane.b32.xlu0 %v571, 16
      %v657 = vpop.permute.xlu0 %656
      %658 = vrot.lane.b32.xlu0 %v572, 16
      %v659 = vpop.permute.xlu0 %658
      %660 = vrot.lane.b32.xlu0 %v573, 16
      %v661 = vpop.permute.xlu0 %660
      %662 = vrot.lane.b32.xlu0 %v574, 16
      %v663 = vpop.permute.xlu0 %662
      %664 = vrot.lane.b32.xlu0 %v575, 16
      %v665 = vpop.permute.xlu0 %664
      %666 = vrot.lane.b32.xlu0 %v576, 16
      %v667 = vpop.permute.xlu0 %666
      %668 = vrot.lane.b32.xlu0 %v577, 16
      %v669 = vpop.permute.xlu0 %668
      %670 = vrot.lane.b32.xlu0 %v578, 16
      %v671 = vpop.permute.xlu0 %670
      %672 = vrot.lane.b32.xlu0 %v579, 16
      %v673 = vpop.permute.xlu0 %672
      %674 = vrot.lane.b32.xlu0 %v580, 16
      %v675 = vpop.permute.xlu0 %674
      %676 = vrot.lane.b32.xlu0 %v581, 16
      %v677 = vpop.permute.xlu0 %676
      %vm710 = vcmask 195712
      %711 = vst.msk [vmem:[#allocation3] sm:$0xff] %vm710, %v615
      %712 = vst.msk [vmem:[#allocation3 + $0x8] sm:$0xff] %vm710, %v617
      %713 = vst.msk [vmem:[#allocation3 + $0x10] sm:$0xff] %vm710, %v619
      %714 = vst.msk [vmem:[#allocation3 + $0x18] sm:$0xff] %vm710, %v621
      %715 = vst.msk [vmem:[#allocation3 + $0x20] sm:$0xff] %vm710, %v623
      %716 = vst.msk [vmem:[#allocation3 + $0x28] sm:$0xff] %vm710, %v625
      %717 = vst.msk [vmem:[#allocation3 + $0x30] sm:$0xff] %vm710, %v627
      %718 = vst.msk [vmem:[#allocation3 + $0x38] sm:$0xff] %vm710, %v629
      %719 = vst.msk [vmem:[#allocation3 + $0x40] sm:$0xff] %vm710, %v631
      %720 = vst.msk [vmem:[#allocation3 + $0x48] sm:$0xff] %vm710, %v633
      %721 = vst.msk [vmem:[#allocation3 + $0x50] sm:$0xff] %vm710, %v635
      %722 = vst.msk [vmem:[#allocation3 + $0x58] sm:$0xff] %vm710, %v637
      %723 = vst.msk [vmem:[#allocation3 + $0x60] sm:$0xff] %vm710, %v639
      %724 = vst.msk [vmem:[#allocation3 + $0x68] sm:$0xff] %vm710, %v641
      %725 = vst.msk [vmem:[#allocation3 + $0x70] sm:$0xff] %vm710, %v643
      %726 = vst.msk [vmem:[#allocation3 + $0x78] sm:$0xff] %vm710, %v645
      %727 = vst.msk [vmem:[#allocation3 + $0x80] sm:$0xff] %vm710, %v647
      %728 = vst.msk [vmem:[#allocation3 + $0x88] sm:$0xff] %vm710, %v649
      %729 = vst.msk [vmem:[#allocation3 + $0x90] sm:$0xff] %vm710, %v651
      %730 = vst.msk [vmem:[#allocation3 + $0x98] sm:$0xff] %vm710, %v653
      %731 = vst.msk [vmem:[#allocation3 + $0xa0] sm:$0xff] %vm710, %v655
      %732 = vst.msk [vmem:[#allocation3 + $0xa8] sm:$0xff] %vm710, %v657
      %733 = vst.msk [vmem:[#allocation3 + $0xb0] sm:$0xff] %vm710, %v659
      %734 = vst.msk [vmem:[#allocation3 + $0xb8] sm:$0xff] %vm710, %v661
      %735 = vst.msk [vmem:[#allocation3 + $0xc0] sm:$0xff] %vm710, %v663
      %736 = vst.msk [vmem:[#allocation3 + $0xc8] sm:$0xff] %vm710, %v665
      %737 = vst.msk [vmem:[#allocation3 + $0xd0] sm:$0xff] %vm710, %v667
      %738 = vst.msk [vmem:[#allocation3 + $0xd8] sm:$0xff] %vm710, %v669
      %739 = vst.msk [vmem:[#allocation3 + $0xe0] sm:$0xff] %vm710, %v671
      %740 = vst.msk [vmem:[#allocation3 + $0xe8] sm:$0xff] %vm710, %v673
      %741 = vst.msk [vmem:[#allocation3 + $0xf0] sm:$0xff] %vm710, %v675
      %742 = vst.msk [vmem:[#allocation3 + $0xf8] sm:$0xff] %vm710, %v677
      %v743 = vld [vmem:[%s259] sm:$0xff]
      %v744 = vld [vmem:[%s259 + $0x8] sm:$0xff]
      %v745 = vld [vmem:[%s259 + $0x18] sm:$0xff]
      %v746 = vld [vmem:[%s259 + $0x20] sm:$0xff]
      %v747 = vld [vmem:[%s259 + $0x30] sm:$0xff]
      %v748 = vld [vmem:[%s259 + $0x38] sm:$0xff]
      %v749 = vld [vmem:[%s259 + $0x48] sm:$0xff]
      %v750 = vld [vmem:[%s259 + $0x50] sm:$0xff]
      %v751 = vld [vmem:[%s259 + $0x60] sm:$0xff]
      %v752 = vld [vmem:[%s259 + $0x68] sm:$0xff]
      %v753 = vld [vmem:[%s259 + $0x78] sm:$0xff]
      %v754 = vld [vmem:[%s259 + $0x80] sm:$0xff]
      %v755 = vld [vmem:[%s259 + $0x90] sm:$0xff]
      %v756 = vld [vmem:[%s259 + $0x98] sm:$0xff]
      %v757 = vld [vmem:[%s259 + $0xa8] sm:$0xff]
      %v758 = vld [vmem:[%s259 + $0xb0] sm:$0xff]
      %v759 = vld [vmem:[%s259 + $0xc0] sm:$0xff]
      %v760 = vld [vmem:[%s259 + $0xc8] sm:$0xff]
      %v761 = vld [vmem:[%s259 + $0xd8] sm:$0xff]
      %v762 = vld [vmem:[%s259 + $0xe0] sm:$0xff]
      %v763 = vld [vmem:[%s259 + $0xf0] sm:$0xff]
      %v764 = vld [vmem:[%s259 + $0xf8] sm:$0xff]
      %v765 = vld [vmem:[%s259 + $0x108] sm:$0xff]
      %v766 = vld [vmem:[%s259 + $0x110] sm:$0xff]
      %v767 = vld [vmem:[%s259 + $0x120] sm:$0xff]
      %v768 = vld [vmem:[%s259 + $0x128] sm:$0xff]
      %v769 = vld [vmem:[%s259 + $0x138] sm:$0xff]
      %v770 = vld [vmem:[%s259 + $0x140] sm:$0xff]
      %v771 = vld [vmem:[%s259 + $0x150] sm:$0xff]
      %v772 = vld [vmem:[%s259 + $0x158] sm:$0xff]
      %v773 = vld [vmem:[%s259 + $0x168] sm:$0xff]
      %v774 = vld [vmem:[%s259 + $0x170] sm:$0xff]
      %807 = vrot.lane.b32.xlu0 %v743, 24
      %v808 = vpop.permute.xlu0 %807
      %809 = vrot.lane.b32.xlu0 %v744, 24
      %v810 = vpop.permute.xlu0 %809
      %811 = vrot.lane.b32.xlu0 %v745, 24
      %v812 = vpop.permute.xlu0 %811
      %813 = vrot.lane.b32.xlu0 %v746, 24
      %v814 = vpop.permute.xlu0 %813
      %815 = vrot.lane.b32.xlu0 %v747, 24
      %v816 = vpop.permute.xlu0 %815
      %817 = vrot.lane.b32.xlu0 %v748, 24
      %v818 = vpop.permute.xlu0 %817
      %819 = vrot.lane.b32.xlu0 %v749, 24
      %v820 = vpop.permute.xlu0 %819
      %821 = vrot.lane.b32.xlu0 %v750, 24
      %v822 = vpop.permute.xlu0 %821
      %823 = vrot.lane.b32.xlu0 %v751, 24
      %v824 = vpop.permute.xlu0 %823
      %825 = vrot.lane.b32.xlu0 %v752, 24
      %v826 = vpop.permute.xlu0 %825
      %827 = vrot.lane.b32.xlu0 %v753, 24
      %v828 = vpop.permute.xlu0 %827
      %829 = vrot.lane.b32.xlu0 %v754, 24
      %v830 = vpop.permute.xlu0 %829
      %831 = vrot.lane.b32.xlu0 %v755, 24
      %v832 = vpop.permute.xlu0 %831
      %833 = vrot.lane.b32.xlu0 %v756, 24
      %v834 = vpop.permute.xlu0 %833
      %835 = vrot.lane.b32.xlu0 %v757, 24
      %v836 = vpop.permute.xlu0 %835
      %837 = vrot.lane.b32.xlu0 %v758, 24
      %v838 = vpop.permute.xlu0 %837
      %839 = vrot.lane.b32.xlu0 %v759, 24
      %v840 = vpop.permute.xlu0 %839
      %841 = vrot.lane.b32.xlu0 %v760, 24
      %v842 = vpop.permute.xlu0 %841
      %843 = vrot.lane.b32.xlu0 %v761, 24
      %v844 = vpop.permute.xlu0 %843
      %845 = vrot.lane.b32.xlu0 %v762, 24
      %v846 = vpop.permute.xlu0 %845
      %847 = vrot.lane.b32.xlu0 %v763, 24
      %v848 = vpop.permute.xlu0 %847
      %849 = vrot.lane.b32.xlu0 %v764, 24
      %v850 = vpop.permute.xlu0 %849
      %851 = vrot.lane.b32.xlu0 %v765, 24
      %v852 = vpop.permute.xlu0 %851
      %853 = vrot.lane.b32.xlu0 %v766, 24
      %v854 = vpop.permute.xlu0 %853
      %855 = vrot.lane.b32.xlu0 %v767, 24
      %v856 = vpop.permute.xlu0 %855
      %857 = vrot.lane.b32.xlu0 %v768, 24
      %v858 = vpop.permute.xlu0 %857
      %859 = vrot.lane.b32.xlu0 %v769, 24
      %v860 = vpop.permute.xlu0 %859
      %861 = vrot.lane.b32.xlu0 %v770, 24
      %v862 = vpop.permute.xlu0 %861
      %863 = vrot.lane.b32.xlu0 %v771, 24
      %v864 = vpop.permute.xlu0 %863
      %865 = vrot.lane.b32.xlu0 %v772, 24
      %v866 = vpop.permute.xlu0 %865
      %867 = vrot.lane.b32.xlu0 %v773, 24
      %v868 = vpop.permute.xlu0 %867
      %869 = vrot.lane.b32.xlu0 %v774, 24
      %v870 = vpop.permute.xlu0 %869
      %vm903 = vcmask 261312
      %904 = vst.msk [vmem:[#allocation3] sm:$0xff] %vm903, %v808
      %905 = vst.msk [vmem:[#allocation3 + $0x8] sm:$0xff] %vm903, %v810
      %906 = vst.msk [vmem:[#allocation3 + $0x10] sm:$0xff] %vm903, %v812
      %907 = vst.msk [vmem:[#allocation3 + $0x18] sm:$0xff] %vm903, %v814
      %908 = vst.msk [vmem:[#allocation3 + $0x20] sm:$0xff] %vm903, %v816
      %909 = vst.msk [vmem:[#allocation3 + $0x28] sm:$0xff] %vm903, %v818
      %910 = vst.msk [vmem:[#allocation3 + $0x30] sm:$0xff] %vm903, %v820
      %911 = vst.msk [vmem:[#allocation3 + $0x38] sm:$0xff] %vm903, %v822
      %912 = vst.msk [vmem:[#allocation3 + $0x40] sm:$0xff] %vm903, %v824
      %913 = vst.msk [vmem:[#allocation3 + $0x48] sm:$0xff] %vm903, %v826
      %914 = vst.msk [vmem:[#allocation3 + $0x50] sm:$0xff] %vm903, %v828
      %915 = vst.msk [vmem:[#allocation3 + $0x58] sm:$0xff] %vm903, %v830
      %916 = vst.msk [vmem:[#allocation3 + $0x60] sm:$0xff] %vm903, %v832
      %917 = vst.msk [vmem:[#allocation3 + $0x68] sm:$0xff] %vm903, %v834
      %918 = vst.msk [vmem:[#allocation3 + $0x70] sm:$0xff] %vm903, %v836
      %919 = vst.msk [vmem:[#allocation3 + $0x78] sm:$0xff] %vm903, %v838
      %920 = vst.msk [vmem:[#allocation3 + $0x80] sm:$0xff] %vm903, %v840
      %921 = vst.msk [vmem:[#allocation3 + $0x88] sm:$0xff] %vm903, %v842
      %922 = vst.msk [vmem:[#allocation3 + $0x90] sm:$0xff] %vm903, %v844
      %923 = vst.msk [vmem:[#allocation3 + $0x98] sm:$0xff] %vm903, %v846
      %924 = vst.msk [vmem:[#allocation3 + $0xa0] sm:$0xff] %vm903, %v848
      %925 = vst.msk [vmem:[#allocation3 + $0xa8] sm:$0xff] %vm903, %v850
      %926 = vst.msk [vmem:[#allocation3 + $0xb0] sm:$0xff] %vm903, %v852
      %927 = vst.msk [vmem:[#allocation3 + $0xb8] sm:$0xff] %vm903, %v854
      %928 = vst.msk [vmem:[#allocation3 + $0xc0] sm:$0xff] %vm903, %v856
      %929 = vst.msk [vmem:[#allocation3 + $0xc8] sm:$0xff] %vm903, %v858
      %930 = vst.msk [vmem:[#allocation3 + $0xd0] sm:$0xff] %vm903, %v860
      %931 = vst.msk [vmem:[#allocation3 + $0xd8] sm:$0xff] %vm903, %v862
      %932 = vst.msk [vmem:[#allocation3 + $0xe0] sm:$0xff] %vm903, %v864
      %933 = vst.msk [vmem:[#allocation3 + $0xe8] sm:$0xff] %vm903, %v866
      %934 = vst.msk [vmem:[#allocation3 + $0xf0] sm:$0xff] %vm903, %v868
      %935 = vst.msk [vmem:[#allocation3 + $0xf8] sm:$0xff] %vm903, %v870
      %v936 = vld [vmem:[%s259 + $0x1] sm:$0xff]
      %v937 = vld [vmem:[%s259 + $0x9] sm:$0xff]
      %v938 = vld [vmem:[%s259 + $0x19] sm:$0xff]
      %v939 = vld [vmem:[%s259 + $0x21] sm:$0xff]
      %v940 = vld [vmem:[%s259 + $0x31] sm:$0xff]
      %v941 = vld [vmem:[%s259 + $0x39] sm:$0xff]
      %v942 = vld [vmem:[%s259 + $0x49] sm:$0xff]
      %v943 = vld [vmem:[%s259 + $0x51] sm:$0xff]
      %v944 = vld [vmem:[%s259 + $0x61] sm:$0xff]
      %v945 = vld [vmem:[%s259 + $0x69] sm:$0xff]
      %v946 = vld [vmem:[%s259 + $0x79] sm:$0xff]
      %v947 = vld [vmem:[%s259 + $0x81] sm:$0xff]
      %v948 = vld [vmem:[%s259 + $0x91] sm:$0xff]
      %v949 = vld [vmem:[%s259 + $0x99] sm:$0xff]
      %v950 = vld [vmem:[%s259 + $0xa9] sm:$0xff]
      %v951 = vld [vmem:[%s259 + $0xb1] sm:$0xff]
      %v952 = vld [vmem:[%s259 + $0xc1] sm:$0xff]
      %v953 = vld [vmem:[%s259 + $0xc9] sm:$0xff]
      %v954 = vld [vmem:[%s259 + $0xd9] sm:$0xff]
      %v955 = vld [vmem:[%s259 + $0xe1] sm:$0xff]
      %v956 = vld [vmem:[%s259 + $0xf1] sm:$0xff]
      %v957 = vld [vmem:[%s259 + $0xf9] sm:$0xff]
      %v958 = vld [vmem:[%s259 + $0x109] sm:$0xff]
      %v959 = vld [vmem:[%s259 + $0x111] sm:$0xff]
      %v960 = vld [vmem:[%s259 + $0x121] sm:$0xff]
      %v961 = vld [vmem:[%s259 + $0x129] sm:$0xff]
      %v962 = vld [vmem:[%s259 + $0x139] sm:$0xff]
      %v963 = vld [vmem:[%s259 + $0x141] sm:$0xff]
      %v964 = vld [vmem:[%s259 + $0x151] sm:$0xff]
      %v965 = vld [vmem:[%s259 + $0x159] sm:$0xff]
      %v966 = vld [vmem:[%s259 + $0x169] sm:$0xff]
      %v967 = vld [vmem:[%s259 + $0x171] sm:$0xff]
      %1000 = vrot.lane.b32.xlu0 %v936, 32
      %v1001 = vpop.permute.xlu0 %1000
      %1002 = vrot.lane.b32.xlu0 %v937, 32
      %v1003 = vpop.permute.xlu0 %1002
      %1004 = vrot.lane.b32.xlu0 %v938, 32
      %v1005 = vpop.permute.xlu0 %1004
      %1006 = vrot.lane.b32.xlu0 %v939, 32
      %v1007 = vpop.permute.xlu0 %1006
      %1008 = vrot.lane.b32.xlu0 %v940, 32
      %v1009 = vpop.permute.xlu0 %1008
      %1010 = vrot.lane.b32.xlu0 %v941, 32
      %v1011 = vpop.permute.xlu0 %1010
      %1012 = vrot.lane.b32.xlu0 %v942, 32
      %v1013 = vpop.permute.xlu0 %1012
      %1014 = vrot.lane.b32.xlu0 %v943, 32
      %v1015 = vpop.permute.xlu0 %1014
      %1016 = vrot.lane.b32.xlu0 %v944, 32
      %v1017 = vpop.permute.xlu0 %1016
      %1018 = vrot.lane.b32.xlu0 %v945, 32
      %v1019 = vpop.permute.xlu0 %1018
      %1020 = vrot.lane.b32.xlu0 %v946, 32
      %v1021 = vpop.permute.xlu0 %1020
      %1022 = vrot.lane.b32.xlu0 %v947, 32
      %v1023 = vpop.permute.xlu0 %1022
      %1024 = vrot.lane.b32.xlu0 %v948, 32
      %v1025 = vpop.permute.xlu0 %1024
      %1026 = vrot.lane.b32.xlu0 %v949, 32
      %v1027 = vpop.permute.xlu0 %1026
      %1028 = vrot.lane.b32.xlu0 %v950, 32
      %v1029 = vpop.permute.xlu0 %1028
      %1030 = vrot.lane.b32.xlu0 %v951, 32
      %v1031 = vpop.permute.xlu0 %1030
      %1032 = vrot.lane.b32.xlu0 %v952, 32
      %v1033 = vpop.permute.xlu0 %1032
      %1034 = vrot.lane.b32.xlu0 %v953, 32
      %v1035 = vpop.permute.xlu0 %1034
      %1036 = vrot.lane.b32.xlu0 %v954, 32
      %v1037 = vpop.permute.xlu0 %1036
      %1038 = vrot.lane.b32.xlu0 %v955, 32
      %v1039 = vpop.permute.xlu0 %1038
      %1040 = vrot.lane.b32.xlu0 %v956, 32
      %v1041 = vpop.permute.xlu0 %1040
      %1042 = vrot.lane.b32.xlu0 %v957, 32
      %v1043 = vpop.permute.xlu0 %1042
      %1044 = vrot.lane.b32.xlu0 %v958, 32
      %v1045 = vpop.permute.xlu0 %1044
      %1046 = vrot.lane.b32.xlu0 %v959, 32
      %v1047 = vpop.permute.xlu0 %1046
      %1048 = vrot.lane.b32.xlu0 %v960, 32
      %v1049 = vpop.permute.xlu0 %1048
      %1050 = vrot.lane.b32.xlu0 %v961, 32
      %v1051 = vpop.permute.xlu0 %1050
      %1052 = vrot.lane.b32.xlu0 %v962, 32
      %v1053 = vpop.permute.xlu0 %1052
      %1054 = vrot.lane.b32.xlu0 %v963, 32
      %v1055 = vpop.permute.xlu0 %1054
      %1056 = vrot.lane.b32.xlu0 %v964, 32
      %v1057 = vpop.permute.xlu0 %1056
      %1058 = vrot.lane.b32.xlu0 %v965, 32
      %v1059 = vpop.permute.xlu0 %1058
      %1060 = vrot.lane.b32.xlu0 %v966, 32
      %v1061 = vpop.permute.xlu0 %1060
      %1062 = vrot.lane.b32.xlu0 %v967, 32
      %v1063 = vpop.permute.xlu0 %1062
      %vm1096 = vcmask 326912
      %1097 = vst.msk [vmem:[#allocation3] sm:$0xff] %vm1096, %v1001
      %1098 = vst.msk [vmem:[#allocation3 + $0x8] sm:$0xff] %vm1096, %v1003
      %1099 = vst.msk [vmem:[#allocation3 + $0x10] sm:$0xff] %vm1096, %v1005
      %1100 = vst.msk [vmem:[#allocation3 + $0x18] sm:$0xff] %vm1096, %v1007
      %1101 = vst.msk [vmem:[#allocation3 + $0x20] sm:$0xff] %vm1096, %v1009
      %1102 = vst.msk [vmem:[#allocation3 + $0x28] sm:$0xff] %vm1096, %v1011
      %1103 = vst.msk [vmem:[#allocation3 + $0x30] sm:$0xff] %vm1096, %v1013
      %1104 = vst.msk [vmem:[#allocation3 + $0x38] sm:$0xff] %vm1096, %v1015
      %1105 = vst.msk [vmem:[#allocation3 + $0x40] sm:$0xff] %vm1096, %v1017
      %1106 = vst.msk [vmem:[#allocation3 + $0x48] sm:$0xff] %vm1096, %v1019
      %1107 = vst.msk [vmem:[#allocation3 + $0x50] sm:$0xff] %vm1096, %v1021
      %1108 = vst.msk [vmem:[#allocation3 + $0x58] sm:$0xff] %vm1096, %v1023
      %1109 = vst.msk [vmem:[#allocation3 + $0x60] sm:$0xff] %vm1096, %v1025
      %1110 = vst.msk [vmem:[#allocation3 + $0x68] sm:$0xff] %vm1096, %v1027
      %1111 = vst.msk [vmem:[#allocation3 + $0x70] sm:$0xff] %vm1096, %v1029
      %1112 = vst.msk [vmem:[#allocation3 + $0x78] sm:$0xff] %vm1096, %v1031
      %1113 = vst.msk [vmem:[#allocation3 + $0x80] sm:$0xff] %vm1096, %v1033
      %1114 = vst.msk [vmem:[#allocation3 + $0x88] sm:$0xff] %vm1096, %v1035
      %1115 = vst.msk [vmem:[#allocation3 + $0x90] sm:$0xff] %vm1096, %v1037
      %1116 = vst.msk [vmem:[#allocation3 + $0x98] sm:$0xff] %vm1096, %v1039
      %1117 = vst.msk [vmem:[#allocation3 + $0xa0] sm:$0xff] %vm1096, %v1041
      %1118 = vst.msk [vmem:[#allocation3 + $0xa8] sm:$0xff] %vm1096, %v1043
      %1119 = vst.msk [vmem:[#allocation3 + $0xb0] sm:$0xff] %vm1096, %v1045
      %1120 = vst.msk [vmem:[#allocation3 + $0xb8] sm:$0xff] %vm1096, %v1047
      %1121 = vst.msk [vmem:[#allocation3 + $0xc0] sm:$0xff] %vm1096, %v1049
      %1122 = vst.msk [vmem:[#allocation3 + $0xc8] sm:$0xff] %vm1096, %v1051
      %1123 = vst.msk [vmem:[#allocation3 + $0xd0] sm:$0xff] %vm1096, %v1053
      %1124 = vst.msk [vmem:[#allocation3 + $0xd8] sm:$0xff] %vm1096, %v1055
      %1125 = vst.msk [vmem:[#allocation3 + $0xe0] sm:$0xff] %vm1096, %v1057
      %1126 = vst.msk [vmem:[#allocation3 + $0xe8] sm:$0xff] %vm1096, %v1059
      %1127 = vst.msk [vmem:[#allocation3 + $0xf0] sm:$0xff] %vm1096, %v1061
      %1128 = vst.msk [vmem:[#allocation3 + $0xf8] sm:$0xff] %vm1096, %v1063
      %v1129 = vld [vmem:[%s259 + $0x2] sm:$0xff]
      %v1130 = vld [vmem:[%s259 + $0xa] sm:$0xff]
      %v1131 = vld [vmem:[%s259 + $0x1a] sm:$0xff]
      %v1132 = vld [vmem:[%s259 + $0x22] sm:$0xff]
      %v1133 = vld [vmem:[%s259 + $0x32] sm:$0xff]
      %v1134 = vld [vmem:[%s259 + $0x3a] sm:$0xff]
      %v1135 = vld [vmem:[%s259 + $0x4a] sm:$0xff]
      %v1136 = vld [vmem:[%s259 + $0x52] sm:$0xff]
      %v1137 = vld [vmem:[%s259 + $0x62] sm:$0xff]
      %v1138 = vld [vmem:[%s259 + $0x6a] sm:$0xff]
      %v1139 = vld [vmem:[%s259 + $0x7a] sm:$0xff]
      %v1140 = vld [vmem:[%s259 + $0x82] sm:$0xff]
      %v1141 = vld [vmem:[%s259 + $0x92] sm:$0xff]
      %v1142 = vld [vmem:[%s259 + $0x9a] sm:$0xff]
      %v1143 = vld [vmem:[%s259 + $0xaa] sm:$0xff]
      %v1144 = vld [vmem:[%s259 + $0xb2] sm:$0xff]
      %v1145 = vld [vmem:[%s259 + $0xc2] sm:$0xff]
      %v1146 = vld [vmem:[%s259 + $0xca] sm:$0xff]
      %v1147 = vld [vmem:[%s259 + $0xda] sm:$0xff]
      %v1148 = vld [vmem:[%s259 + $0xe2] sm:$0xff]
      %v1149 = vld [vmem:[%s259 + $0xf2] sm:$0xff]
      %v1150 = vld [vmem:[%s259 + $0xfa] sm:$0xff]
      %v1151 = vld [vmem:[%s259 + $0x10a] sm:$0xff]
      %v1152 = vld [vmem:[%s259 + $0x112] sm:$0xff]
      %v1153 = vld [vmem:[%s259 + $0x122] sm:$0xff]
      %v1154 = vld [vmem:[%s259 + $0x12a] sm:$0xff]
      %v1155 = vld [vmem:[%s259 + $0x13a] sm:$0xff]
      %v1156 = vld [vmem:[%s259 + $0x142] sm:$0xff]
      %v1157 = vld [vmem:[%s259 + $0x152] sm:$0xff]
      %v1158 = vld [vmem:[%s259 + $0x15a] sm:$0xff]
      %v1159 = vld [vmem:[%s259 + $0x16a] sm:$0xff]
      %v1160 = vld [vmem:[%s259 + $0x172] sm:$0xff]
      %1193 = vrot.lane.b32.xlu0 %v1129, 40
      %v1194 = vpop.permute.xlu0 %1193
      %1195 = vrot.lane.b32.xlu0 %v1130, 40
      %v1196 = vpop.permute.xlu0 %1195
      %1197 = vrot.lane.b32.xlu0 %v1131, 40
      %v1198 = vpop.permute.xlu0 %1197
      %1199 = vrot.lane.b32.xlu0 %v1132, 40
      %v1200 = vpop.permute.xlu0 %1199
      %1201 = vrot.lane.b32.xlu0 %v1133, 40
      %v1202 = vpop.permute.xlu0 %1201
      %1203 = vrot.lane.b32.xlu0 %v1134, 40
      %v1204 = vpop.permute.xlu0 %1203
      %1205 = vrot.lane.b32.xlu0 %v1135, 40
      %v1206 = vpop.permute.xlu0 %1205
      %1207 = vrot.lane.b32.xlu0 %v1136, 40
      %v1208 = vpop.permute.xlu0 %1207
      %1209 = vrot.lane.b32.xlu0 %v1137, 40
      %v1210 = vpop.permute.xlu0 %1209
      %1211 = vrot.lane.b32.xlu0 %v1138, 40
      %v1212 = vpop.permute.xlu0 %1211
      %1213 = vrot.lane.b32.xlu0 %v1139, 40
      %v1214 = vpop.permute.xlu0 %1213
      %1215 = vrot.lane.b32.xlu0 %v1140, 40
      %v1216 = vpop.permute.xlu0 %1215
      %1217 = vrot.lane.b32.xlu0 %v1141, 40
      %v1218 = vpop.permute.xlu0 %1217
      %1219 = vrot.lane.b32.xlu0 %v1142, 40
      %v1220 = vpop.permute.xlu0 %1219
      %1221 = vrot.lane.b32.xlu0 %v1143, 40
      %v1222 = vpop.permute.xlu0 %1221
      %1223 = vrot.lane.b32.xlu0 %v1144, 40
      %v1224 = vpop.permute.xlu0 %1223
      %1225 = vrot.lane.b32.xlu0 %v1145, 40
      %v1226 = vpop.permute.xlu0 %1225
      %1227 = vrot.lane.b32.xlu0 %v1146, 40
      %v1228 = vpop.permute.xlu0 %1227
      %1229 = vrot.lane.b32.xlu0 %v1147, 40
      %v1230 = vpop.permute.xlu0 %1229
      %1231 = vrot.lane.b32.xlu0 %v1148, 40
      %v1232 = vpop.permute.xlu0 %1231
      %1233 = vrot.lane.b32.xlu0 %v1149, 40
      %v1234 = vpop.permute.xlu0 %1233
      %1235 = vrot.lane.b32.xlu0 %v1150, 40
      %v1236 = vpop.permute.xlu0 %1235
      %1237 = vrot.lane.b32.xlu0 %v1151, 40
      %v1238 = vpop.permute.xlu0 %1237
      %1239 = vrot.lane.b32.xlu0 %v1152, 40
      %v1240 = vpop.permute.xlu0 %1239
      %1241 = vrot.lane.b32.xlu0 %v1153, 40
      %v1242 = vpop.permute.xlu0 %1241
      %1243 = vrot.lane.b32.xlu0 %v1154, 40
      %v1244 = vpop.permute.xlu0 %1243
      %1245 = vrot.lane.b32.xlu0 %v1155, 40
      %v1246 = vpop.permute.xlu0 %1245
      %1247 = vrot.lane.b32.xlu0 %v1156, 40
      %v1248 = vpop.permute.xlu0 %1247
      %1249 = vrot.lane.b32.xlu0 %v1157, 40
      %v1250 = vpop.permute.xlu0 %1249
      %1251 = vrot.lane.b32.xlu0 %v1158, 40
      %v1252 = vpop.permute.xlu0 %1251
      %1253 = vrot.lane.b32.xlu0 %v1159, 40
      %v1254 = vpop.permute.xlu0 %1253
      %1255 = vrot.lane.b32.xlu0 %v1160, 40
      %v1256 = vpop.permute.xlu0 %1255
      %vm1289 = vcmask 392512
      %1290 = vst.msk [vmem:[#allocation3] sm:$0xff] %vm1289, %v1194
      %1291 = vst.msk [vmem:[#allocation3 + $0x8] sm:$0xff] %vm1289, %v1196
      %1292 = vst.msk [vmem:[#allocation3 + $0x10] sm:$0xff] %vm1289, %v1198
      %1293 = vst.msk [vmem:[#allocation3 + $0x18] sm:$0xff] %vm1289, %v1200
      %1294 = vst.msk [vmem:[#allocation3 + $0x20] sm:$0xff] %vm1289, %v1202
      %1295 = vst.msk [vmem:[#allocation3 + $0x28] sm:$0xff] %vm1289, %v1204
      %1296 = vst.msk [vmem:[#allocation3 + $0x30] sm:$0xff] %vm1289, %v1206
      %1297 = vst.msk [vmem:[#allocation3 + $0x38] sm:$0xff] %vm1289, %v1208
      %1298 = vst.msk [vmem:[#allocation3 + $0x40] sm:$0xff] %vm1289, %v1210
      %1299 = vst.msk [vmem:[#allocation3 + $0x48] sm:$0xff] %vm1289, %v1212
      %1300 = vst.msk [vmem:[#allocation3 + $0x50] sm:$0xff] %vm1289, %v1214
      %1301 = vst.msk [vmem:[#allocation3 + $0x58] sm:$0xff] %vm1289, %v1216
      %1302 = vst.msk [vmem:[#allocation3 + $0x60] sm:$0xff] %vm1289, %v1218
      %1303 = vst.msk [vmem:[#allocation3 + $0x68] sm:$0xff] %vm1289, %v1220
      %1304 = vst.msk [vmem:[#allocation3 + $0x70] sm:$0xff] %vm1289, %v1222
      %1305 = vst.msk [vmem:[#allocation3 + $0x78] sm:$0xff] %vm1289, %v1224
      %1306 = vst.msk [vmem:[#allocation3 + $0x80] sm:$0xff] %vm1289, %v1226
      %1307 = vst.msk [vmem:[#allocation3 + $0x88] sm:$0xff] %vm1289, %v1228
      %1308 = vst.msk [vmem:[#allocation3 + $0x90] sm:$0xff] %vm1289, %v1230
      %1309 = vst.msk [vmem:[#allocation3 + $0x98] sm:$0xff] %vm1289, %v1232
      %1310 = vst.msk [vmem:[#allocation3 + $0xa0] sm:$0xff] %vm1289, %v1234
      %1311 = vst.msk [vmem:[#allocation3 + $0xa8] sm:$0xff] %vm1289, %v1236
      %1312 = vst.msk [vmem:[#allocation3 + $0xb0] sm:$0xff] %vm1289, %v1238
      %1313 = vst.msk [vmem:[#allocation3 + $0xb8] sm:$0xff] %vm1289, %v1240
      %1314 = vst.msk [vmem:[#allocation3 + $0xc0] sm:$0xff] %vm1289, %v1242
      %1315 = vst.msk [vmem:[#allocation3 + $0xc8] sm:$0xff] %vm1289, %v1244
      %1316 = vst.msk [vmem:[#allocation3 + $0xd0] sm:$0xff] %vm1289, %v1246
      %1317 = vst.msk [vmem:[#allocation3 + $0xd8] sm:$0xff] %vm1289, %v1248
      %1318 = vst.msk [vmem:[#allocation3 + $0xe0] sm:$0xff] %vm1289, %v1250
      %1319 = vst.msk [vmem:[#allocation3 + $0xe8] sm:$0xff] %vm1289, %v1252
      %1320 = vst.msk [vmem:[#allocation3 + $0xf0] sm:$0xff] %vm1289, %v1254
      %1321 = vst.msk [vmem:[#allocation3 + $0xf8] sm:$0xff] %vm1289, %v1256
      %s1322 = scalar_lea.vmem [#allocation2], 48
      %v1323 = vld [vmem:[%s1322] sm:$0xff]
      %v1324 = vld [vmem:[%s1322 + $0x8] sm:$0xff]
      %v1325 = vld [vmem:[%s1322 + $0x18] sm:$0xff]
      %v1326 = vld [vmem:[%s1322 + $0x20] sm:$0xff]
      %v1327 = vld [vmem:[%s1322 + $0x30] sm:$0xff]
      %v1328 = vld [vmem:[%s1322 + $0x38] sm:$0xff]
      %v1329 = vld [vmem:[%s1322 + $0x48] sm:$0xff]
      %v1330 = vld [vmem:[%s1322 + $0x50] sm:$0xff]
      %v1331 = vld [vmem:[%s1322 + $0x60] sm:$0xff]
      %v1332 = vld [vmem:[%s1322 + $0x68] sm:$0xff]
      %v1333 = vld [vmem:[%s1322 + $0x78] sm:$0xff]
      %v1334 = vld [vmem:[%s1322 + $0x80] sm:$0xff]
      %v1335 = vld [vmem:[%s1322 + $0x90] sm:$0xff]
      %v1336 = vld [vmem:[%s1322 + $0x98] sm:$0xff]
      %v1337 = vld [vmem:[%s1322 + $0xa8] sm:$0xff]
      %v1338 = vld [vmem:[%s1322 + $0xb0] sm:$0xff]
      %v1339 = vld [vmem:[%s1322 + $0xc0] sm:$0xff]
      %v1340 = vld [vmem:[%s1322 + $0xc8] sm:$0xff]
      %v1341 = vld [vmem:[%s1322 + $0xd8] sm:$0xff]
      %v1342 = vld [vmem:[%s1322 + $0xe0] sm:$0xff]
      %v1343 = vld [vmem:[%s1322 + $0xf0] sm:$0xff]
      %v1344 = vld [vmem:[%s1322 + $0xf8] sm:$0xff]
      %v1345 = vld [vmem:[%s1322 + $0x108] sm:$0xff]
      %v1346 = vld [vmem:[%s1322 + $0x110] sm:$0xff]
      %v1347 = vld [vmem:[%s1322 + $0x120] sm:$0xff]
      %v1348 = vld [vmem:[%s1322 + $0x128] sm:$0xff]
      %v1349 = vld [vmem:[%s1322 + $0x138] sm:$0xff]
      %v1350 = vld [vmem:[%s1322 + $0x140] sm:$0xff]
      %v1351 = vld [vmem:[%s1322 + $0x150] sm:$0xff]
      %v1352 = vld [vmem:[%s1322 + $0x158] sm:$0xff]
      %v1353 = vld [vmem:[%s1322 + $0x168] sm:$0xff]
      %v1354 = vld [vmem:[%s1322 + $0x170] sm:$0xff]
      %1387 = vrot.lane.b32.xlu0 %v1323, 48
      %v1388 = vpop.permute.xlu0 %1387
      %1389 = vrot.lane.b32.xlu0 %v1324, 48
      %v1390 = vpop.permute.xlu0 %1389
      %1391 = vrot.lane.b32.xlu0 %v1325, 48
      %v1392 = vpop.permute.xlu0 %1391
      %1393 = vrot.lane.b32.xlu0 %v1326, 48
      %v1394 = vpop.permute.xlu0 %1393
      %1395 = vrot.lane.b32.xlu0 %v1327, 48
      %v1396 = vpop.permute.xlu0 %1395
      %1397 = vrot.lane.b32.xlu0 %v1328, 48
      %v1398 = vpop.permute.xlu0 %1397
      %1399 = vrot.lane.b32.xlu0 %v1329, 48
      %v1400 = vpop.permute.xlu0 %1399
      %1401 = vrot.lane.b32.xlu0 %v1330, 48
      %v1402 = vpop.permute.xlu0 %1401
      %1403 = vrot.lane.b32.xlu0 %v1331, 48
      %v1404 = vpop.permute.xlu0 %1403
      %1405 = vrot.lane.b32.xlu0 %v1332, 48
      %v1406 = vpop.permute.xlu0 %1405
      %1407 = vrot.lane.b32.xlu0 %v1333, 48
      %v1408 = vpop.permute.xlu0 %1407
      %1409 = vrot.lane.b32.xlu0 %v1334, 48
      %v1410 = vpop.permute.xlu0 %1409
      %1411 = vrot.lane.b32.xlu0 %v1335, 48
      %v1412 = vpop.permute.xlu0 %1411
      %1413 = vrot.lane.b32.xlu0 %v1336, 48
      %v1414 = vpop.permute.xlu0 %1413
      %1415 = vrot.lane.b32.xlu0 %v1337, 48
      %v1416 = vpop.permute.xlu0 %1415
      %1417 = vrot.lane.b32.xlu0 %v1338, 48
      %v1418 = vpop.permute.xlu0 %1417
      %1419 = vrot.lane.b32.xlu0 %v1339, 48
      %v1420 = vpop.permute.xlu0 %1419
      %1421 = vrot.lane.b32.xlu0 %v1340, 48
      %v1422 = vpop.permute.xlu0 %1421
      %1423 = vrot.lane.b32.xlu0 %v1341, 48
      %v1424 = vpop.permute.xlu0 %1423
      %1425 = vrot.lane.b32.xlu0 %v1342, 48
      %v1426 = vpop.permute.xlu0 %1425
      %1427 = vrot.lane.b32.xlu0 %v1343, 48
      %v1428 = vpop.permute.xlu0 %1427
      %1429 = vrot.lane.b32.xlu0 %v1344, 48
      %v1430 = vpop.permute.xlu0 %1429
      %1431 = vrot.lane.b32.xlu0 %v1345, 48
      %v1432 = vpop.permute.xlu0 %1431
      %1433 = vrot.lane.b32.xlu0 %v1346, 48
      %v1434 = vpop.permute.xlu0 %1433
      %1435 = vrot.lane.b32.xlu0 %v1347, 48
      %v1436 = vpop.permute.xlu0 %1435
      %1437 = vrot.lane.b32.xlu0 %v1348, 48
      %v1438 = vpop.permute.xlu0 %1437
      %1439 = vrot.lane.b32.xlu0 %v1349, 48
      %v1440 = vpop.permute.xlu0 %1439
      %1441 = vrot.lane.b32.xlu0 %v1350, 48
      %v1442 = vpop.permute.xlu0 %1441
      %1443 = vrot.lane.b32.xlu0 %v1351, 48
      %v1444 = vpop.permute.xlu0 %1443
      %1445 = vrot.lane.b32.xlu0 %v1352, 48
      %v1446 = vpop.permute.xlu0 %1445
      %1447 = vrot.lane.b32.xlu0 %v1353, 48
      %v1448 = vpop.permute.xlu0 %1447
      %1449 = vrot.lane.b32.xlu0 %v1354, 48
      %v1450 = vpop.permute.xlu0 %1449
      %vm1483 = vcmask 458112
      %1484 = vst.msk [vmem:[#allocation3] sm:$0xff] %vm1483, %v1388
      %1485 = vst.msk [vmem:[#allocation3 + $0x8] sm:$0xff] %vm1483, %v1390
      %1486 = vst.msk [vmem:[#allocation3 + $0x10] sm:$0xff] %vm1483, %v1392
      %1487 = vst.msk [vmem:[#allocation3 + $0x18] sm:$0xff] %vm1483, %v1394
      %1488 = vst.msk [vmem:[#allocation3 + $0x20] sm:$0xff] %vm1483, %v1396
      %1489 = vst.msk [vmem:[#allocation3 + $0x28] sm:$0xff] %vm1483, %v1398
      %1490 = vst.msk [vmem:[#allocation3 + $0x30] sm:$0xff] %vm1483, %v1400
      %1491 = vst.msk [vmem:[#allocation3 + $0x38] sm:$0xff] %vm1483, %v1402
      %1492 = vst.msk [vmem:[#allocation3 + $0x40] sm:$0xff] %vm1483, %v1404
      %1493 = vst.msk [vmem:[#allocation3 + $0x48] sm:$0xff] %vm1483, %v1406
      %1494 = vst.msk [vmem:[#allocation3 + $0x50] sm:$0xff] %vm1483, %v1408
      %1495 = vst.msk [vmem:[#allocation3 + $0x58] sm:$0xff] %vm1483, %v1410
      %1496 = vst.msk [vmem:[#allocation3 + $0x60] sm:$0xff] %vm1483, %v1412
      %1497 = vst.msk [vmem:[#allocation3 + $0x68] sm:$0xff] %vm1483, %v1414
      %1498 = vst.msk [vmem:[#allocation3 + $0x70] sm:$0xff] %vm1483, %v1416
      %1499 = vst.msk [vmem:[#allocation3 + $0x78] sm:$0xff] %vm1483, %v1418
      %1500 = vst.msk [vmem:[#allocation3 + $0x80] sm:$0xff] %vm1483, %v1420
      %1501 = vst.msk [vmem:[#allocation3 + $0x88] sm:$0xff] %vm1483, %v1422
      %1502 = vst.msk [vmem:[#allocation3 + $0x90] sm:$0xff] %vm1483, %v1424
      %1503 = vst.msk [vmem:[#allocation3 + $0x98] sm:$0xff] %vm1483, %v1426
      %1504 = vst.msk [vmem:[#allocation3 + $0xa0] sm:$0xff] %vm1483, %v1428
      %1505 = vst.msk [vmem:[#allocation3 + $0xa8] sm:$0xff] %vm1483, %v1430
      %1506 = vst.msk [vmem:[#allocation3 + $0xb0] sm:$0xff] %vm1483, %v1432
      %1507 = vst.msk [vmem:[#allocation3 + $0xb8] sm:$0xff] %vm1483, %v1434
      %1508 = vst.msk [vmem:[#allocation3 + $0xc0] sm:$0xff] %vm1483, %v1436
      %1509 = vst.msk [vmem:[#allocation3 + $0xc8] sm:$0xff] %vm1483, %v1438
      %1510 = vst.msk [vmem:[#allocation3 + $0xd0] sm:$0xff] %vm1483, %v1440
      %1511 = vst.msk [vmem:[#allocation3 + $0xd8] sm:$0xff] %vm1483, %v1442
      %1512 = vst.msk [vmem:[#allocation3 + $0xe0] sm:$0xff] %vm1483, %v1444
      %1513 = vst.msk [vmem:[#allocation3 + $0xe8] sm:$0xff] %vm1483, %v1446
      %1514 = vst.msk [vmem:[#allocation3 + $0xf0] sm:$0xff] %vm1483, %v1448
      %1515 = vst.msk [vmem:[#allocation3 + $0xf8] sm:$0xff] %vm1483, %v1450
      %v1516 = vld [vmem:[%s1322 + $0x1] sm:$0xff]
      %v1517 = vld [vmem:[%s1322 + $0x9] sm:$0xff]
      %v1518 = vld [vmem:[%s1322 + $0x19] sm:$0xff]
      %v1519 = vld [vmem:[%s1322 + $0x21] sm:$0xff]
      %v1520 = vld [vmem:[%s1322 + $0x31] sm:$0xff]
      %v1521 = vld [vmem:[%s1322 + $0x39] sm:$0xff]
      %v1522 = vld [vmem:[%s1322 + $0x49] sm:$0xff]
      %v1523 = vld [vmem:[%s1322 + $0x51] sm:$0xff]
      %v1524 = vld [vmem:[%s1322 + $0x61] sm:$0xff]
      %v1525 = vld [vmem:[%s1322 + $0x69] sm:$0xff]
      %v1526 = vld [vmem:[%s1322 + $0x79] sm:$0xff]
      %v1527 = vld [vmem:[%s1322 + $0x81] sm:$0xff]
      %v1528 = vld [vmem:[%s1322 + $0x91] sm:$0xff]
      %v1529 = vld [vmem:[%s1322 + $0x99] sm:$0xff]
      %v1530 = vld [vmem:[%s1322 + $0xa9] sm:$0xff]
      %v1531 = vld [vmem:[%s1322 + $0xb1] sm:$0xff]
      %v1532 = vld [vmem:[%s1322 + $0xc1] sm:$0xff]
      %v1533 = vld [vmem:[%s1322 + $0xc9] sm:$0xff]
      %v1534 = vld [vmem:[%s1322 + $0xd9] sm:$0xff]
      %v1535 = vld [vmem:[%s1322 + $0xe1] sm:$0xff]
      %v1536 = vld [vmem:[%s1322 + $0xf1] sm:$0xff]
      %v1537 = vld [vmem:[%s1322 + $0xf9] sm:$0xff]
      %v1538 = vld [vmem:[%s1322 + $0x109] sm:$0xff]
      %v1539 = vld [vmem:[%s1322 + $0x111] sm:$0xff]
      %v1540 = vld [vmem:[%s1322 + $0x121] sm:$0xff]
      %v1541 = vld [vmem:[%s1322 + $0x129] sm:$0xff]
      %v1542 = vld [vmem:[%s1322 + $0x139] sm:$0xff]
      %v1543 = vld [vmem:[%s1322 + $0x141] sm:$0xff]
      %v1544 = vld [vmem:[%s1322 + $0x151] sm:$0xff]
      %v1545 = vld [vmem:[%s1322 + $0x159] sm:$0xff]
      %v1546 = vld [vmem:[%s1322 + $0x169] sm:$0xff]
      %v1547 = vld [vmem:[%s1322 + $0x171] sm:$0xff]
      %1580 = vrot.lane.b32.xlu0 %v1516, 56
      %v1581 = vpop.permute.xlu0 %1580
      %1582 = vrot.lane.b32.xlu0 %v1517, 56
      %v1583 = vpop.permute.xlu0 %1582
      %1584 = vrot.lane.b32.xlu0 %v1518, 56
      %v1585 = vpop.permute.xlu0 %1584
      %1586 = vrot.lane.b32.xlu0 %v1519, 56
      %v1587 = vpop.permute.xlu0 %1586
      %1588 = vrot.lane.b32.xlu0 %v1520, 56
      %v1589 = vpop.permute.xlu0 %1588
      %1590 = vrot.lane.b32.xlu0 %v1521, 56
      %v1591 = vpop.permute.xlu0 %1590
      %1592 = vrot.lane.b32.xlu0 %v1522, 56
      %v1593 = vpop.permute.xlu0 %1592
      %1594 = vrot.lane.b32.xlu0 %v1523, 56
      %v1595 = vpop.permute.xlu0 %1594
      %1596 = vrot.lane.b32.xlu0 %v1524, 56
      %v1597 = vpop.permute.xlu0 %1596
      %1598 = vrot.lane.b32.xlu0 %v1525, 56
      %v1599 = vpop.permute.xlu0 %1598
      %1600 = vrot.lane.b32.xlu0 %v1526, 56
      %v1601 = vpop.permute.xlu0 %1600
      %1602 = vrot.lane.b32.xlu0 %v1527, 56
      %v1603 = vpop.permute.xlu0 %1602
      %1604 = vrot.lane.b32.xlu0 %v1528, 56
      %v1605 = vpop.permute.xlu0 %1604
      %1606 = vrot.lane.b32.xlu0 %v1529, 56
      %v1607 = vpop.permute.xlu0 %1606
      %1608 = vrot.lane.b32.xlu0 %v1530, 56
      %v1609 = vpop.permute.xlu0 %1608
      %1610 = vrot.lane.b32.xlu0 %v1531, 56
      %v1611 = vpop.permute.xlu0 %1610
      %1612 = vrot.lane.b32.xlu0 %v1532, 56
      %v1613 = vpop.permute.xlu0 %1612
      %1614 = vrot.lane.b32.xlu0 %v1533, 56
      %v1615 = vpop.permute.xlu0 %1614
      %1616 = vrot.lane.b32.xlu0 %v1534, 56
      %v1617 = vpop.permute.xlu0 %1616
      %1618 = vrot.lane.b32.xlu0 %v1535, 56
      %v1619 = vpop.permute.xlu0 %1618
      %1620 = vrot.lane.b32.xlu0 %v1536, 56
      %v1621 = vpop.permute.xlu0 %1620
      %1622 = vrot.lane.b32.xlu0 %v1537, 56
      %v1623 = vpop.permute.xlu0 %1622
      %1624 = vrot.lane.b32.xlu0 %v1538, 56
      %v1625 = vpop.permute.xlu0 %1624
      %1626 = vrot.lane.b32.xlu0 %v1539, 56
      %v1627 = vpop.permute.xlu0 %1626
      %1628 = vrot.lane.b32.xlu0 %v1540, 56
      %v1629 = vpop.permute.xlu0 %1628
      %1630 = vrot.lane.b32.xlu0 %v1541, 56
      %v1631 = vpop.permute.xlu0 %1630
      %1632 = vrot.lane.b32.xlu0 %v1542, 56
      %v1633 = vpop.permute.xlu0 %1632
      %1634 = vrot.lane.b32.xlu0 %v1543, 56
      %v1635 = vpop.permute.xlu0 %1634
      %1636 = vrot.lane.b32.xlu0 %v1544, 56
      %v1637 = vpop.permute.xlu0 %1636
      %1638 = vrot.lane.b32.xlu0 %v1545, 56
      %v1639 = vpop.permute.xlu0 %1638
      %1640 = vrot.lane.b32.xlu0 %v1546, 56
      %v1641 = vpop.permute.xlu0 %1640
      %1642 = vrot.lane.b32.xlu0 %v1547, 56
      %v1643 = vpop.permute.xlu0 %1642
      %vm1676 = vcmask 523712
      %1677 = vst.msk [vmem:[#allocation3] sm:$0xff] %vm1676, %v1581
      %1678 = vst.msk [vmem:[#allocation3 + $0x8] sm:$0xff] %vm1676, %v1583
      %1679 = vst.msk [vmem:[#allocation3 + $0x10] sm:$0xff] %vm1676, %v1585
      %1680 = vst.msk [vmem:[#allocation3 + $0x18] sm:$0xff] %vm1676, %v1587
      %1681 = vst.msk [vmem:[#allocation3 + $0x20] sm:$0xff] %vm1676, %v1589
      %1682 = vst.msk [vmem:[#allocation3 + $0x28] sm:$0xff] %vm1676, %v1591
      %1683 = vst.msk [vmem:[#allocation3 + $0x30] sm:$0xff] %vm1676, %v1593
      %1684 = vst.msk [vmem:[#allocation3 + $0x38] sm:$0xff] %vm1676, %v1595
      %1685 = vst.msk [vmem:[#allocation3 + $0x40] sm:$0xff] %vm1676, %v1597
      %1686 = vst.msk [vmem:[#allocation3 + $0x48] sm:$0xff] %vm1676, %v1599
      %1687 = vst.msk [vmem:[#allocation3 + $0x50] sm:$0xff] %vm1676, %v1601
      %1688 = vst.msk [vmem:[#allocation3 + $0x58] sm:$0xff] %vm1676, %v1603
      %1689 = vst.msk [vmem:[#allocation3 + $0x60] sm:$0xff] %vm1676, %v1605
      %1690 = vst.msk [vmem:[#allocation3 + $0x68] sm:$0xff] %vm1676, %v1607
      %1691 = vst.msk [vmem:[#allocation3 + $0x70] sm:$0xff] %vm1676, %v1609
      %1692 = vst.msk [vmem:[#allocation3 + $0x78] sm:$0xff] %vm1676, %v1611
      %1693 = vst.msk [vmem:[#allocation3 + $0x80] sm:$0xff] %vm1676, %v1613
      %1694 = vst.msk [vmem:[#allocation3 + $0x88] sm:$0xff] %vm1676, %v1615
      %1695 = vst.msk [vmem:[#allocation3 + $0x90] sm:$0xff] %vm1676, %v1617
      %1696 = vst.msk [vmem:[#allocation3 + $0x98] sm:$0xff] %vm1676, %v1619
      %1697 = vst.msk [vmem:[#allocation3 + $0xa0] sm:$0xff] %vm1676, %v1621
      %1698 = vst.msk [vmem:[#allocation3 + $0xa8] sm:$0xff] %vm1676, %v1623
      %1699 = vst.msk [vmem:[#allocation3 + $0xb0] sm:$0xff] %vm1676, %v1625
      %1700 = vst.msk [vmem:[#allocation3 + $0xb8] sm:$0xff] %vm1676, %v1627
      %1701 = vst.msk [vmem:[#allocation3 + $0xc0] sm:$0xff] %vm1676, %v1629
      %1702 = vst.msk [vmem:[#allocation3 + $0xc8] sm:$0xff] %vm1676, %v1631
      %1703 = vst.msk [vmem:[#allocation3 + $0xd0] sm:$0xff] %vm1676, %v1633
      %1704 = vst.msk [vmem:[#allocation3 + $0xd8] sm:$0xff] %vm1676, %v1635
      %1705 = vst.msk [vmem:[#allocation3 + $0xe0] sm:$0xff] %vm1676, %v1637
      %1706 = vst.msk [vmem:[#allocation3 + $0xe8] sm:$0xff] %vm1676, %v1639
      %1707 = vst.msk [vmem:[#allocation3 + $0xf0] sm:$0xff] %vm1676, %v1641
      %1708 = vst.msk [vmem:[#allocation3 + $0xf8] sm:$0xff] %vm1676, %v1643
      %v1709 = vld [vmem:[%s1322 + $0x2] sm:$0xff]
      %v1710 = vld [vmem:[%s1322 + $0xa] sm:$0xff]
      %v1711 = vld [vmem:[%s1322 + $0x1a] sm:$0xff]
      %v1712 = vld [vmem:[%s1322 + $0x22] sm:$0xff]
      %v1713 = vld [vmem:[%s1322 + $0x32] sm:$0xff]
      %v1714 = vld [vmem:[%s1322 + $0x3a] sm:$0xff]
      %v1715 = vld [vmem:[%s1322 + $0x4a] sm:$0xff]
      %v1716 = vld [vmem:[%s1322 + $0x52] sm:$0xff]
      %v1717 = vld [vmem:[%s1322 + $0x62] sm:$0xff]
      %v1718 = vld [vmem:[%s1322 + $0x6a] sm:$0xff]
      %v1719 = vld [vmem:[%s1322 + $0x7a] sm:$0xff]
      %v1720 = vld [vmem:[%s1322 + $0x82] sm:$0xff]
      %v1721 = vld [vmem:[%s1322 + $0x92] sm:$0xff]
      %v1722 = vld [vmem:[%s1322 + $0x9a] sm:$0xff]
      %v1723 = vld [vmem:[%s1322 + $0xaa] sm:$0xff]
      %v1724 = vld [vmem:[%s1322 + $0xb2] sm:$0xff]
      %v1725 = vld [vmem:[%s1322 + $0xc2] sm:$0xff]
      %v1726 = vld [vmem:[%s1322 + $0xca] sm:$0xff]
      %v1727 = vld [vmem:[%s1322 + $0xda] sm:$0xff]
      %v1728 = vld [vmem:[%s1322 + $0xe2] sm:$0xff]
      %v1729 = vld [vmem:[%s1322 + $0xf2] sm:$0xff]
      %v1730 = vld [vmem:[%s1322 + $0xfa] sm:$0xff]
      %v1731 = vld [vmem:[%s1322 + $0x10a] sm:$0xff]
      %v1732 = vld [vmem:[%s1322 + $0x112] sm:$0xff]
      %v1733 = vld [vmem:[%s1322 + $0x122] sm:$0xff]
      %v1734 = vld [vmem:[%s1322 + $0x12a] sm:$0xff]
      %v1735 = vld [vmem:[%s1322 + $0x13a] sm:$0xff]
      %v1736 = vld [vmem:[%s1322 + $0x142] sm:$0xff]
      %v1737 = vld [vmem:[%s1322 + $0x152] sm:$0xff]
      %v1738 = vld [vmem:[%s1322 + $0x15a] sm:$0xff]
      %v1739 = vld [vmem:[%s1322 + $0x16a] sm:$0xff]
      %v1740 = vld [vmem:[%s1322 + $0x172] sm:$0xff]
      %1773 = vrot.lane.b32.xlu0 %v1709, 64
      %v1774 = vpop.permute.xlu0 %1773
      %1775 = vrot.lane.b32.xlu0 %v1710, 64
      %v1776 = vpop.permute.xlu0 %1775
      %1777 = vrot.lane.b32.xlu0 %v1711, 64
      %v1778 = vpop.permute.xlu0 %1777
      %1779 = vrot.lane.b32.xlu0 %v1712, 64
      %v1780 = vpop.permute.xlu0 %1779
      %1781 = vrot.lane.b32.xlu0 %v1713, 64
      %v1782 = vpop.permute.xlu0 %1781
      %1783 = vrot.lane.b32.xlu0 %v1714, 64
      %v1784 = vpop.permute.xlu0 %1783
      %1785 = vrot.lane.b32.xlu0 %v1715, 64
      %v1786 = vpop.permute.xlu0 %1785
      %1787 = vrot.lane.b32.xlu0 %v1716, 64
      %v1788 = vpop.permute.xlu0 %1787
      %1789 = vrot.lane.b32.xlu0 %v1717, 64
      %v1790 = vpop.permute.xlu0 %1789
      %1791 = vrot.lane.b32.xlu0 %v1718, 64
      %v1792 = vpop.permute.xlu0 %1791
      %1793 = vrot.lane.b32.xlu0 %v1719, 64
      %v1794 = vpop.permute.xlu0 %1793
      %1795 = vrot.lane.b32.xlu0 %v1720, 64
      %v1796 = vpop.permute.xlu0 %1795
      %1797 = vrot.lane.b32.xlu0 %v1721, 64
      %v1798 = vpop.permute.xlu0 %1797
      %1799 = vrot.lane.b32.xlu0 %v1722, 64
      %v1800 = vpop.permute.xlu0 %1799
      %1801 = vrot.lane.b32.xlu0 %v1723, 64
      %v1802 = vpop.permute.xlu0 %1801
      %1803 = vrot.lane.b32.xlu0 %v1724, 64
      %v1804 = vpop.permute.xlu0 %1803
      %1805 = vrot.lane.b32.xlu0 %v1725, 64
      %v1806 = vpop.permute.xlu0 %1805
      %1807 = vrot.lane.b32.xlu0 %v1726, 64
      %v1808 = vpop.permute.xlu0 %1807
      %1809 = vrot.lane.b32.xlu0 %v1727, 64
      %v1810 = vpop.permute.xlu0 %1809
      %1811 = vrot.lane.b32.xlu0 %v1728, 64
      %v1812 = vpop.permute.xlu0 %1811
      %1813 = vrot.lane.b32.xlu0 %v1729, 64
      %v1814 = vpop.permute.xlu0 %1813
      %1815 = vrot.lane.b32.xlu0 %v1730, 64
      %v1816 = vpop.permute.xlu0 %1815
      %1817 = vrot.lane.b32.xlu0 %v1731, 64
      %v1818 = vpop.permute.xlu0 %1817
      %1819 = vrot.lane.b32.xlu0 %v1732, 64
      %v1820 = vpop.permute.xlu0 %1819
      %1821 = vrot.lane.b32.xlu0 %v1733, 64
      %v1822 = vpop.permute.xlu0 %1821
      %1823 = vrot.lane.b32.xlu0 %v1734, 64
      %v1824 = vpop.permute.xlu0 %1823
      %1825 = vrot.lane.b32.xlu0 %v1735, 64
      %v1826 = vpop.permute.xlu0 %1825
      %1827 = vrot.lane.b32.xlu0 %v1736, 64
      %v1828 = vpop.permute.xlu0 %1827
      %1829 = vrot.lane.b32.xlu0 %v1737, 64
      %v1830 = vpop.permute.xlu0 %1829
      %1831 = vrot.lane.b32.xlu0 %v1738, 64
      %v1832 = vpop.permute.xlu0 %1831
      %1833 = vrot.lane.b32.xlu0 %v1739, 64
      %v1834 = vpop.permute.xlu0 %1833
      %1835 = vrot.lane.b32.xlu0 %v1740, 64
      %v1836 = vpop.permute.xlu0 %1835
      %vm1869 = vcmask 589312
      %1870 = vst.msk [vmem:[#allocation3] sm:$0xff] %vm1869, %v1774
      %1871 = vst.msk [vmem:[#allocation3 + $0x8] sm:$0xff] %vm1869, %v1776
      %1872 = vst.msk [vmem:[#allocation3 + $0x10] sm:$0xff] %vm1869, %v1778
      %1873 = vst.msk [vmem:[#allocation3 + $0x18] sm:$0xff] %vm1869, %v1780
      %1874 = vst.msk [vmem:[#allocation3 + $0x20] sm:$0xff] %vm1869, %v1782
      %1875 = vst.msk [vmem:[#allocation3 + $0x28] sm:$0xff] %vm1869, %v1784
      %1876 = vst.msk [vmem:[#allocation3 + $0x30] sm:$0xff] %vm1869, %v1786
      %1877 = vst.msk [vmem:[#allocation3 + $0x38] sm:$0xff] %vm1869, %v1788
      %1878 = vst.msk [vmem:[#allocation3 + $0x40] sm:$0xff] %vm1869, %v1790
      %1879 = vst.msk [vmem:[#allocation3 + $0x48] sm:$0xff] %vm1869, %v1792
      %1880 = vst.msk [vmem:[#allocation3 + $0x50] sm:$0xff] %vm1869, %v1794
      %1881 = vst.msk [vmem:[#allocation3 + $0x58] sm:$0xff] %vm1869, %v1796
      %1882 = vst.msk [vmem:[#allocation3 + $0x60] sm:$0xff] %vm1869, %v1798
      %1883 = vst.msk [vmem:[#allocation3 + $0x68] sm:$0xff] %vm1869, %v1800
      %1884 = vst.msk [vmem:[#allocation3 + $0x70] sm:$0xff] %vm1869, %v1802
      %1885 = vst.msk [vmem:[#allocation3 + $0x78] sm:$0xff] %vm1869, %v1804
      %1886 = vst.msk [vmem:[#allocation3 + $0x80] sm:$0xff] %vm1869, %v1806
      %1887 = vst.msk [vmem:[#allocation3 + $0x88] sm:$0xff] %vm1869, %v1808
      %1888 = vst.msk [vmem:[#allocation3 + $0x90] sm:$0xff] %vm1869, %v1810
      %1889 = vst.msk [vmem:[#allocation3 + $0x98] sm:$0xff] %vm1869, %v1812
      %1890 = vst.msk [vmem:[#allocation3 + $0xa0] sm:$0xff] %vm1869, %v1814
      %1891 = vst.msk [vmem:[#allocation3 + $0xa8] sm:$0xff] %vm1869, %v1816
      %1892 = vst.msk [vmem:[#allocation3 + $0xb0] sm:$0xff] %vm1869, %v1818
      %1893 = vst.msk [vmem:[#allocation3 + $0xb8] sm:$0xff] %vm1869, %v1820
      %1894 = vst.msk [vmem:[#allocation3 + $0xc0] sm:$0xff] %vm1869, %v1822
      %1895 = vst.msk [vmem:[#allocation3 + $0xc8] sm:$0xff] %vm1869, %v1824
      %1896 = vst.msk [vmem:[#allocation3 + $0xd0] sm:$0xff] %vm1869, %v1826
      %1897 = vst.msk [vmem:[#allocation3 + $0xd8] sm:$0xff] %vm1869, %v1828
      %1898 = vst.msk [vmem:[#allocation3 + $0xe0] sm:$0xff] %vm1869, %v1830
      %1899 = vst.msk [vmem:[#allocation3 + $0xe8] sm:$0xff] %vm1869, %v1832
      %1900 = vst.msk [vmem:[#allocation3 + $0xf0] sm:$0xff] %vm1869, %v1834
      %1901 = vst.msk [vmem:[#allocation3 + $0xf8] sm:$0xff] %vm1869, %v1836
      %v1902 = vld [vmem:[#allocation3] sm:$0xff]
      %v1903 = vld [vmem:[#allocation3 + $0x8] sm:$0xff]
      %v1904 = vld [vmem:[#allocation3 + $0x10] sm:$0xff]
      %v1905 = vld [vmem:[#allocation3 + $0x18] sm:$0xff]
      %v1906 = vld [vmem:[#allocation3 + $0x20] sm:$0xff]
      %v1907 = vld [vmem:[#allocation3 + $0x28] sm:$0xff]
      %v1908 = vld [vmem:[#allocation3 + $0x30] sm:$0xff]
      %v1909 = vld [vmem:[#allocation3 + $0x38] sm:$0xff]
      %v1910 = vld [vmem:[#allocation3 + $0x40] sm:$0xff]
      %v1911 = vld [vmem:[#allocation3 + $0x48] sm:$0xff]
      %v1912 = vld [vmem:[#allocation3 + $0x50] sm:$0xff]
      %v1913 = vld [vmem:[#allocation3 + $0x58] sm:$0xff]
      %v1914 = vld [vmem:[#allocation3 + $0x60] sm:$0xff]
      %v1915 = vld [vmem:[#allocation3 + $0x68] sm:$0xff]
      %v1916 = vld [vmem:[#allocation3 + $0x70] sm:$0xff]
      %v1917 = vld [vmem:[#allocation3 + $0x78] sm:$0xff]
      %v1918 = vld [vmem:[#allocation3 + $0x80] sm:$0xff]
      %v1919 = vld [vmem:[#allocation3 + $0x88] sm:$0xff]
      %v1920 = vld [vmem:[#allocation3 + $0x90] sm:$0xff]
      %v1921 = vld [vmem:[#allocation3 + $0x98] sm:$0xff]
      %v1922 = vld [vmem:[#allocation3 + $0xa0] sm:$0xff]
      %v1923 = vld [vmem:[#allocation3 + $0xa8] sm:$0xff]
      %v1924 = vld [vmem:[#allocation3 + $0xb0] sm:$0xff]
      %v1925 = vld [vmem:[#allocation3 + $0xb8] sm:$0xff]
      %v1926 = vld [vmem:[#allocation3 + $0xc0] sm:$0xff]
      %v1927 = vld [vmem:[#allocation3 + $0xc8] sm:$0xff]
      %v1928 = vld [vmem:[#allocation3 + $0xd0] sm:$0xff]
      %v1929 = vld [vmem:[#allocation3 + $0xd8] sm:$0xff]
      %v1930 = vld [vmem:[#allocation3 + $0xe0] sm:$0xff]
      %v1931 = vld [vmem:[#allocation3 + $0xe8] sm:$0xff]
      %v1932 = vld [vmem:[#allocation3 + $0xf0] sm:$0xff]
      %v1933 = vld [vmem:[#allocation3 + $0xf8] sm:$0xff]
      %v1934 = vld [vmem:[%s1] sm:$0xff]
      %v1935 = vld [vmem:[%s1 + $0x8] sm:$0xff]
      %v1936 = vld [vmem:[%s1 + $0x10] sm:$0xff]
      %v1937 = vld [vmem:[%s1 + $0x18] sm:$0xff]
      %v1938 = vld [vmem:[%s1 + $0x20] sm:$0xff]
      %v1939 = vld [vmem:[%s1 + $0x28] sm:$0xff]
      %v1940 = vld [vmem:[%s1 + $0x30] sm:$0xff]
      %v1941 = vld [vmem:[%s1 + $0x38] sm:$0xff]
      %v1942 = vld [vmem:[%s1 + $0x40] sm:$0xff]
      %vm1943 = vcmask 588800
      %v1945 = vsel %vm1943, %v1902, 0
      %v1948 = vsel %vm1943, %v1903, 0
      %v1951 = vsel %vm1943, %v1904, 0
      %v1954 = vsel %vm1943, %v1905, 0
      %v1957 = vsel %vm1943, %v1906, 0
      %v1960 = vsel %vm1943, %v1907, 0
      %v1963 = vsel %vm1943, %v1908, 0
      %v1966 = vsel %vm1943, %v1909, 0
      %v1969 = vsel %vm1943, %v1910, 0
      %v1972 = vsel %vm1943, %v1911, 0
      %v1975 = vsel %vm1943, %v1912, 0
      %v1978 = vsel %vm1943, %v1913, 0
      %v1981 = vsel %vm1943, %v1914, 0
      %v1984 = vsel %vm1943, %v1915, 0
      %v1987 = vsel %vm1943, %v1916, 0
      %v1990 = vsel %vm1943, %v1917, 0
      %v1993 = vsel %vm1943, %v1918, 0
      %v1996 = vsel %vm1943, %v1919, 0
      %v1999 = vsel %vm1943, %v1920, 0
      %v2002 = vsel %vm1943, %v1921, 0
      %v2005 = vsel %vm1943, %v1922, 0
      %v2008 = vsel %vm1943, %v1923, 0
      %v2011 = vsel %vm1943, %v1924, 0
      %v2014 = vsel %vm1943, %v1925, 0
      %v2017 = vsel %vm1943, %v1926, 0
      %v2020 = vsel %vm1943, %v1927, 0
      %v2023 = vsel %vm1943, %v1928, 0
      %v2026 = vsel %vm1943, %v1929, 0
      %v2029 = vsel %vm1943, %v1930, 0
      %v2032 = vsel %vm1943, %v1931, 0
      %v2035 = vsel %vm1943, %v1932, 0
      %v2038 = vsel %vm1943, %v1933, 0
      %2040 = vmatpush.msra.mxu0 0.0
      %2041 = vmatpush.msra.mxu0 0.0
      %2042 = vmatpush.msra.mxu0 0.0
      %2043 = vmatpush.msra.mxu0 0.0
      %2044 = vmatpush.msra.mxu0 0.0
      %2045 = vmatpush.msra.mxu0 0.0
      %2046 = vmatpush.msra.mxu0 0.0
      %2047 = vmatpush.msra.mxu0 %v1942
      %2048 = vmatpush.msra.mxu0 %v1941
      %2049 = vmatpush.msra.mxu0 %v1940
      %2050 = vmatpush.msra.mxu0 %v1939
      %2051 = vmatpush.msra.mxu0 %v1938
      %2052 = vmatpush.msra.mxu0 %v1937
      %2053 = vmatpush.msra.mxu0 %v1936
      %2054 = vmatpush.msra.mxu0 %v1935
      %2055 = vmatpush.msra.mxu0 %v1934
      %2056 = vmatmul.f32.gmra.mxu0 %v1945
      %v2057 = vpop.f32.mrf.mxu0
      %v2058 = vadd.f32 0.0, %v2057
      %2059 = vmatmul.f32.gmra.mxu0 %v1948
      %v2060 = vpop.f32.mrf.mxu0
      %v2061 = vadd.f32 0.0, %v2060
      %2062 = vmatmul.f32.gmra.mxu0 %v1951
      %v2063 = vpop.f32.mrf.mxu0
      %v2064 = vadd.f32 0.0, %v2063
      %2065 = vmatmul.f32.gmra.mxu0 %v1954
      %v2066 = vpop.f32.mrf.mxu0
      %v2067 = vadd.f32 0.0, %v2066
      %2068 = vmatmul.f32.gmra.mxu0 %v1957
      %v2069 = vpop.f32.mrf.mxu0
      %v2070 = vadd.f32 0.0, %v2069
      %2071 = vmatmul.f32.gmra.mxu0 %v1960
      %v2072 = vpop.f32.mrf.mxu0
      %v2073 = vadd.f32 0.0, %v2072
      %2074 = vmatmul.f32.gmra.mxu0 %v1963
      %v2075 = vpop.f32.mrf.mxu0
      %v2076 = vadd.f32 0.0, %v2075
      %2077 = vmatmul.f32.gmra.mxu0 %v1966
      %v2078 = vpop.f32.mrf.mxu0
      %v2079 = vadd.f32 0.0, %v2078
      %2080 = vmatmul.f32.gmra.mxu0 %v1969
      %v2081 = vpop.f32.mrf.mxu0
      %v2082 = vadd.f32 0.0, %v2081
      %2083 = vmatmul.f32.gmra.mxu0 %v1972
      %v2084 = vpop.f32.mrf.mxu0
      %v2085 = vadd.f32 0.0, %v2084
      %2086 = vmatmul.f32.gmra.mxu0 %v1975
      %v2087 = vpop.f32.mrf.mxu0
      %v2088 = vadd.f32 0.0, %v2087
      %2089 = vmatmul.f32.gmra.mxu0 %v1978
      %v2090 = vpop.f32.mrf.mxu0
      %v2091 = vadd.f32 0.0, %v2090
      %2092 = vmatmul.f32.gmra.mxu0 %v1981
      %v2093 = vpop.f32.mrf.mxu0
      %v2094 = vadd.f32 0.0, %v2093
      %2095 = vmatmul.f32.gmra.mxu0 %v1984
      %v2096 = vpop.f32.mrf.mxu0
      %v2097 = vadd.f32 0.0, %v2096
      %2098 = vmatmul.f32.gmra.mxu0 %v1987
      %v2099 = vpop.f32.mrf.mxu0
      %v2100 = vadd.f32 0.0, %v2099
      %2101 = vmatmul.f32.gmra.mxu0 %v1990
      %v2102 = vpop.f32.mrf.mxu0
      %v2103 = vadd.f32 0.0, %v2102
      %2104 = vmatmul.f32.gmra.mxu0 %v1993
      %v2105 = vpop.f32.mrf.mxu0
      %v2106 = vadd.f32 0.0, %v2105
      %2107 = vmatmul.f32.gmra.mxu0 %v1996
      %v2108 = vpop.f32.mrf.mxu0
      %v2109 = vadd.f32 0.0, %v2108
      %2110 = vmatmul.f32.gmra.mxu0 %v1999
      %v2111 = vpop.f32.mrf.mxu0
      %v2112 = vadd.f32 0.0, %v2111
      %2113 = vmatmul.f32.gmra.mxu0 %v2002
      %v2114 = vpop.f32.mrf.mxu0
      %v2115 = vadd.f32 0.0, %v2114
      %2116 = vmatmul.f32.gmra.mxu0 %v2005
      %v2117 = vpop.f32.mrf.mxu0
      %v2118 = vadd.f32 0.0, %v2117
      %2119 = vmatmul.f32.gmra.mxu0 %v2008
      %v2120 = vpop.f32.mrf.mxu0
      %v2121 = vadd.f32 0.0, %v2120
      %2122 = vmatmul.f32.gmra.mxu0 %v2011
      %v2123 = vpop.f32.mrf.mxu0
      %v2124 = vadd.f32 0.0, %v2123
      %2125 = vmatmul.f32.gmra.mxu0 %v2014
      %v2126 = vpop.f32.mrf.mxu0
      %v2127 = vadd.f32 0.0, %v2126
      %2128 = vmatmul.f32.gmra.mxu0 %v2017
      %v2129 = vpop.f32.mrf.mxu0
      %v2130 = vadd.f32 0.0, %v2129
      %2131 = vmatmul.f32.gmra.mxu0 %v2020
      %v2132 = vpop.f32.mrf.mxu0
      %v2133 = vadd.f32 0.0, %v2132
      %2134 = vmatmul.f32.gmra.mxu0 %v2023
      %v2135 = vpop.f32.mrf.mxu0
      %v2136 = vadd.f32 0.0, %v2135
      %2137 = vmatmul.f32.gmra.mxu0 %v2026
      %v2138 = vpop.f32.mrf.mxu0
      %v2139 = vadd.f32 0.0, %v2138
      %2140 = vmatmul.f32.gmra.mxu0 %v2029
      %v2141 = vpop.f32.mrf.mxu0
      %v2142 = vadd.f32 0.0, %v2141
      %2143 = vmatmul.f32.gmra.mxu0 %v2032
      %v2144 = vpop.f32.mrf.mxu0
      %v2145 = vadd.f32 0.0, %v2144
      %2146 = vmatmul.f32.gmra.mxu0 %v2035
      %v2147 = vpop.f32.mrf.mxu0
      %v2148 = vadd.f32 0.0, %v2147
      %2149 = vmatmul.f32.gmra.mxu0 %v2038
      %v2150 = vpop.f32.mrf.mxu0
      %v2151 = vadd.f32 0.0, %v2150
      %2152 = vdwg.mxu0
      %2153 = vst.msk [vmem:[%s259 + $0x1] sm:$0xff] %vm171, %v2058
      %2154 = vst.msk [vmem:[%s259 + $0x9] sm:$0xff] %vm171, %v2061
      %2155 = vst.msk [vmem:[%s259 + $0x19] sm:$0xff] %vm171, %v2064
      %2156 = vst.msk [vmem:[%s259 + $0x21] sm:$0xff] %vm171, %v2067
      %2157 = vst.msk [vmem:[%s259 + $0x31] sm:$0xff] %vm171, %v2070
      %2158 = vst.msk [vmem:[%s259 + $0x39] sm:$0xff] %vm171, %v2073
      %2159 = vst.msk [vmem:[%s259 + $0x49] sm:$0xff] %vm171, %v2076
      %2160 = vst.msk [vmem:[%s259 + $0x51] sm:$0xff] %vm171, %v2079
      %2161 = vst.msk [vmem:[%s259 + $0x61] sm:$0xff] %vm171, %v2082
      %2162 = vst.msk [vmem:[%s259 + $0x69] sm:$0xff] %vm171, %v2085
      %2163 = vst.msk [vmem:[%s259 + $0x79] sm:$0xff] %vm171, %v2088
      %2164 = vst.msk [vmem:[%s259 + $0x81] sm:$0xff] %vm171, %v2091
      %2165 = vst.msk [vmem:[%s259 + $0x91] sm:$0xff] %vm171, %v2094
      %2166 = vst.msk [vmem:[%s259 + $0x99] sm:$0xff] %vm171, %v2097
      %2167 = vst.msk [vmem:[%s259 + $0xa9] sm:$0xff] %vm171, %v2100
      %2168 = vst.msk [vmem:[%s259 + $0xb1] sm:$0xff] %vm171, %v2103
      %2169 = vst.msk [vmem:[%s259 + $0xc1] sm:$0xff] %vm171, %v2106
      %2170 = vst.msk [vmem:[%s259 + $0xc9] sm:$0xff] %vm171, %v2109
      %2171 = vst.msk [vmem:[%s259 + $0xd9] sm:$0xff] %vm171, %v2112
      %2172 = vst.msk [vmem:[%s259 + $0xe1] sm:$0xff] %vm171, %v2115
      %2173 = vst.msk [vmem:[%s259 + $0xf1] sm:$0xff] %vm171, %v2118
      %2174 = vst.msk [vmem:[%s259 + $0xf9] sm:$0xff] %vm171, %v2121
      %2175 = vst.msk [vmem:[%s259 + $0x109] sm:$0xff] %vm171, %v2124
      %2176 = vst.msk [vmem:[%s259 + $0x111] sm:$0xff] %vm171, %v2127
      %2177 = vst.msk [vmem:[%s259 + $0x121] sm:$0xff] %vm171, %v2130
      %2178 = vst.msk [vmem:[%s259 + $0x129] sm:$0xff] %vm171, %v2133
      %2179 = vst.msk [vmem:[%s259 + $0x139] sm:$0xff] %vm171, %v2136
      %2180 = vst.msk [vmem:[%s259 + $0x141] sm:$0xff] %vm171, %v2139
      %2181 = vst.msk [vmem:[%s259 + $0x151] sm:$0xff] %vm171, %v2142
      %2182 = vst.msk [vmem:[%s259 + $0x159] sm:$0xff] %vm171, %v2145
      %2183 = vst.msk [vmem:[%s259 + $0x169] sm:$0xff] %vm171, %v2148
      %2184 = vst.msk [vmem:[%s259 + $0x171] sm:$0xff] %vm171, %v2151
      %v2185 = vld [vmem:[#allocation2] sm:$0xff]
      %v2186 = vld [vmem:[#allocation2 + $0x8] sm:$0xff]
      %v2187 = vld [vmem:[#allocation2 + $0x18] sm:$0xff]
      %v2188 = vld [vmem:[#allocation2 + $0x20] sm:$0xff]
      %v2189 = vld [vmem:[#allocation2 + $0x30] sm:$0xff]
      %v2190 = vld [vmem:[#allocation2 + $0x38] sm:$0xff]
      %v2191 = vld [vmem:[#allocation2 + $0x48] sm:$0xff]
      %v2192 = vld [vmem:[#allocation2 + $0x50] sm:$0xff]
      %v2193 = vld [vmem:[#allocation2 + $0x60] sm:$0xff]
      %v2194 = vld [vmem:[#allocation2 + $0x68] sm:$0xff]
      %v2195 = vld [vmem:[#allocation2 + $0x78] sm:$0xff]
      %v2196 = vld [vmem:[#allocation2 + $0x80] sm:$0xff]
      %v2197 = vld [vmem:[#allocation2 + $0x90] sm:$0xff]
      %v2198 = vld [vmem:[#allocation2 + $0x98] sm:$0xff]
      %v2199 = vld [vmem:[#allocation2 + $0xa8] sm:$0xff]
      %v2200 = vld [vmem:[#allocation2 + $0xb0] sm:$0xff]
      %v2201 = vld [vmem:[#allocation2 + $0xc0] sm:$0xff]
      %v2202 = vld [vmem:[#allocation2 + $0xc8] sm:$0xff]
      %v2203 = vld [vmem:[#allocation2 + $0xd8] sm:$0xff]
      %v2204 = vld [vmem:[#allocation2 + $0xe0] sm:$0xff]
      %v2205 = vld [vmem:[#allocation2 + $0xf0] sm:$0xff]
      %v2206 = vld [vmem:[#allocation2 + $0xf8] sm:$0xff]
      %v2207 = vld [vmem:[#allocation2 + $0x108] sm:$0xff]
      %v2208 = vld [vmem:[#allocation2 + $0x110] sm:$0xff]
      %v2209 = vld [vmem:[#allocation2 + $0x120] sm:$0xff]
      %v2210 = vld [vmem:[#allocation2 + $0x128] sm:$0xff]
      %v2211 = vld [vmem:[#allocation2 + $0x138] sm:$0xff]
      %v2212 = vld [vmem:[#allocation2 + $0x140] sm:$0xff]
      %v2213 = vld [vmem:[#allocation2 + $0x150] sm:$0xff]
      %v2214 = vld [vmem:[#allocation2 + $0x158] sm:$0xff]
      %v2215 = vld [vmem:[#allocation2 + $0x168] sm:$0xff]
      %v2216 = vld [vmem:[#allocation2 + $0x170] sm:$0xff]
      %2217 = vst.msk [vmem:[#allocation3] sm:$0xff] %vm171, %v2185
      %2218 = vst.msk [vmem:[#allocation3 + $0x8] sm:$0xff] %vm171, %v2186
      %2219 = vst.msk [vmem:[#allocation3 + $0x10] sm:$0xff] %vm171, %v2187
      %2220 = vst.msk [vmem:[#allocation3 + $0x18] sm:$0xff] %vm171, %v2188
      %2221 = vst.msk [vmem:[#allocation3 + $0x20] sm:$0xff] %vm171, %v2189
      %2222 = vst.msk [vmem:[#allocation3 + $0x28] sm:$0xff] %vm171, %v2190
      %2223 = vst.msk [vmem:[#allocation3 + $0x30] sm:$0xff] %vm171, %v2191
      %2224 = vst.msk [vmem:[#allocation3 + $0x38] sm:$0xff] %vm171, %v2192
      %2225 = vst.msk [vmem:[#allocation3 + $0x40] sm:$0xff] %vm171, %v2193
      %2226 = vst.msk [vmem:[#allocation3 + $0x48] sm:$0xff] %vm171, %v2194
      %2227 = vst.msk [vmem:[#allocation3 + $0x50] sm:$0xff] %vm171, %v2195
      %2228 = vst.msk [vmem:[#allocation3 + $0x58] sm:$0xff] %vm171, %v2196
      %2229 = vst.msk [vmem:[#allocation3 + $0x60] sm:$0xff] %vm171, %v2197
      %2230 = vst.msk [vmem:[#allocation3 + $0x68] sm:$0xff] %vm171, %v2198
      %2231 = vst.msk [vmem:[#allocation3 + $0x70] sm:$0xff] %vm171, %v2199
      %2232 = vst.msk [vmem:[#allocation3 + $0x78] sm:$0xff] %vm171, %v2200
      %2233 = vst.msk [vmem:[#allocation3 + $0x80] sm:$0xff] %vm171, %v2201
      %2234 = vst.msk [vmem:[#allocation3 + $0x88] sm:$0xff] %vm171, %v2202
      %2235 = vst.msk [vmem:[#allocation3 + $0x90] sm:$0xff] %vm171, %v2203
      %2236 = vst.msk [vmem:[#allocation3 + $0x98] sm:$0xff] %vm171, %v2204
      %2237 = vst.msk [vmem:[#allocation3 + $0xa0] sm:$0xff] %vm171, %v2205
      %2238 = vst.msk [vmem:[#allocation3 + $0xa8] sm:$0xff] %vm171, %v2206
      %2239 = vst.msk [vmem:[#allocation3 + $0xb0] sm:$0xff] %vm171, %v2207
      %2240 = vst.msk [vmem:[#allocation3 + $0xb8] sm:$0xff] %vm171, %v2208
      %2241 = vst.msk [vmem:[#allocation3 + $0xc0] sm:$0xff] %vm171, %v2209
      %2242 = vst.msk [vmem:[#allocation3 + $0xc8] sm:$0xff] %vm171, %v2210
      %2243 = vst.msk [vmem:[#allocation3 + $0xd0] sm:$0xff] %vm171, %v2211
      %2244 = vst.msk [vmem:[#allocation3 + $0xd8] sm:$0xff] %vm171, %v2212
      %2245 = vst.msk [vmem:[#allocation3 + $0xe0] sm:$0xff] %vm171, %v2213
      %2246 = vst.msk [vmem:[#allocation3 + $0xe8] sm:$0xff] %vm171, %v2214
      %2247 = vst.msk [vmem:[#allocation3 + $0xf0] sm:$0xff] %vm171, %v2215
      %2248 = vst.msk [vmem:[#allocation3 + $0xf8] sm:$0xff] %vm171, %v2216
      %v2249 = vld [vmem:[#allocation2 + $0x1] sm:$0xff]
      %v2250 = vld [vmem:[#allocation2 + $0x9] sm:$0xff]
      %v2251 = vld [vmem:[#allocation2 + $0x19] sm:$0xff]
      %v2252 = vld [vmem:[#allocation2 + $0x21] sm:$0xff]
      %v2253 = vld [vmem:[#allocation2 + $0x31] sm:$0xff]
      %v2254 = vld [vmem:[#allocation2 + $0x39] sm:$0xff]
      %v2255 = vld [vmem:[#allocation2 + $0x49] sm:$0xff]
      %v2256 = vld [vmem:[#allocation2 + $0x51] sm:$0xff]
      %v2257 = vld [vmem:[#allocation2 + $0x61] sm:$0xff]
      %v2258 = vld [vmem:[#allocation2 + $0x69] sm:$0xff]
      %v2259 = vld [vmem:[#allocation2 + $0x79] sm:$0xff]
      %v2260 = vld [vmem:[#allocation2 + $0x81] sm:$0xff]
      %v2261 = vld [vmem:[#allocation2 + $0x91] sm:$0xff]
      %v2262 = vld [vmem:[#allocation2 + $0x99] sm:$0xff]
      %v2263 = vld [vmem:[#allocation2 + $0xa9] sm:$0xff]
      %v2264 = vld [vmem:[#allocation2 + $0xb1] sm:$0xff]
      %v2265 = vld [vmem:[#allocation2 + $0xc1] sm:$0xff]
      %v2266 = vld [vmem:[#allocation2 + $0xc9] sm:$0xff]
      %v2267 = vld [vmem:[#allocation2 + $0xd9] sm:$0xff]
      %v2268 = vld [vmem:[#allocation2 + $0xe1] sm:$0xff]
      %v2269 = vld [vmem:[#allocation2 + $0xf1] sm:$0xff]
      %v2270 = vld [vmem:[#allocation2 + $0xf9] sm:$0xff]
      %v2271 = vld [vmem:[#allocation2 + $0x109] sm:$0xff]
      %v2272 = vld [vmem:[#allocation2 + $0x111] sm:$0xff]
      %v2273 = vld [vmem:[#allocation2 + $0x121] sm:$0xff]
      %v2274 = vld [vmem:[#allocation2 + $0x129] sm:$0xff]
      %v2275 = vld [vmem:[#allocation2 + $0x139] sm:$0xff]
      %v2276 = vld [vmem:[#allocation2 + $0x141] sm:$0xff]
      %v2277 = vld [vmem:[#allocation2 + $0x151] sm:$0xff]
      %v2278 = vld [vmem:[#allocation2 + $0x159] sm:$0xff]
      %v2279 = vld [vmem:[#allocation2 + $0x169] sm:$0xff]
      %v2280 = vld [vmem:[#allocation2 + $0x171] sm:$0xff]
      %2313 = vrot.lane.b32.xlu0 %v2249, 8
      %v2314 = vpop.permute.xlu0 %2313
      %2315 = vrot.lane.b32.xlu0 %v2250, 8
      %v2316 = vpop.permute.xlu0 %2315
      %2317 = vrot.lane.b32.xlu0 %v2251, 8
      %v2318 = vpop.permute.xlu0 %2317
      %2319 = vrot.lane.b32.xlu0 %v2252, 8
      %v2320 = vpop.permute.xlu0 %2319
      %2321 = vrot.lane.b32.xlu0 %v2253, 8
      %v2322 = vpop.permute.xlu0 %2321
      %2323 = vrot.lane.b32.xlu0 %v2254, 8
      %v2324 = vpop.permute.xlu0 %2323
      %2325 = vrot.lane.b32.xlu0 %v2255, 8
      %v2326 = vpop.permute.xlu0 %2325
      %2327 = vrot.lane.b32.xlu0 %v2256, 8
      %v2328 = vpop.permute.xlu0 %2327
      %2329 = vrot.lane.b32.xlu0 %v2257, 8
      %v2330 = vpop.permute.xlu0 %2329
      %2331 = vrot.lane.b32.xlu0 %v2258, 8
      %v2332 = vpop.permute.xlu0 %2331
      %2333 = vrot.lane.b32.xlu0 %v2259, 8
      %v2334 = vpop.permute.xlu0 %2333
      %2335 = vrot.lane.b32.xlu0 %v2260, 8
      %v2336 = vpop.permute.xlu0 %2335
      %2337 = vrot.lane.b32.xlu0 %v2261, 8
      %v2338 = vpop.permute.xlu0 %2337
      %2339 = vrot.lane.b32.xlu0 %v2262, 8
      %v2340 = vpop.permute.xlu0 %2339
      %2341 = vrot.lane.b32.xlu0 %v2263, 8
      %v2342 = vpop.permute.xlu0 %2341
      %2343 = vrot.lane.b32.xlu0 %v2264, 8
      %v2344 = vpop.permute.xlu0 %2343
      %2345 = vrot.lane.b32.xlu0 %v2265, 8
      %v2346 = vpop.permute.xlu0 %2345
      %2347 = vrot.lane.b32.xlu0 %v2266, 8
      %v2348 = vpop.permute.xlu0 %2347
      %2349 = vrot.lane.b32.xlu0 %v2267, 8
      %v2350 = vpop.permute.xlu0 %2349
      %2351 = vrot.lane.b32.xlu0 %v2268, 8
      %v2352 = vpop.permute.xlu0 %2351
      %2353 = vrot.lane.b32.xlu0 %v2269, 8
      %v2354 = vpop.permute.xlu0 %2353
      %2355 = vrot.lane.b32.xlu0 %v2270, 8
      %v2356 = vpop.permute.xlu0 %2355
      %2357 = vrot.lane.b32.xlu0 %v2271, 8
      %v2358 = vpop.permute.xlu0 %2357
      %2359 = vrot.lane.b32.xlu0 %v2272, 8
      %v2360 = vpop.permute.xlu0 %2359
      %2361 = vrot.lane.b32.xlu0 %v2273, 8
      %v2362 = vpop.permute.xlu0 %2361
      %2363 = vrot.lane.b32.xlu0 %v2274, 8
      %v2364 = vpop.permute.xlu0 %2363
      %2365 = vrot.lane.b32.xlu0 %v2275, 8
      %v2366 = vpop.permute.xlu0 %2365
      %2367 = vrot.lane.b32.xlu0 %v2276, 8
      %v2368 = vpop.permute.xlu0 %2367
      %2369 = vrot.lane.b32.xlu0 %v2277, 8
      %v2370 = vpop.permute.xlu0 %2369
      %2371 = vrot.lane.b32.xlu0 %v2278, 8
      %v2372 = vpop.permute.xlu0 %2371
      %2373 = vrot.lane.b32.xlu0 %v2279, 8
      %v2374 = vpop.permute.xlu0 %2373
      %2375 = vrot.lane.b32.xlu0 %v2280, 8
      %v2376 = vpop.permute.xlu0 %2375
      %2409 = vst.msk [vmem:[#allocation3] sm:$0xff] %vm517, %v2314
      %2410 = vst.msk [vmem:[#allocation3 + $0x8] sm:$0xff] %vm517, %v2316
      %2411 = vst.msk [vmem:[#allocation3 + $0x10] sm:$0xff] %vm517, %v2318
      %2412 = vst.msk [vmem:[#allocation3 + $0x18] sm:$0xff] %vm517, %v2320
      %2413 = vst.msk [vmem:[#allocation3 + $0x20] sm:$0xff] %vm517, %v2322
      %2414 = vst.msk [vmem:[#allocation3 + $0x28] sm:$0xff] %vm517, %v2324
      %2415 = vst.msk [vmem:[#allocation3 + $0x30] sm:$0xff] %vm517, %v2326
      %2416 = vst.msk [vmem:[#allocation3 + $0x38] sm:$0xff] %vm517, %v2328
      %2417 = vst.msk [vmem:[#allocation3 + $0x40] sm:$0xff] %vm517, %v2330
      %2418 = vst.msk [vmem:[#allocation3 + $0x48] sm:$0xff] %vm517, %v2332
      %2419 = vst.msk [vmem:[#allocation3 + $0x50] sm:$0xff] %vm517, %v2334
      %2420 = vst.msk [vmem:[#allocation3 + $0x58] sm:$0xff] %vm517, %v2336
      %2421 = vst.msk [vmem:[#allocation3 + $0x60] sm:$0xff] %vm517, %v2338
      %2422 = vst.msk [vmem:[#allocation3 + $0x68] sm:$0xff] %vm517, %v2340
      %2423 = vst.msk [vmem:[#allocation3 + $0x70] sm:$0xff] %vm517, %v2342
      %2424 = vst.msk [vmem:[#allocation3 + $0x78] sm:$0xff] %vm517, %v2344
      %2425 = vst.msk [vmem:[#allocation3 + $0x80] sm:$0xff] %vm517, %v2346
      %2426 = vst.msk [vmem:[#allocation3 + $0x88] sm:$0xff] %vm517, %v2348
      %2427 = vst.msk [vmem:[#allocation3 + $0x90] sm:$0xff] %vm517, %v2350
      %2428 = vst.msk [vmem:[#allocation3 + $0x98] sm:$0xff] %vm517, %v2352
      %2429 = vst.msk [vmem:[#allocation3 + $0xa0] sm:$0xff] %vm517, %v2354
      %2430 = vst.msk [vmem:[#allocation3 + $0xa8] sm:$0xff] %vm517, %v2356
      %2431 = vst.msk [vmem:[#allocation3 + $0xb0] sm:$0xff] %vm517, %v2358
      %2432 = vst.msk [vmem:[#allocation3 + $0xb8] sm:$0xff] %vm517, %v2360
      %2433 = vst.msk [vmem:[#allocation3 + $0xc0] sm:$0xff] %vm517, %v2362
      %2434 = vst.msk [vmem:[#allocation3 + $0xc8] sm:$0xff] %vm517, %v2364
      %2435 = vst.msk [vmem:[#allocation3 + $0xd0] sm:$0xff] %vm517, %v2366
      %2436 = vst.msk [vmem:[#allocation3 + $0xd8] sm:$0xff] %vm517, %v2368
      %2437 = vst.msk [vmem:[#allocation3 + $0xe0] sm:$0xff] %vm517, %v2370
      %2438 = vst.msk [vmem:[#allocation3 + $0xe8] sm:$0xff] %vm517, %v2372
      %2439 = vst.msk [vmem:[#allocation3 + $0xf0] sm:$0xff] %vm517, %v2374
      %2440 = vst.msk [vmem:[#allocation3 + $0xf8] sm:$0xff] %vm517, %v2376
      %v2441 = vld [vmem:[#allocation2 + $0x2] sm:$0xff]
      %v2442 = vld [vmem:[#allocation2 + $0xa] sm:$0xff]
      %v2443 = vld [vmem:[#allocation2 + $0x1a] sm:$0xff]
      %v2444 = vld [vmem:[#allocation2 + $0x22] sm:$0xff]
      %v2445 = vld [vmem:[#allocation2 + $0x32] sm:$0xff]
      %v2446 = vld [vmem:[#allocation2 + $0x3a] sm:$0xff]
      %v2447 = vld [vmem:[#allocation2 + $0x4a] sm:$0xff]
      %v2448 = vld [vmem:[#allocation2 + $0x52] sm:$0xff]
      %v2449 = vld [vmem:[#allocation2 + $0x62] sm:$0xff]
      %v2450 = vld [vmem:[#allocation2 + $0x6a] sm:$0xff]
      %v2451 = vld [vmem:[#allocation2 + $0x7a] sm:$0xff]
      %v2452 = vld [vmem:[#allocation2 + $0x82] sm:$0xff]
      %v2453 = vld [vmem:[#allocation2 + $0x92] sm:$0xff]
      %v2454 = vld [vmem:[#allocation2 + $0x9a] sm:$0xff]
      %v2455 = vld [vmem:[#allocation2 + $0xaa] sm:$0xff]
      %v2456 = vld [vmem:[#allocation2 + $0xb2] sm:$0xff]
      %v2457 = vld [vmem:[#allocation2 + $0xc2] sm:$0xff]
      %v2458 = vld [vmem:[#allocation2 + $0xca] sm:$0xff]
      %v2459 = vld [vmem:[#allocation2 + $0xda] sm:$0xff]
      %v2460 = vld [vmem:[#allocation2 + $0xe2] sm:$0xff]
      %v2461 = vld [vmem:[#allocation2 + $0xf2] sm:$0xff]
      %v2462 = vld [vmem:[#allocation2 + $0xfa] sm:$0xff]
      %v2463 = vld [vmem:[#allocation2 + $0x10a] sm:$0xff]
      %v2464 = vld [vmem:[#allocation2 + $0x112] sm:$0xff]
      %v2465 = vld [vmem:[#allocation2 + $0x122] sm:$0xff]
      %v2466 = vld [vmem:[#allocation2 + $0x12a] sm:$0xff]
      %v2467 = vld [vmem:[#allocation2 + $0x13a] sm:$0xff]
      %v2468 = vld [vmem:[#allocation2 + $0x142] sm:$0xff]
      %v2469 = vld [vmem:[#allocation2 + $0x152] sm:$0xff]
      %v2470 = vld [vmem:[#allocation2 + $0x15a] sm:$0xff]
      %v2471 = vld [vmem:[#allocation2 + $0x16a] sm:$0xff]
      %v2472 = vld [vmem:[#allocation2 + $0x172] sm:$0xff]
      %2505 = vrot.lane.b32.xlu0 %v2441, 16
      %v2506 = vpop.permute.xlu0 %2505
      %2507 = vrot.lane.b32.xlu0 %v2442, 16
      %v2508 = vpop.permute.xlu0 %2507
      %2509 = vrot.lane.b32.xlu0 %v2443, 16
      %v2510 = vpop.permute.xlu0 %2509
      %2511 = vrot.lane.b32.xlu0 %v2444, 16
      %v2512 = vpop.permute.xlu0 %2511
      %2513 = vrot.lane.b32.xlu0 %v2445, 16
      %v2514 = vpop.permute.xlu0 %2513
      %2515 = vrot.lane.b32.xlu0 %v2446, 16
      %v2516 = vpop.permute.xlu0 %2515
      %2517 = vrot.lane.b32.xlu0 %v2447, 16
      %v2518 = vpop.permute.xlu0 %2517
      %2519 = vrot.lane.b32.xlu0 %v2448, 16
      %v2520 = vpop.permute.xlu0 %2519
      %2521 = vrot.lane.b32.xlu0 %v2449, 16
      %v2522 = vpop.permute.xlu0 %2521
      %2523 = vrot.lane.b32.xlu0 %v2450, 16
      %v2524 = vpop.permute.xlu0 %2523
      %2525 = vrot.lane.b32.xlu0 %v2451, 16
      %v2526 = vpop.permute.xlu0 %2525
      %2527 = vrot.lane.b32.xlu0 %v2452, 16
      %v2528 = vpop.permute.xlu0 %2527
      %2529 = vrot.lane.b32.xlu0 %v2453, 16
      %v2530 = vpop.permute.xlu0 %2529
      %2531 = vrot.lane.b32.xlu0 %v2454, 16
      %v2532 = vpop.permute.xlu0 %2531
      %2533 = vrot.lane.b32.xlu0 %v2455, 16
      %v2534 = vpop.permute.xlu0 %2533
      %2535 = vrot.lane.b32.xlu0 %v2456, 16
      %v2536 = vpop.permute.xlu0 %2535
      %2537 = vrot.lane.b32.xlu0 %v2457, 16
      %v2538 = vpop.permute.xlu0 %2537
      %2539 = vrot.lane.b32.xlu0 %v2458, 16
      %v2540 = vpop.permute.xlu0 %2539
      %2541 = vrot.lane.b32.xlu0 %v2459, 16
      %v2542 = vpop.permute.xlu0 %2541
      %2543 = vrot.lane.b32.xlu0 %v2460, 16
      %v2544 = vpop.permute.xlu0 %2543
      %2545 = vrot.lane.b32.xlu0 %v2461, 16
      %v2546 = vpop.permute.xlu0 %2545
      %2547 = vrot.lane.b32.xlu0 %v2462, 16
      %v2548 = vpop.permute.xlu0 %2547
      %2549 = vrot.lane.b32.xlu0 %v2463, 16
      %v2550 = vpop.permute.xlu0 %2549
      %2551 = vrot.lane.b32.xlu0 %v2464, 16
      %v2552 = vpop.permute.xlu0 %2551
      %2553 = vrot.lane.b32.xlu0 %v2465, 16
      %v2554 = vpop.permute.xlu0 %2553
      %2555 = vrot.lane.b32.xlu0 %v2466, 16
      %v2556 = vpop.permute.xlu0 %2555
      %2557 = vrot.lane.b32.xlu0 %v2467, 16
      %v2558 = vpop.permute.xlu0 %2557
      %2559 = vrot.lane.b32.xlu0 %v2468, 16
      %v2560 = vpop.permute.xlu0 %2559
      %2561 = vrot.lane.b32.xlu0 %v2469, 16
      %v2562 = vpop.permute.xlu0 %2561
      %2563 = vrot.lane.b32.xlu0 %v2470, 16
      %v2564 = vpop.permute.xlu0 %2563
      %2565 = vrot.lane.b32.xlu0 %v2471, 16
      %v2566 = vpop.permute.xlu0 %2565
      %2567 = vrot.lane.b32.xlu0 %v2472, 16
      %v2568 = vpop.permute.xlu0 %2567
      %2601 = vst.msk [vmem:[#allocation3] sm:$0xff] %vm710, %v2506
      %2602 = vst.msk [vmem:[#allocation3 + $0x8] sm:$0xff] %vm710, %v2508
      %2603 = vst.msk [vmem:[#allocation3 + $0x10] sm:$0xff] %vm710, %v2510
      %2604 = vst.msk [vmem:[#allocation3 + $0x18] sm:$0xff] %vm710, %v2512
      %2605 = vst.msk [vmem:[#allocation3 + $0x20] sm:$0xff] %vm710, %v2514
      %2606 = vst.msk [vmem:[#allocation3 + $0x28] sm:$0xff] %vm710, %v2516
      %2607 = vst.msk [vmem:[#allocation3 + $0x30] sm:$0xff] %vm710, %v2518
      %2608 = vst.msk [vmem:[#allocation3 + $0x38] sm:$0xff] %vm710, %v2520
      %2609 = vst.msk [vmem:[#allocation3 + $0x40] sm:$0xff] %vm710, %v2522
      %2610 = vst.msk [vmem:[#allocation3 + $0x48] sm:$0xff] %vm710, %v2524
      %2611 = vst.msk [vmem:[#allocation3 + $0x50] sm:$0xff] %vm710, %v2526
      %2612 = vst.msk [vmem:[#allocation3 + $0x58] sm:$0xff] %vm710, %v2528
      %2613 = vst.msk [vmem:[#allocation3 + $0x60] sm:$0xff] %vm710, %v2530
      %2614 = vst.msk [vmem:[#allocation3 + $0x68] sm:$0xff] %vm710, %v2532
      %2615 = vst.msk [vmem:[#allocation3 + $0x70] sm:$0xff] %vm710, %v2534
      %2616 = vst.msk [vmem:[#allocation3 + $0x78] sm:$0xff] %vm710, %v2536
      %2617 = vst.msk [vmem:[#allocation3 + $0x80] sm:$0xff] %vm710, %v2538
      %2618 = vst.msk [vmem:[#allocation3 + $0x88] sm:$0xff] %vm710, %v2540
      %2619 = vst.msk [vmem:[#allocation3 + $0x90] sm:$0xff] %vm710, %v2542
      %2620 = vst.msk [vmem:[#allocation3 + $0x98] sm:$0xff] %vm710, %v2544
      %2621 = vst.msk [vmem:[#allocation3 + $0xa0] sm:$0xff] %vm710, %v2546
      %2622 = vst.msk [vmem:[#allocation3 + $0xa8] sm:$0xff] %vm710, %v2548
      %2623 = vst.msk [vmem:[#allocation3 + $0xb0] sm:$0xff] %vm710, %v2550
      %2624 = vst.msk [vmem:[#allocation3 + $0xb8] sm:$0xff] %vm710, %v2552
      %2625 = vst.msk [vmem:[#allocation3 + $0xc0] sm:$0xff] %vm710, %v2554
      %2626 = vst.msk [vmem:[#allocation3 + $0xc8] sm:$0xff] %vm710, %v2556
      %2627 = vst.msk [vmem:[#allocation3 + $0xd0] sm:$0xff] %vm710, %v2558
      %2628 = vst.msk [vmem:[#allocation3 + $0xd8] sm:$0xff] %vm710, %v2560
      %2629 = vst.msk [vmem:[#allocation3 + $0xe0] sm:$0xff] %vm710, %v2562
      %2630 = vst.msk [vmem:[#allocation3 + $0xe8] sm:$0xff] %vm710, %v2564
      %2631 = vst.msk [vmem:[#allocation3 + $0xf0] sm:$0xff] %vm710, %v2566
      %2632 = vst.msk [vmem:[#allocation3 + $0xf8] sm:$0xff] %vm710, %v2568
      %v2633 = vld [vmem:[%s259] sm:$0xff]
      %v2634 = vld [vmem:[%s259 + $0x8] sm:$0xff]
      %v2635 = vld [vmem:[%s259 + $0x18] sm:$0xff]
      %v2636 = vld [vmem:[%s259 + $0x20] sm:$0xff]
      %v2637 = vld [vmem:[%s259 + $0x30] sm:$0xff]
      %v2638 = vld [vmem:[%s259 + $0x38] sm:$0xff]
      %v2639 = vld [vmem:[%s259 + $0x48] sm:$0xff]
      %v2640 = vld [vmem:[%s259 + $0x50] sm:$0xff]
      %v2641 = vld [vmem:[%s259 + $0x60] sm:$0xff]
      %v2642 = vld [vmem:[%s259 + $0x68] sm:$0xff]
      %v2643 = vld [vmem:[%s259 + $0x78] sm:$0xff]
      %v2644 = vld [vmem:[%s259 + $0x80] sm:$0xff]
      %v2645 = vld [vmem:[%s259 + $0x90] sm:$0xff]
      %v2646 = vld [vmem:[%s259 + $0x98] sm:$0xff]
      %v2647 = vld [vmem:[%s259 + $0xa8] sm:$0xff]
      %v2648 = vld [vmem:[%s259 + $0xb0] sm:$0xff]
      %v2649 = vld [vmem:[%s259 + $0xc0] sm:$0xff]
      %v2650 = vld [vmem:[%s259 + $0xc8] sm:$0xff]
      %v2651 = vld [vmem:[%s259 + $0xd8] sm:$0xff]
      %v2652 = vld [vmem:[%s259 + $0xe0] sm:$0xff]
      %v2653 = vld [vmem:[%s259 + $0xf0] sm:$0xff]
      %v2654 = vld [vmem:[%s259 + $0xf8] sm:$0xff]
      %v2655 = vld [vmem:[%s259 + $0x108] sm:$0xff]
      %v2656 = vld [vmem:[%s259 + $0x110] sm:$0xff]
      %v2657 = vld [vmem:[%s259 + $0x120] sm:$0xff]
      %v2658 = vld [vmem:[%s259 + $0x128] sm:$0xff]
      %v2659 = vld [vmem:[%s259 + $0x138] sm:$0xff]
      %v2660 = vld [vmem:[%s259 + $0x140] sm:$0xff]
      %v2661 = vld [vmem:[%s259 + $0x150] sm:$0xff]
      %v2662 = vld [vmem:[%s259 + $0x158] sm:$0xff]
      %v2663 = vld [vmem:[%s259 + $0x168] sm:$0xff]
      %v2664 = vld [vmem:[%s259 + $0x170] sm:$0xff]
      %2697 = vrot.lane.b32.xlu0 %v2633, 24
      %v2698 = vpop.permute.xlu0 %2697
      %2699 = vrot.lane.b32.xlu0 %v2634, 24
      %v2700 = vpop.permute.xlu0 %2699
      %2701 = vrot.lane.b32.xlu0 %v2635, 24
      %v2702 = vpop.permute.xlu0 %2701
      %2703 = vrot.lane.b32.xlu0 %v2636, 24
      %v2704 = vpop.permute.xlu0 %2703
      %2705 = vrot.lane.b32.xlu0 %v2637, 24
      %v2706 = vpop.permute.xlu0 %2705
      %2707 = vrot.lane.b32.xlu0 %v2638, 24
      %v2708 = vpop.permute.xlu0 %2707
      %2709 = vrot.lane.b32.xlu0 %v2639, 24
      %v2710 = vpop.permute.xlu0 %2709
      %2711 = vrot.lane.b32.xlu0 %v2640, 24
      %v2712 = vpop.permute.xlu0 %2711
      %2713 = vrot.lane.b32.xlu0 %v2641, 24
      %v2714 = vpop.permute.xlu0 %2713
      %2715 = vrot.lane.b32.xlu0 %v2642, 24
      %v2716 = vpop.permute.xlu0 %2715
      %2717 = vrot.lane.b32.xlu0 %v2643, 24
      %v2718 = vpop.permute.xlu0 %2717
      %2719 = vrot.lane.b32.xlu0 %v2644, 24
      %v2720 = vpop.permute.xlu0 %2719
      %2721 = vrot.lane.b32.xlu0 %v2645, 24
      %v2722 = vpop.permute.xlu0 %2721
      %2723 = vrot.lane.b32.xlu0 %v2646, 24
      %v2724 = vpop.permute.xlu0 %2723
      %2725 = vrot.lane.b32.xlu0 %v2647, 24
      %v2726 = vpop.permute.xlu0 %2725
      %2727 = vrot.lane.b32.xlu0 %v2648, 24
      %v2728 = vpop.permute.xlu0 %2727
      %2729 = vrot.lane.b32.xlu0 %v2649, 24
      %v2730 = vpop.permute.xlu0 %2729
      %2731 = vrot.lane.b32.xlu0 %v2650, 24
      %v2732 = vpop.permute.xlu0 %2731
      %2733 = vrot.lane.b32.xlu0 %v2651, 24
      %v2734 = vpop.permute.xlu0 %2733
      %2735 = vrot.lane.b32.xlu0 %v2652, 24
      %v2736 = vpop.permute.xlu0 %2735
      %2737 = vrot.lane.b32.xlu0 %v2653, 24
      %v2738 = vpop.permute.xlu0 %2737
      %2739 = vrot.lane.b32.xlu0 %v2654, 24
      %v2740 = vpop.permute.xlu0 %2739
      %2741 = vrot.lane.b32.xlu0 %v2655, 24
      %v2742 = vpop.permute.xlu0 %2741
      %2743 = vrot.lane.b32.xlu0 %v2656, 24
      %v2744 = vpop.permute.xlu0 %2743
      %2745 = vrot.lane.b32.xlu0 %v2657, 24
      %v2746 = vpop.permute.xlu0 %2745
      %2747 = vrot.lane.b32.xlu0 %v2658, 24
      %v2748 = vpop.permute.xlu0 %2747
      %2749 = vrot.lane.b32.xlu0 %v2659, 24
      %v2750 = vpop.permute.xlu0 %2749
      %2751 = vrot.lane.b32.xlu0 %v2660, 24
      %v2752 = vpop.permute.xlu0 %2751
      %2753 = vrot.lane.b32.xlu0 %v2661, 24
      %v2754 = vpop.permute.xlu0 %2753
      %2755 = vrot.lane.b32.xlu0 %v2662, 24
      %v2756 = vpop.permute.xlu0 %2755
      %2757 = vrot.lane.b32.xlu0 %v2663, 24
      %v2758 = vpop.permute.xlu0 %2757
      %2759 = vrot.lane.b32.xlu0 %v2664, 24
      %v2760 = vpop.permute.xlu0 %2759
      %2793 = vst.msk [vmem:[#allocation3] sm:$0xff] %vm903, %v2698
      %2794 = vst.msk [vmem:[#allocation3 + $0x8] sm:$0xff] %vm903, %v2700
      %2795 = vst.msk [vmem:[#allocation3 + $0x10] sm:$0xff] %vm903, %v2702
      %2796 = vst.msk [vmem:[#allocation3 + $0x18] sm:$0xff] %vm903, %v2704
      %2797 = vst.msk [vmem:[#allocation3 + $0x20] sm:$0xff] %vm903, %v2706
      %2798 = vst.msk [vmem:[#allocation3 + $0x28] sm:$0xff] %vm903, %v2708
      %2799 = vst.msk [vmem:[#allocation3 + $0x30] sm:$0xff] %vm903, %v2710
      %2800 = vst.msk [vmem:[#allocation3 + $0x38] sm:$0xff] %vm903, %v2712
      %2801 = vst.msk [vmem:[#allocation3 + $0x40] sm:$0xff] %vm903, %v2714
      %2802 = vst.msk [vmem:[#allocation3 + $0x48] sm:$0xff] %vm903, %v2716
      %2803 = vst.msk [vmem:[#allocation3 + $0x50] sm:$0xff] %vm903, %v2718
      %2804 = vst.msk [vmem:[#allocation3 + $0x58] sm:$0xff] %vm903, %v2720
      %2805 = vst.msk [vmem:[#allocation3 + $0x60] sm:$0xff] %vm903, %v2722
      %2806 = vst.msk [vmem:[#allocation3 + $0x68] sm:$0xff] %vm903, %v2724
      %2807 = vst.msk [vmem:[#allocation3 + $0x70] sm:$0xff] %vm903, %v2726
      %2808 = vst.msk [vmem:[#allocation3 + $0x78] sm:$0xff] %vm903, %v2728
      %2809 = vst.msk [vmem:[#allocation3 + $0x80] sm:$0xff] %vm903, %v2730
      %2810 = vst.msk [vmem:[#allocation3 + $0x88] sm:$0xff] %vm903, %v2732
      %2811 = vst.msk [vmem:[#allocation3 + $0x90] sm:$0xff] %vm903, %v2734
      %2812 = vst.msk [vmem:[#allocation3 + $0x98] sm:$0xff] %vm903, %v2736
      %2813 = vst.msk [vmem:[#allocation3 + $0xa0] sm:$0xff] %vm903, %v2738
      %2814 = vst.msk [vmem:[#allocation3 + $0xa8] sm:$0xff] %vm903, %v2740
      %2815 = vst.msk [vmem:[#allocation3 + $0xb0] sm:$0xff] %vm903, %v2742
      %2816 = vst.msk [vmem:[#allocation3 + $0xb8] sm:$0xff] %vm903, %v2744
      %2817 = vst.msk [vmem:[#allocation3 + $0xc0] sm:$0xff] %vm903, %v2746
      %2818 = vst.msk [vmem:[#allocation3 + $0xc8] sm:$0xff] %vm903, %v2748
      %2819 = vst.msk [vmem:[#allocation3 + $0xd0] sm:$0xff] %vm903, %v2750
      %2820 = vst.msk [vmem:[#allocation3 + $0xd8] sm:$0xff] %vm903, %v2752
      %2821 = vst.msk [vmem:[#allocation3 + $0xe0] sm:$0xff] %vm903, %v2754
      %2822 = vst.msk [vmem:[#allocation3 + $0xe8] sm:$0xff] %vm903, %v2756
      %2823 = vst.msk [vmem:[#allocation3 + $0xf0] sm:$0xff] %vm903, %v2758
      %2824 = vst.msk [vmem:[#allocation3 + $0xf8] sm:$0xff] %vm903, %v2760
      %v2825 = vld [vmem:[%s259 + $0x1] sm:$0xff]
      %v2826 = vld [vmem:[%s259 + $0x9] sm:$0xff]
      %v2827 = vld [vmem:[%s259 + $0x19] sm:$0xff]
      %v2828 = vld [vmem:[%s259 + $0x21] sm:$0xff]
      %v2829 = vld [vmem:[%s259 + $0x31] sm:$0xff]
      %v2830 = vld [vmem:[%s259 + $0x39] sm:$0xff]
      %v2831 = vld [vmem:[%s259 + $0x49] sm:$0xff]
      %v2832 = vld [vmem:[%s259 + $0x51] sm:$0xff]
      %v2833 = vld [vmem:[%s259 + $0x61] sm:$0xff]
      %v2834 = vld [vmem:[%s259 + $0x69] sm:$0xff]
      %v2835 = vld [vmem:[%s259 + $0x79] sm:$0xff]
      %v2836 = vld [vmem:[%s259 + $0x81] sm:$0xff]
      %v2837 = vld [vmem:[%s259 + $0x91] sm:$0xff]
      %v2838 = vld [vmem:[%s259 + $0x99] sm:$0xff]
      %v2839 = vld [vmem:[%s259 + $0xa9] sm:$0xff]
      %v2840 = vld [vmem:[%s259 + $0xb1] sm:$0xff]
      %v2841 = vld [vmem:[%s259 + $0xc1] sm:$0xff]
      %v2842 = vld [vmem:[%s259 + $0xc9] sm:$0xff]
      %v2843 = vld [vmem:[%s259 + $0xd9] sm:$0xff]
      %v2844 = vld [vmem:[%s259 + $0xe1] sm:$0xff]
      %v2845 = vld [vmem:[%s259 + $0xf1] sm:$0xff]
      %v2846 = vld [vmem:[%s259 + $0xf9] sm:$0xff]
      %v2847 = vld [vmem:[%s259 + $0x109] sm:$0xff]
      %v2848 = vld [vmem:[%s259 + $0x111] sm:$0xff]
      %v2849 = vld [vmem:[%s259 + $0x121] sm:$0xff]
      %v2850 = vld [vmem:[%s259 + $0x129] sm:$0xff]
      %v2851 = vld [vmem:[%s259 + $0x139] sm:$0xff]
      %v2852 = vld [vmem:[%s259 + $0x141] sm:$0xff]
      %v2853 = vld [vmem:[%s259 + $0x151] sm:$0xff]
      %v2854 = vld [vmem:[%s259 + $0x159] sm:$0xff]
      %v2855 = vld [vmem:[%s259 + $0x169] sm:$0xff]
      %v2856 = vld [vmem:[%s259 + $0x171] sm:$0xff]
      %2889 = vrot.lane.b32.xlu0 %v2825, 32
      %v2890 = vpop.permute.xlu0 %2889
      %2891 = vrot.lane.b32.xlu0 %v2826, 32
      %v2892 = vpop.permute.xlu0 %2891
      %2893 = vrot.lane.b32.xlu0 %v2827, 32
      %v2894 = vpop.permute.xlu0 %2893
      %2895 = vrot.lane.b32.xlu0 %v2828, 32
      %v2896 = vpop.permute.xlu0 %2895
      %2897 = vrot.lane.b32.xlu0 %v2829, 32
      %v2898 = vpop.permute.xlu0 %2897
      %2899 = vrot.lane.b32.xlu0 %v2830, 32
      %v2900 = vpop.permute.xlu0 %2899
      %2901 = vrot.lane.b32.xlu0 %v2831, 32
      %v2902 = vpop.permute.xlu0 %2901
      %2903 = vrot.lane.b32.xlu0 %v2832, 32
      %v2904 = vpop.permute.xlu0 %2903
      %2905 = vrot.lane.b32.xlu0 %v2833, 32
      %v2906 = vpop.permute.xlu0 %2905
      %2907 = vrot.lane.b32.xlu0 %v2834, 32
      %v2908 = vpop.permute.xlu0 %2907
      %2909 = vrot.lane.b32.xlu0 %v2835, 32
      %v2910 = vpop.permute.xlu0 %2909
      %2911 = vrot.lane.b32.xlu0 %v2836, 32
      %v2912 = vpop.permute.xlu0 %2911
      %2913 = vrot.lane.b32.xlu0 %v2837, 32
      %v2914 = vpop.permute.xlu0 %2913
      %2915 = vrot.lane.b32.xlu0 %v2838, 32
      %v2916 = vpop.permute.xlu0 %2915
      %2917 = vrot.lane.b32.xlu0 %v2839, 32
      %v2918 = vpop.permute.xlu0 %2917
      %2919 = vrot.lane.b32.xlu0 %v2840, 32
      %v2920 = vpop.permute.xlu0 %2919
      %2921 = vrot.lane.b32.xlu0 %v2841, 32
      %v2922 = vpop.permute.xlu0 %2921
      %2923 = vrot.lane.b32.xlu0 %v2842, 32
      %v2924 = vpop.permute.xlu0 %2923
      %2925 = vrot.lane.b32.xlu0 %v2843, 32
      %v2926 = vpop.permute.xlu0 %2925
      %2927 = vrot.lane.b32.xlu0 %v2844, 32
      %v2928 = vpop.permute.xlu0 %2927
      %2929 = vrot.lane.b32.xlu0 %v2845, 32
      %v2930 = vpop.permute.xlu0 %2929
      %2931 = vrot.lane.b32.xlu0 %v2846, 32
      %v2932 = vpop.permute.xlu0 %2931
      %2933 = vrot.lane.b32.xlu0 %v2847, 32
      %v2934 = vpop.permute.xlu0 %2933
      %2935 = vrot.lane.b32.xlu0 %v2848, 32
      %v2936 = vpop.permute.xlu0 %2935
      %2937 = vrot.lane.b32.xlu0 %v2849, 32
      %v2938 = vpop.permute.xlu0 %2937
      %2939 = vrot.lane.b32.xlu0 %v2850, 32
      %v2940 = vpop.permute.xlu0 %2939
      %2941 = vrot.lane.b32.xlu0 %v2851, 32
      %v2942 = vpop.permute.xlu0 %2941
      %2943 = vrot.lane.b32.xlu0 %v2852, 32
      %v2944 = vpop.permute.xlu0 %2943
      %2945 = vrot.lane.b32.xlu0 %v2853, 32
      %v2946 = vpop.permute.xlu0 %2945
      %2947 = vrot.lane.b32.xlu0 %v2854, 32
      %v2948 = vpop.permute.xlu0 %2947
      %2949 = vrot.lane.b32.xlu0 %v2855, 32
      %v2950 = vpop.permute.xlu0 %2949
      %2951 = vrot.lane.b32.xlu0 %v2856, 32
      %v2952 = vpop.permute.xlu0 %2951
      %2985 = vst.msk [vmem:[#allocation3] sm:$0xff] %vm1096, %v2890
      %2986 = vst.msk [vmem:[#allocation3 + $0x8] sm:$0xff] %vm1096, %v2892
      %2987 = vst.msk [vmem:[#allocation3 + $0x10] sm:$0xff] %vm1096, %v2894
      %2988 = vst.msk [vmem:[#allocation3 + $0x18] sm:$0xff] %vm1096, %v2896
      %2989 = vst.msk [vmem:[#allocation3 + $0x20] sm:$0xff] %vm1096, %v2898
      %2990 = vst.msk [vmem:[#allocation3 + $0x28] sm:$0xff] %vm1096, %v2900
      %2991 = vst.msk [vmem:[#allocation3 + $0x30] sm:$0xff] %vm1096, %v2902
      %2992 = vst.msk [vmem:[#allocation3 + $0x38] sm:$0xff] %vm1096, %v2904
      %2993 = vst.msk [vmem:[#allocation3 + $0x40] sm:$0xff] %vm1096, %v2906
      %2994 = vst.msk [vmem:[#allocation3 + $0x48] sm:$0xff] %vm1096, %v2908
      %2995 = vst.msk [vmem:[#allocation3 + $0x50] sm:$0xff] %vm1096, %v2910
      %2996 = vst.msk [vmem:[#allocation3 + $0x58] sm:$0xff] %vm1096, %v2912
      %2997 = vst.msk [vmem:[#allocation3 + $0x60] sm:$0xff] %vm1096, %v2914
      %2998 = vst.msk [vmem:[#allocation3 + $0x68] sm:$0xff] %vm1096, %v2916
      %2999 = vst.msk [vmem:[#allocation3 + $0x70] sm:$0xff] %vm1096, %v2918
      %3000 = vst.msk [vmem:[#allocation3 + $0x78] sm:$0xff] %vm1096, %v2920
      %3001 = vst.msk [vmem:[#allocation3 + $0x80] sm:$0xff] %vm1096, %v2922
      %3002 = vst.msk [vmem:[#allocation3 + $0x88] sm:$0xff] %vm1096, %v2924
      %3003 = vst.msk [vmem:[#allocation3 + $0x90] sm:$0xff] %vm1096, %v2926
      %3004 = vst.msk [vmem:[#allocation3 + $0x98] sm:$0xff] %vm1096, %v2928
      %3005 = vst.msk [vmem:[#allocation3 + $0xa0] sm:$0xff] %vm1096, %v2930
      %3006 = vst.msk [vmem:[#allocation3 + $0xa8] sm:$0xff] %vm1096, %v2932
      %3007 = vst.msk [vmem:[#allocation3 + $0xb0] sm:$0xff] %vm1096, %v2934
      %3008 = vst.msk [vmem:[#allocation3 + $0xb8] sm:$0xff] %vm1096, %v2936
      %3009 = vst.msk [vmem:[#allocation3 + $0xc0] sm:$0xff] %vm1096, %v2938
      %3010 = vst.msk [vmem:[#allocation3 + $0xc8] sm:$0xff] %vm1096, %v2940
      %3011 = vst.msk [vmem:[#allocation3 + $0xd0] sm:$0xff] %vm1096, %v2942
      %3012 = vst.msk [vmem:[#allocation3 + $0xd8] sm:$0xff] %vm1096, %v2944
      %3013 = vst.msk [vmem:[#allocation3 + $0xe0] sm:$0xff] %vm1096, %v2946
      %3014 = vst.msk [vmem:[#allocation3 + $0xe8] sm:$0xff] %vm1096, %v2948
      %3015 = vst.msk [vmem:[#allocation3 + $0xf0] sm:$0xff] %vm1096, %v2950
      %3016 = vst.msk [vmem:[#allocation3 + $0xf8] sm:$0xff] %vm1096, %v2952
      %v3017 = vld [vmem:[%s259 + $0x2] sm:$0xff]
      %v3018 = vld [vmem:[%s259 + $0xa] sm:$0xff]
      %v3019 = vld [vmem:[%s259 + $0x1a] sm:$0xff]
      %v3020 = vld [vmem:[%s259 + $0x22] sm:$0xff]
      %v3021 = vld [vmem:[%s259 + $0x32] sm:$0xff]
      %v3022 = vld [vmem:[%s259 + $0x3a] sm:$0xff]
      %v3023 = vld [vmem:[%s259 + $0x4a] sm:$0xff]
      %v3024 = vld [vmem:[%s259 + $0x52] sm:$0xff]
      %v3025 = vld [vmem:[%s259 + $0x62] sm:$0xff]
      %v3026 = vld [vmem:[%s259 + $0x6a] sm:$0xff]
      %v3027 = vld [vmem:[%s259 + $0x7a] sm:$0xff]
      %v3028 = vld [vmem:[%s259 + $0x82] sm:$0xff]
      %v3029 = vld [vmem:[%s259 + $0x92] sm:$0xff]
      %v3030 = vld [vmem:[%s259 + $0x9a] sm:$0xff]
      %v3031 = vld [vmem:[%s259 + $0xaa] sm:$0xff]
      %v3032 = vld [vmem:[%s259 + $0xb2] sm:$0xff]
      %v3033 = vld [vmem:[%s259 + $0xc2] sm:$0xff]
      %v3034 = vld [vmem:[%s259 + $0xca] sm:$0xff]
      %v3035 = vld [vmem:[%s259 + $0xda] sm:$0xff]
      %v3036 = vld [vmem:[%s259 + $0xe2] sm:$0xff]
      %v3037 = vld [vmem:[%s259 + $0xf2] sm:$0xff]
      %v3038 = vld [vmem:[%s259 + $0xfa] sm:$0xff]
      %v3039 = vld [vmem:[%s259 + $0x10a] sm:$0xff]
      %v3040 = vld [vmem:[%s259 + $0x112] sm:$0xff]
      %v3041 = vld [vmem:[%s259 + $0x122] sm:$0xff]
      %v3042 = vld [vmem:[%s259 + $0x12a] sm:$0xff]
      %v3043 = vld [vmem:[%s259 + $0x13a] sm:$0xff]
      %v3044 = vld [vmem:[%s259 + $0x142] sm:$0xff]
      %v3045 = vld [vmem:[%s259 + $0x152] sm:$0xff]
      %v3046 = vld [vmem:[%s259 + $0x15a] sm:$0xff]
      %v3047 = vld [vmem:[%s259 + $0x16a] sm:$0xff]
      %v3048 = vld [vmem:[%s259 + $0x172] sm:$0xff]
      %3081 = vrot.lane.b32.xlu0 %v3017, 40
      %v3082 = vpop.permute.xlu0 %3081
      %3083 = vrot.lane.b32.xlu0 %v3018, 40
      %v3084 = vpop.permute.xlu0 %3083
      %3085 = vrot.lane.b32.xlu0 %v3019, 40
      %v3086 = vpop.permute.xlu0 %3085
      %3087 = vrot.lane.b32.xlu0 %v3020, 40
      %v3088 = vpop.permute.xlu0 %3087
      %3089 = vrot.lane.b32.xlu0 %v3021, 40
      %v3090 = vpop.permute.xlu0 %3089
      %3091 = vrot.lane.b32.xlu0 %v3022, 40
      %v3092 = vpop.permute.xlu0 %3091
      %3093 = vrot.lane.b32.xlu0 %v3023, 40
      %v3094 = vpop.permute.xlu0 %3093
      %3095 = vrot.lane.b32.xlu0 %v3024, 40
      %v3096 = vpop.permute.xlu0 %3095
      %3097 = vrot.lane.b32.xlu0 %v3025, 40
      %v3098 = vpop.permute.xlu0 %3097
      %3099 = vrot.lane.b32.xlu0 %v3026, 40
      %v3100 = vpop.permute.xlu0 %3099
      %3101 = vrot.lane.b32.xlu0 %v3027, 40
      %v3102 = vpop.permute.xlu0 %3101
      %3103 = vrot.lane.b32.xlu0 %v3028, 40
      %v3104 = vpop.permute.xlu0 %3103
      %3105 = vrot.lane.b32.xlu0 %v3029, 40
      %v3106 = vpop.permute.xlu0 %3105
      %3107 = vrot.lane.b32.xlu0 %v3030, 40
      %v3108 = vpop.permute.xlu0 %3107
      %3109 = vrot.lane.b32.xlu0 %v3031, 40
      %v3110 = vpop.permute.xlu0 %3109
      %3111 = vrot.lane.b32.xlu0 %v3032, 40
      %v3112 = vpop.permute.xlu0 %3111
      %3113 = vrot.lane.b32.xlu0 %v3033, 40
      %v3114 = vpop.permute.xlu0 %3113
      %3115 = vrot.lane.b32.xlu0 %v3034, 40
      %v3116 = vpop.permute.xlu0 %3115
      %3117 = vrot.lane.b32.xlu0 %v3035, 40
      %v3118 = vpop.permute.xlu0 %3117
      %3119 = vrot.lane.b32.xlu0 %v3036, 40
      %v3120 = vpop.permute.xlu0 %3119
      %3121 = vrot.lane.b32.xlu0 %v3037, 40
      %v3122 = vpop.permute.xlu0 %3121
      %3123 = vrot.lane.b32.xlu0 %v3038, 40
      %v3124 = vpop.permute.xlu0 %3123
      %3125 = vrot.lane.b32.xlu0 %v3039, 40
      %v3126 = vpop.permute.xlu0 %3125
      %3127 = vrot.lane.b32.xlu0 %v3040, 40
      %v3128 = vpop.permute.xlu0 %3127
      %3129 = vrot.lane.b32.xlu0 %v3041, 40
      %v3130 = vpop.permute.xlu0 %3129
      %3131 = vrot.lane.b32.xlu0 %v3042, 40
      %v3132 = vpop.permute.xlu0 %3131
      %3133 = vrot.lane.b32.xlu0 %v3043, 40
      %v3134 = vpop.permute.xlu0 %3133
      %3135 = vrot.lane.b32.xlu0 %v3044, 40
      %v3136 = vpop.permute.xlu0 %3135
      %3137 = vrot.lane.b32.xlu0 %v3045, 40
      %v3138 = vpop.permute.xlu0 %3137
      %3139 = vrot.lane.b32.xlu0 %v3046, 40
      %v3140 = vpop.permute.xlu0 %3139
      %3141 = vrot.lane.b32.xlu0 %v3047, 40
      %v3142 = vpop.permute.xlu0 %3141
      %3143 = vrot.lane.b32.xlu0 %v3048, 40
      %v3144 = vpop.permute.xlu0 %3143
      %3177 = vst.msk [vmem:[#allocation3] sm:$0xff] %vm1289, %v3082
      %3178 = vst.msk [vmem:[#allocation3 + $0x8] sm:$0xff] %vm1289, %v3084
      %3179 = vst.msk [vmem:[#allocation3 + $0x10] sm:$0xff] %vm1289, %v3086
      %3180 = vst.msk [vmem:[#allocation3 + $0x18] sm:$0xff] %vm1289, %v3088
      %3181 = vst.msk [vmem:[#allocation3 + $0x20] sm:$0xff] %vm1289, %v3090
      %3182 = vst.msk [vmem:[#allocation3 + $0x28] sm:$0xff] %vm1289, %v3092
      %3183 = vst.msk [vmem:[#allocation3 + $0x30] sm:$0xff] %vm1289, %v3094
      %3184 = vst.msk [vmem:[#allocation3 + $0x38] sm:$0xff] %vm1289, %v3096
      %3185 = vst.msk [vmem:[#allocation3 + $0x40] sm:$0xff] %vm1289, %v3098
      %3186 = vst.msk [vmem:[#allocation3 + $0x48] sm:$0xff] %vm1289, %v3100
      %3187 = vst.msk [vmem:[#allocation3 + $0x50] sm:$0xff] %vm1289, %v3102
      %3188 = vst.msk [vmem:[#allocation3 + $0x58] sm:$0xff] %vm1289, %v3104
      %3189 = vst.msk [vmem:[#allocation3 + $0x60] sm:$0xff] %vm1289, %v3106
      %3190 = vst.msk [vmem:[#allocation3 + $0x68] sm:$0xff] %vm1289, %v3108
      %3191 = vst.msk [vmem:[#allocation3 + $0x70] sm:$0xff] %vm1289, %v3110
      %3192 = vst.msk [vmem:[#allocation3 + $0x78] sm:$0xff] %vm1289, %v3112
      %3193 = vst.msk [vmem:[#allocation3 + $0x80] sm:$0xff] %vm1289, %v3114
      %3194 = vst.msk [vmem:[#allocation3 + $0x88] sm:$0xff] %vm1289, %v3116
      %3195 = vst.msk [vmem:[#allocation3 + $0x90] sm:$0xff] %vm1289, %v3118
      %3196 = vst.msk [vmem:[#allocation3 + $0x98] sm:$0xff] %vm1289, %v3120
      %3197 = vst.msk [vmem:[#allocation3 + $0xa0] sm:$0xff] %vm1289, %v3122
      %3198 = vst.msk [vmem:[#allocation3 + $0xa8] sm:$0xff] %vm1289, %v3124
      %3199 = vst.msk [vmem:[#allocation3 + $0xb0] sm:$0xff] %vm1289, %v3126
      %3200 = vst.msk [vmem:[#allocation3 + $0xb8] sm:$0xff] %vm1289, %v3128
      %3201 = vst.msk [vmem:[#allocation3 + $0xc0] sm:$0xff] %vm1289, %v3130
      %3202 = vst.msk [vmem:[#allocation3 + $0xc8] sm:$0xff] %vm1289, %v3132
      %3203 = vst.msk [vmem:[#allocation3 + $0xd0] sm:$0xff] %vm1289, %v3134
      %3204 = vst.msk [vmem:[#allocation3 + $0xd8] sm:$0xff] %vm1289, %v3136
      %3205 = vst.msk [vmem:[#allocation3 + $0xe0] sm:$0xff] %vm1289, %v3138
      %3206 = vst.msk [vmem:[#allocation3 + $0xe8] sm:$0xff] %vm1289, %v3140
      %3207 = vst.msk [vmem:[#allocation3 + $0xf0] sm:$0xff] %vm1289, %v3142
      %3208 = vst.msk [vmem:[#allocation3 + $0xf8] sm:$0xff] %vm1289, %v3144
      %v3209 = vld [vmem:[%s1322] sm:$0xff]
      %v3210 = vld [vmem:[%s1322 + $0x8] sm:$0xff]
      %v3211 = vld [vmem:[%s1322 + $0x18] sm:$0xff]
      %v3212 = vld [vmem:[%s1322 + $0x20] sm:$0xff]
      %v3213 = vld [vmem:[%s1322 + $0x30] sm:$0xff]
      %v3214 = vld [vmem:[%s1322 + $0x38] sm:$0xff]
      %v3215 = vld [vmem:[%s1322 + $0x48] sm:$0xff]
      %v3216 = vld [vmem:[%s1322 + $0x50] sm:$0xff]
      %v3217 = vld [vmem:[%s1322 + $0x60] sm:$0xff]
      %v3218 = vld [vmem:[%s1322 + $0x68] sm:$0xff]
      %v3219 = vld [vmem:[%s1322 + $0x78] sm:$0xff]
      %v3220 = vld [vmem:[%s1322 + $0x80] sm:$0xff]
      %v3221 = vld [vmem:[%s1322 + $0x90] sm:$0xff]
      %v3222 = vld [vmem:[%s1322 + $0x98] sm:$0xff]
      %v3223 = vld [vmem:[%s1322 + $0xa8] sm:$0xff]
      %v3224 = vld [vmem:[%s1322 + $0xb0] sm:$0xff]
      %v3225 = vld [vmem:[%s1322 + $0xc0] sm:$0xff]
      %v3226 = vld [vmem:[%s1322 + $0xc8] sm:$0xff]
      %v3227 = vld [vmem:[%s1322 + $0xd8] sm:$0xff]
      %v3228 = vld [vmem:[%s1322 + $0xe0] sm:$0xff]
      %v3229 = vld [vmem:[%s1322 + $0xf0] sm:$0xff]
      %v3230 = vld [vmem:[%s1322 + $0xf8] sm:$0xff]
      %v3231 = vld [vmem:[%s1322 + $0x108] sm:$0xff]
      %v3232 = vld [vmem:[%s1322 + $0x110] sm:$0xff]
      %v3233 = vld [vmem:[%s1322 + $0x120] sm:$0xff]
      %v3234 = vld [vmem:[%s1322 + $0x128] sm:$0xff]
      %v3235 = vld [vmem:[%s1322 + $0x138] sm:$0xff]
      %v3236 = vld [vmem:[%s1322 + $0x140] sm:$0xff]
      %v3237 = vld [vmem:[%s1322 + $0x150] sm:$0xff]
      %v3238 = vld [vmem:[%s1322 + $0x158] sm:$0xff]
      %v3239 = vld [vmem:[%s1322 + $0x168] sm:$0xff]
      %v3240 = vld [vmem:[%s1322 + $0x170] sm:$0xff]
      %3273 = vrot.lane.b32.xlu0 %v3209, 48
      %v3274 = vpop.permute.xlu0 %3273
      %3275 = vrot.lane.b32.xlu0 %v3210, 48
      %v3276 = vpop.permute.xlu0 %3275
      %3277 = vrot.lane.b32.xlu0 %v3211, 48
      %v3278 = vpop.permute.xlu0 %3277
      %3279 = vrot.lane.b32.xlu0 %v3212, 48
      %v3280 = vpop.permute.xlu0 %3279
      %3281 = vrot.lane.b32.xlu0 %v3213, 48
      %v3282 = vpop.permute.xlu0 %3281
      %3283 = vrot.lane.b32.xlu0 %v3214, 48
      %v3284 = vpop.permute.xlu0 %3283
      %3285 = vrot.lane.b32.xlu0 %v3215, 48
      %v3286 = vpop.permute.xlu0 %3285
      %3287 = vrot.lane.b32.xlu0 %v3216, 48
      %v3288 = vpop.permute.xlu0 %3287
      %3289 = vrot.lane.b32.xlu0 %v3217, 48
      %v3290 = vpop.permute.xlu0 %3289
      %3291 = vrot.lane.b32.xlu0 %v3218, 48
      %v3292 = vpop.permute.xlu0 %3291
      %3293 = vrot.lane.b32.xlu0 %v3219, 48
      %v3294 = vpop.permute.xlu0 %3293
      %3295 = vrot.lane.b32.xlu0 %v3220, 48
      %v3296 = vpop.permute.xlu0 %3295
      %3297 = vrot.lane.b32.xlu0 %v3221, 48
      %v3298 = vpop.permute.xlu0 %3297
      %3299 = vrot.lane.b32.xlu0 %v3222, 48
      %v3300 = vpop.permute.xlu0 %3299
      %3301 = vrot.lane.b32.xlu0 %v3223, 48
      %v3302 = vpop.permute.xlu0 %3301
      %3303 = vrot.lane.b32.xlu0 %v3224, 48
      %v3304 = vpop.permute.xlu0 %3303
      %3305 = vrot.lane.b32.xlu0 %v3225, 48
      %v3306 = vpop.permute.xlu0 %3305
      %3307 = vrot.lane.b32.xlu0 %v3226, 48
      %v3308 = vpop.permute.xlu0 %3307
      %3309 = vrot.lane.b32.xlu0 %v3227, 48
      %v3310 = vpop.permute.xlu0 %3309
      %3311 = vrot.lane.b32.xlu0 %v3228, 48
      %v3312 = vpop.permute.xlu0 %3311
      %3313 = vrot.lane.b32.xlu0 %v3229, 48
      %v3314 = vpop.permute.xlu0 %3313
      %3315 = vrot.lane.b32.xlu0 %v3230, 48
      %v3316 = vpop.permute.xlu0 %3315
      %3317 = vrot.lane.b32.xlu0 %v3231, 48
      %v3318 = vpop.permute.xlu0 %3317
      %3319 = vrot.lane.b32.xlu0 %v3232, 48
      %v3320 = vpop.permute.xlu0 %3319
      %3321 = vrot.lane.b32.xlu0 %v3233, 48
      %v3322 = vpop.permute.xlu0 %3321
      %3323 = vrot.lane.b32.xlu0 %v3234, 48
      %v3324 = vpop.permute.xlu0 %3323
      %3325 = vrot.lane.b32.xlu0 %v3235, 48
      %v3326 = vpop.permute.xlu0 %3325
      %3327 = vrot.lane.b32.xlu0 %v3236, 48
      %v3328 = vpop.permute.xlu0 %3327
      %3329 = vrot.lane.b32.xlu0 %v3237, 48
      %v3330 = vpop.permute.xlu0 %3329
      %3331 = vrot.lane.b32.xlu0 %v3238, 48
      %v3332 = vpop.permute.xlu0 %3331
      %3333 = vrot.lane.b32.xlu0 %v3239, 48
      %v3334 = vpop.permute.xlu0 %3333
      %3335 = vrot.lane.b32.xlu0 %v3240, 48
      %v3336 = vpop.permute.xlu0 %3335
      %3369 = vst.msk [vmem:[#allocation3] sm:$0xff] %vm1483, %v3274
      %3370 = vst.msk [vmem:[#allocation3 + $0x8] sm:$0xff] %vm1483, %v3276
      %3371 = vst.msk [vmem:[#allocation3 + $0x10] sm:$0xff] %vm1483, %v3278
      %3372 = vst.msk [vmem:[#allocation3 + $0x18] sm:$0xff] %vm1483, %v3280
      %3373 = vst.msk [vmem:[#allocation3 + $0x20] sm:$0xff] %vm1483, %v3282
      %3374 = vst.msk [vmem:[#allocation3 + $0x28] sm:$0xff] %vm1483, %v3284
      %3375 = vst.msk [vmem:[#allocation3 + $0x30] sm:$0xff] %vm1483, %v3286
      %3376 = vst.msk [vmem:[#allocation3 + $0x38] sm:$0xff] %vm1483, %v3288
      %3377 = vst.msk [vmem:[#allocation3 + $0x40] sm:$0xff] %vm1483, %v3290
      %3378 = vst.msk [vmem:[#allocation3 + $0x48] sm:$0xff] %vm1483, %v3292
      %3379 = vst.msk [vmem:[#allocation3 + $0x50] sm:$0xff] %vm1483, %v3294
      %3380 = vst.msk [vmem:[#allocation3 + $0x58] sm:$0xff] %vm1483, %v3296
      %3381 = vst.msk [vmem:[#allocation3 + $0x60] sm:$0xff] %vm1483, %v3298
      %3382 = vst.msk [vmem:[#allocation3 + $0x68] sm:$0xff] %vm1483, %v3300
      %3383 = vst.msk [vmem:[#allocation3 + $0x70] sm:$0xff] %vm1483, %v3302
      %3384 = vst.msk [vmem:[#allocation3 + $0x78] sm:$0xff] %vm1483, %v3304
      %3385 = vst.msk [vmem:[#allocation3 + $0x80] sm:$0xff] %vm1483, %v3306
      %3386 = vst.msk [vmem:[#allocation3 + $0x88] sm:$0xff] %vm1483, %v3308
      %3387 = vst.msk [vmem:[#allocation3 + $0x90] sm:$0xff] %vm1483, %v3310
      %3388 = vst.msk [vmem:[#allocation3 + $0x98] sm:$0xff] %vm1483, %v3312
      %3389 = vst.msk [vmem:[#allocation3 + $0xa0] sm:$0xff] %vm1483, %v3314
      %3390 = vst.msk [vmem:[#allocation3 + $0xa8] sm:$0xff] %vm1483, %v3316
      %3391 = vst.msk [vmem:[#allocation3 + $0xb0] sm:$0xff] %vm1483, %v3318
      %3392 = vst.msk [vmem:[#allocation3 + $0xb8] sm:$0xff] %vm1483, %v3320
      %3393 = vst.msk [vmem:[#allocation3 + $0xc0] sm:$0xff] %vm1483, %v3322
      %3394 = vst.msk [vmem:[#allocation3 + $0xc8] sm:$0xff] %vm1483, %v3324
      %3395 = vst.msk [vmem:[#allocation3 + $0xd0] sm:$0xff] %vm1483, %v3326
      %3396 = vst.msk [vmem:[#allocation3 + $0xd8] sm:$0xff] %vm1483, %v3328
      %3397 = vst.msk [vmem:[#allocation3 + $0xe0] sm:$0xff] %vm1483, %v3330
      %3398 = vst.msk [vmem:[#allocation3 + $0xe8] sm:$0xff] %vm1483, %v3332
      %3399 = vst.msk [vmem:[#allocation3 + $0xf0] sm:$0xff] %vm1483, %v3334
      %3400 = vst.msk [vmem:[#allocation3 + $0xf8] sm:$0xff] %vm1483, %v3336
      %v3401 = vld [vmem:[%s1322 + $0x1] sm:$0xff]
      %v3402 = vld [vmem:[%s1322 + $0x9] sm:$0xff]
      %v3403 = vld [vmem:[%s1322 + $0x19] sm:$0xff]
      %v3404 = vld [vmem:[%s1322 + $0x21] sm:$0xff]
      %v3405 = vld [vmem:[%s1322 + $0x31] sm:$0xff]
      %v3406 = vld [vmem:[%s1322 + $0x39] sm:$0xff]
      %v3407 = vld [vmem:[%s1322 + $0x49] sm:$0xff]
      %v3408 = vld [vmem:[%s1322 + $0x51] sm:$0xff]
      %v3409 = vld [vmem:[%s1322 + $0x61] sm:$0xff]
      %v3410 = vld [vmem:[%s1322 + $0x69] sm:$0xff]
      %v3411 = vld [vmem:[%s1322 + $0x79] sm:$0xff]
      %v3412 = vld [vmem:[%s1322 + $0x81] sm:$0xff]
      %v3413 = vld [vmem:[%s1322 + $0x91] sm:$0xff]
      %v3414 = vld [vmem:[%s1322 + $0x99] sm:$0xff]
      %v3415 = vld [vmem:[%s1322 + $0xa9] sm:$0xff]
      %v3416 = vld [vmem:[%s1322 + $0xb1] sm:$0xff]
      %v3417 = vld [vmem:[%s1322 + $0xc1] sm:$0xff]
      %v3418 = vld [vmem:[%s1322 + $0xc9] sm:$0xff]
      %v3419 = vld [vmem:[%s1322 + $0xd9] sm:$0xff]
      %v3420 = vld [vmem:[%s1322 + $0xe1] sm:$0xff]
      %v3421 = vld [vmem:[%s1322 + $0xf1] sm:$0xff]
      %v3422 = vld [vmem:[%s1322 + $0xf9] sm:$0xff]
      %v3423 = vld [vmem:[%s1322 + $0x109] sm:$0xff]
      %v3424 = vld [vmem:[%s1322 + $0x111] sm:$0xff]
      %v3425 = vld [vmem:[%s1322 + $0x121] sm:$0xff]
      %v3426 = vld [vmem:[%s1322 + $0x129] sm:$0xff]
      %v3427 = vld [vmem:[%s1322 + $0x139] sm:$0xff]
      %v3428 = vld [vmem:[%s1322 + $0x141] sm:$0xff]
      %v3429 = vld [vmem:[%s1322 + $0x151] sm:$0xff]
      %v3430 = vld [vmem:[%s1322 + $0x159] sm:$0xff]
      %v3431 = vld [vmem:[%s1322 + $0x169] sm:$0xff]
      %v3432 = vld [vmem:[%s1322 + $0x171] sm:$0xff]
      %3465 = vrot.lane.b32.xlu0 %v3401, 56
      %v3466 = vpop.permute.xlu0 %3465
      %3467 = vrot.lane.b32.xlu0 %v3402, 56
      %v3468 = vpop.permute.xlu0 %3467
      %3469 = vrot.lane.b32.xlu0 %v3403, 56
      %v3470 = vpop.permute.xlu0 %3469
      %3471 = vrot.lane.b32.xlu0 %v3404, 56
      %v3472 = vpop.permute.xlu0 %3471
      %3473 = vrot.lane.b32.xlu0 %v3405, 56
      %v3474 = vpop.permute.xlu0 %3473
      %3475 = vrot.lane.b32.xlu0 %v3406, 56
      %v3476 = vpop.permute.xlu0 %3475
      %3477 = vrot.lane.b32.xlu0 %v3407, 56
      %v3478 = vpop.permute.xlu0 %3477
      %3479 = vrot.lane.b32.xlu0 %v3408, 56
      %v3480 = vpop.permute.xlu0 %3479
      %3481 = vrot.lane.b32.xlu0 %v3409, 56
      %v3482 = vpop.permute.xlu0 %3481
      %3483 = vrot.lane.b32.xlu0 %v3410, 56
      %v3484 = vpop.permute.xlu0 %3483
      %3485 = vrot.lane.b32.xlu0 %v3411, 56
      %v3486 = vpop.permute.xlu0 %3485
      %3487 = vrot.lane.b32.xlu0 %v3412, 56
      %v3488 = vpop.permute.xlu0 %3487
      %3489 = vrot.lane.b32.xlu0 %v3413, 56
      %v3490 = vpop.permute.xlu0 %3489
      %3491 = vrot.lane.b32.xlu0 %v3414, 56
      %v3492 = vpop.permute.xlu0 %3491
      %3493 = vrot.lane.b32.xlu0 %v3415, 56
      %v3494 = vpop.permute.xlu0 %3493
      %3495 = vrot.lane.b32.xlu0 %v3416, 56
      %v3496 = vpop.permute.xlu0 %3495
      %3497 = vrot.lane.b32.xlu0 %v3417, 56
      %v3498 = vpop.permute.xlu0 %3497
      %3499 = vrot.lane.b32.xlu0 %v3418, 56
      %v3500 = vpop.permute.xlu0 %3499
      %3501 = vrot.lane.b32.xlu0 %v3419, 56
      %v3502 = vpop.permute.xlu0 %3501
      %3503 = vrot.lane.b32.xlu0 %v3420, 56
      %v3504 = vpop.permute.xlu0 %3503
      %3505 = vrot.lane.b32.xlu0 %v3421, 56
      %v3506 = vpop.permute.xlu0 %3505
      %3507 = vrot.lane.b32.xlu0 %v3422, 56
      %v3508 = vpop.permute.xlu0 %3507
      %3509 = vrot.lane.b32.xlu0 %v3423, 56
      %v3510 = vpop.permute.xlu0 %3509
      %3511 = vrot.lane.b32.xlu0 %v3424, 56
      %v3512 = vpop.permute.xlu0 %3511
      %3513 = vrot.lane.b32.xlu0 %v3425, 56
      %v3514 = vpop.permute.xlu0 %3513
      %3515 = vrot.lane.b32.xlu0 %v3426, 56
      %v3516 = vpop.permute.xlu0 %3515
      %3517 = vrot.lane.b32.xlu0 %v3427, 56
      %v3518 = vpop.permute.xlu0 %3517
      %3519 = vrot.lane.b32.xlu0 %v3428, 56
      %v3520 = vpop.permute.xlu0 %3519
      %3521 = vrot.lane.b32.xlu0 %v3429, 56
      %v3522 = vpop.permute.xlu0 %3521
      %3523 = vrot.lane.b32.xlu0 %v3430, 56
      %v3524 = vpop.permute.xlu0 %3523
      %3525 = vrot.lane.b32.xlu0 %v3431, 56
      %v3526 = vpop.permute.xlu0 %3525
      %3527 = vrot.lane.b32.xlu0 %v3432, 56
      %v3528 = vpop.permute.xlu0 %3527
      %3561 = vst.msk [vmem:[#allocation3] sm:$0xff] %vm1676, %v3466
      %3562 = vst.msk [vmem:[#allocation3 + $0x8] sm:$0xff] %vm1676, %v3468
      %3563 = vst.msk [vmem:[#allocation3 + $0x10] sm:$0xff] %vm1676, %v3470
      %3564 = vst.msk [vmem:[#allocation3 + $0x18] sm:$0xff] %vm1676, %v3472
      %3565 = vst.msk [vmem:[#allocation3 + $0x20] sm:$0xff] %vm1676, %v3474
      %3566 = vst.msk [vmem:[#allocation3 + $0x28] sm:$0xff] %vm1676, %v3476
      %3567 = vst.msk [vmem:[#allocation3 + $0x30] sm:$0xff] %vm1676, %v3478
      %3568 = vst.msk [vmem:[#allocation3 + $0x38] sm:$0xff] %vm1676, %v3480
      %3569 = vst.msk [vmem:[#allocation3 + $0x40] sm:$0xff] %vm1676, %v3482
      %3570 = vst.msk [vmem:[#allocation3 + $0x48] sm:$0xff] %vm1676, %v3484
      %3571 = vst.msk [vmem:[#allocation3 + $0x50] sm:$0xff] %vm1676, %v3486
      %3572 = vst.msk [vmem:[#allocation3 + $0x58] sm:$0xff] %vm1676, %v3488
      %3573 = vst.msk [vmem:[#allocation3 + $0x60] sm:$0xff] %vm1676, %v3490
      %3574 = vst.msk [vmem:[#allocation3 + $0x68] sm:$0xff] %vm1676, %v3492
      %3575 = vst.msk [vmem:[#allocation3 + $0x70] sm:$0xff] %vm1676, %v3494
      %3576 = vst.msk [vmem:[#allocation3 + $0x78] sm:$0xff] %vm1676, %v3496
      %3577 = vst.msk [vmem:[#allocation3 + $0x80] sm:$0xff] %vm1676, %v3498
      %3578 = vst.msk [vmem:[#allocation3 + $0x88] sm:$0xff] %vm1676, %v3500
      %3579 = vst.msk [vmem:[#allocation3 + $0x90] sm:$0xff] %vm1676, %v3502
      %3580 = vst.msk [vmem:[#allocation3 + $0x98] sm:$0xff] %vm1676, %v3504
      %3581 = vst.msk [vmem:[#allocation3 + $0xa0] sm:$0xff] %vm1676, %v3506
      %3582 = vst.msk [vmem:[#allocation3 + $0xa8] sm:$0xff] %vm1676, %v3508
      %3583 = vst.msk [vmem:[#allocation3 + $0xb0] sm:$0xff] %vm1676, %v3510
      %3584 = vst.msk [vmem:[#allocation3 + $0xb8] sm:$0xff] %vm1676, %v3512
      %3585 = vst.msk [vmem:[#allocation3 + $0xc0] sm:$0xff] %vm1676, %v3514
      %3586 = vst.msk [vmem:[#allocation3 + $0xc8] sm:$0xff] %vm1676, %v3516
      %3587 = vst.msk [vmem:[#allocation3 + $0xd0] sm:$0xff] %vm1676, %v3518
      %3588 = vst.msk [vmem:[#allocation3 + $0xd8] sm:$0xff] %vm1676, %v3520
      %3589 = vst.msk [vmem:[#allocation3 + $0xe0] sm:$0xff] %vm1676, %v3522
      %3590 = vst.msk [vmem:[#allocation3 + $0xe8] sm:$0xff] %vm1676, %v3524
      %3591 = vst.msk [vmem:[#allocation3 + $0xf0] sm:$0xff] %vm1676, %v3526
      %3592 = vst.msk [vmem:[#allocation3 + $0xf8] sm:$0xff] %vm1676, %v3528
      %v3593 = vld [vmem:[%s1322 + $0x2] sm:$0xff]
      %v3594 = vld [vmem:[%s1322 + $0xa] sm:$0xff]
      %v3595 = vld [vmem:[%s1322 + $0x1a] sm:$0xff]
      %v3596 = vld [vmem:[%s1322 + $0x22] sm:$0xff]
      %v3597 = vld [vmem:[%s1322 + $0x32] sm:$0xff]
      %v3598 = vld [vmem:[%s1322 + $0x3a] sm:$0xff]
      %v3599 = vld [vmem:[%s1322 + $0x4a] sm:$0xff]
      %v3600 = vld [vmem:[%s1322 + $0x52] sm:$0xff]
      %v3601 = vld [vmem:[%s1322 + $0x62] sm:$0xff]
      %v3602 = vld [vmem:[%s1322 + $0x6a] sm:$0xff]
      %v3603 = vld [vmem:[%s1322 + $0x7a] sm:$0xff]
      %v3604 = vld [vmem:[%s1322 + $0x82] sm:$0xff]
      %v3605 = vld [vmem:[%s1322 + $0x92] sm:$0xff]
      %v3606 = vld [vmem:[%s1322 + $0x9a] sm:$0xff]
      %v3607 = vld [vmem:[%s1322 + $0xaa] sm:$0xff]
      %v3608 = vld [vmem:[%s1322 + $0xb2] sm:$0xff]
      %v3609 = vld [vmem:[%s1322 + $0xc2] sm:$0xff]
      %v3610 = vld [vmem:[%s1322 + $0xca] sm:$0xff]
      %v3611 = vld [vmem:[%s1322 + $0xda] sm:$0xff]
      %v3612 = vld [vmem:[%s1322 + $0xe2] sm:$0xff]
      %v3613 = vld [vmem:[%s1322 + $0xf2] sm:$0xff]
      %v3614 = vld [vmem:[%s1322 + $0xfa] sm:$0xff]
      %v3615 = vld [vmem:[%s1322 + $0x10a] sm:$0xff]
      %v3616 = vld [vmem:[%s1322 + $0x112] sm:$0xff]
      %v3617 = vld [vmem:[%s1322 + $0x122] sm:$0xff]
      %v3618 = vld [vmem:[%s1322 + $0x12a] sm:$0xff]
      %v3619 = vld [vmem:[%s1322 + $0x13a] sm:$0xff]
      %v3620 = vld [vmem:[%s1322 + $0x142] sm:$0xff]
      %v3621 = vld [vmem:[%s1322 + $0x152] sm:$0xff]
      %v3622 = vld [vmem:[%s1322 + $0x15a] sm:$0xff]
      %v3623 = vld [vmem:[%s1322 + $0x16a] sm:$0xff]
      %v3624 = vld [vmem:[%s1322 + $0x172] sm:$0xff]
      %3657 = vrot.lane.b32.xlu0 %v3593, 64
      %v3658 = vpop.permute.xlu0 %3657
      %3659 = vrot.lane.b32.xlu0 %v3594, 64
      %v3660 = vpop.permute.xlu0 %3659
      %3661 = vrot.lane.b32.xlu0 %v3595, 64
      %v3662 = vpop.permute.xlu0 %3661
      %3663 = vrot.lane.b32.xlu0 %v3596, 64
      %v3664 = vpop.permute.xlu0 %3663
      %3665 = vrot.lane.b32.xlu0 %v3597, 64
      %v3666 = vpop.permute.xlu0 %3665
      %3667 = vrot.lane.b32.xlu0 %v3598, 64
      %v3668 = vpop.permute.xlu0 %3667
      %3669 = vrot.lane.b32.xlu0 %v3599, 64
      %v3670 = vpop.permute.xlu0 %3669
      %3671 = vrot.lane.b32.xlu0 %v3600, 64
      %v3672 = vpop.permute.xlu0 %3671
      %3673 = vrot.lane.b32.xlu0 %v3601, 64
      %v3674 = vpop.permute.xlu0 %3673
      %3675 = vrot.lane.b32.xlu0 %v3602, 64
      %v3676 = vpop.permute.xlu0 %3675
      %3677 = vrot.lane.b32.xlu0 %v3603, 64
      %v3678 = vpop.permute.xlu0 %3677
      %3679 = vrot.lane.b32.xlu0 %v3604, 64
      %v3680 = vpop.permute.xlu0 %3679
      %3681 = vrot.lane.b32.xlu0 %v3605, 64
      %v3682 = vpop.permute.xlu0 %3681
      %3683 = vrot.lane.b32.xlu0 %v3606, 64
      %v3684 = vpop.permute.xlu0 %3683
      %3685 = vrot.lane.b32.xlu0 %v3607, 64
      %v3686 = vpop.permute.xlu0 %3685
      %3687 = vrot.lane.b32.xlu0 %v3608, 64
      %v3688 = vpop.permute.xlu0 %3687
      %3689 = vrot.lane.b32.xlu0 %v3609, 64
      %v3690 = vpop.permute.xlu0 %3689
      %3691 = vrot.lane.b32.xlu0 %v3610, 64
      %v3692 = vpop.permute.xlu0 %3691
      %3693 = vrot.lane.b32.xlu0 %v3611, 64
      %v3694 = vpop.permute.xlu0 %3693
      %3695 = vrot.lane.b32.xlu0 %v3612, 64
      %v3696 = vpop.permute.xlu0 %3695
      %3697 = vrot.lane.b32.xlu0 %v3613, 64
      %v3698 = vpop.permute.xlu0 %3697
      %3699 = vrot.lane.b32.xlu0 %v3614, 64
      %v3700 = vpop.permute.xlu0 %3699
      %3701 = vrot.lane.b32.xlu0 %v3615, 64
      %v3702 = vpop.permute.xlu0 %3701
      %3703 = vrot.lane.b32.xlu0 %v3616, 64
      %v3704 = vpop.permute.xlu0 %3703
      %3705 = vrot.lane.b32.xlu0 %v3617, 64
      %v3706 = vpop.permute.xlu0 %3705
      %3707 = vrot.lane.b32.xlu0 %v3618, 64
      %v3708 = vpop.permute.xlu0 %3707
      %3709 = vrot.lane.b32.xlu0 %v3619, 64
      %v3710 = vpop.permute.xlu0 %3709
      %3711 = vrot.lane.b32.xlu0 %v3620, 64
      %v3712 = vpop.permute.xlu0 %3711
      %3713 = vrot.lane.b32.xlu0 %v3621, 64
      %v3714 = vpop.permute.xlu0 %3713
      %3715 = vrot.lane.b32.xlu0 %v3622, 64
      %v3716 = vpop.permute.xlu0 %3715
      %3717 = vrot.lane.b32.xlu0 %v3623, 64
      %v3718 = vpop.permute.xlu0 %3717
      %3719 = vrot.lane.b32.xlu0 %v3624, 64
      %v3720 = vpop.permute.xlu0 %3719
      %3753 = vst.msk [vmem:[#allocation3] sm:$0xff] %vm1869, %v3658
      %3754 = vst.msk [vmem:[#allocation3 + $0x8] sm:$0xff] %vm1869, %v3660
      %3755 = vst.msk [vmem:[#allocation3 + $0x10] sm:$0xff] %vm1869, %v3662
      %3756 = vst.msk [vmem:[#allocation3 + $0x18] sm:$0xff] %vm1869, %v3664
      %3757 = vst.msk [vmem:[#allocation3 + $0x20] sm:$0xff] %vm1869, %v3666
      %3758 = vst.msk [vmem:[#allocation3 + $0x28] sm:$0xff] %vm1869, %v3668
      %3759 = vst.msk [vmem:[#allocation3 + $0x30] sm:$0xff] %vm1869, %v3670
      %3760 = vst.msk [vmem:[#allocation3 + $0x38] sm:$0xff] %vm1869, %v3672
      %3761 = vst.msk [vmem:[#allocation3 + $0x40] sm:$0xff] %vm1869, %v3674
      %3762 = vst.msk [vmem:[#allocation3 + $0x48] sm:$0xff] %vm1869, %v3676
      %3763 = vst.msk [vmem:[#allocation3 + $0x50] sm:$0xff] %vm1869, %v3678
      %3764 = vst.msk [vmem:[#allocation3 + $0x58] sm:$0xff] %vm1869, %v3680
      %3765 = vst.msk [vmem:[#allocation3 + $0x60] sm:$0xff] %vm1869, %v3682
      %3766 = vst.msk [vmem:[#allocation3 + $0x68] sm:$0xff] %vm1869, %v3684
      %3767 = vst.msk [vmem:[#allocation3 + $0x70] sm:$0xff] %vm1869, %v3686
      %3768 = vst.msk [vmem:[#allocation3 + $0x78] sm:$0xff] %vm1869, %v3688
      %3769 = vst.msk [vmem:[#allocation3 + $0x80] sm:$0xff] %vm1869, %v3690
      %3770 = vst.msk [vmem:[#allocation3 + $0x88] sm:$0xff] %vm1869, %v3692
      %3771 = vst.msk [vmem:[#allocation3 + $0x90] sm:$0xff] %vm1869, %v3694
      %3772 = vst.msk [vmem:[#allocation3 + $0x98] sm:$0xff] %vm1869, %v3696
      %3773 = vst.msk [vmem:[#allocation3 + $0xa0] sm:$0xff] %vm1869, %v3698
      %3774 = vst.msk [vmem:[#allocation3 + $0xa8] sm:$0xff] %vm1869, %v3700
      %3775 = vst.msk [vmem:[#allocation3 + $0xb0] sm:$0xff] %vm1869, %v3702
      %3776 = vst.msk [vmem:[#allocation3 + $0xb8] sm:$0xff] %vm1869, %v3704
      %3777 = vst.msk [vmem:[#allocation3 + $0xc0] sm:$0xff] %vm1869, %v3706
      %3778 = vst.msk [vmem:[#allocation3 + $0xc8] sm:$0xff] %vm1869, %v3708
      %3779 = vst.msk [vmem:[#allocation3 + $0xd0] sm:$0xff] %vm1869, %v3710
      %3780 = vst.msk [vmem:[#allocation3 + $0xd8] sm:$0xff] %vm1869, %v3712
      %3781 = vst.msk [vmem:[#allocation3 + $0xe0] sm:$0xff] %vm1869, %v3714
      %3782 = vst.msk [vmem:[#allocation3 + $0xe8] sm:$0xff] %vm1869, %v3716
      %3783 = vst.msk [vmem:[#allocation3 + $0xf0] sm:$0xff] %vm1869, %v3718
      %3784 = vst.msk [vmem:[#allocation3 + $0xf8] sm:$0xff] %vm1869, %v3720
      %v3785 = vld [vmem:[#allocation3] sm:$0xff]
      %v3786 = vld [vmem:[#allocation3 + $0x8] sm:$0xff]
      %v3787 = vld [vmem:[#allocation3 + $0x10] sm:$0xff]
      %v3788 = vld [vmem:[#allocation3 + $0x18] sm:$0xff]
      %v3789 = vld [vmem:[#allocation3 + $0x20] sm:$0xff]
      %v3790 = vld [vmem:[#allocation3 + $0x28] sm:$0xff]
      %v3791 = vld [vmem:[#allocation3 + $0x30] sm:$0xff]
      %v3792 = vld [vmem:[#allocation3 + $0x38] sm:$0xff]
      %v3793 = vld [vmem:[#allocation3 + $0x40] sm:$0xff]
      %v3794 = vld [vmem:[#allocation3 + $0x48] sm:$0xff]
      %v3795 = vld [vmem:[#allocation3 + $0x50] sm:$0xff]
      %v3796 = vld [vmem:[#allocation3 + $0x58] sm:$0xff]
      %v3797 = vld [vmem:[#allocation3 + $0x60] sm:$0xff]
      %v3798 = vld [vmem:[#allocation3 + $0x68] sm:$0xff]
      %v3799 = vld [vmem:[#allocation3 + $0x70] sm:$0xff]
      %v3800 = vld [vmem:[#allocation3 + $0x78] sm:$0xff]
      %v3801 = vld [vmem:[#allocation3 + $0x80] sm:$0xff]
      %v3802 = vld [vmem:[#allocation3 + $0x88] sm:$0xff]
      %v3803 = vld [vmem:[#allocation3 + $0x90] sm:$0xff]
      %v3804 = vld [vmem:[#allocation3 + $0x98] sm:$0xff]
      %v3805 = vld [vmem:[#allocation3 + $0xa0] sm:$0xff]
      %v3806 = vld [vmem:[#allocation3 + $0xa8] sm:$0xff]
      %v3807 = vld [vmem:[#allocation3 + $0xb0] sm:$0xff]
      %v3808 = vld [vmem:[#allocation3 + $0xb8] sm:$0xff]
      %v3809 = vld [vmem:[#allocation3 + $0xc0] sm:$0xff]
      %v3810 = vld [vmem:[#allocation3 + $0xc8] sm:$0xff]
      %v3811 = vld [vmem:[#allocation3 + $0xd0] sm:$0xff]
      %v3812 = vld [vmem:[#allocation3 + $0xd8] sm:$0xff]
      %v3813 = vld [vmem:[#allocation3 + $0xe0] sm:$0xff]
      %v3814 = vld [vmem:[#allocation3 + $0xe8] sm:$0xff]
      %v3815 = vld [vmem:[#allocation3 + $0xf0] sm:$0xff]
      %v3816 = vld [vmem:[#allocation3 + $0xf8] sm:$0xff]
      %v3817 = vld [vmem:[%s2] sm:$0xff]
      %v3818 = vld [vmem:[%s2 + $0x8] sm:$0xff]
      %v3819 = vld [vmem:[%s2 + $0x10] sm:$0xff]
      %v3820 = vld [vmem:[%s2 + $0x18] sm:$0xff]
      %v3821 = vld [vmem:[%s2 + $0x20] sm:$0xff]
      %v3822 = vld [vmem:[%s2 + $0x28] sm:$0xff]
      %v3823 = vld [vmem:[%s2 + $0x30] sm:$0xff]
      %v3824 = vld [vmem:[%s2 + $0x38] sm:$0xff]
      %v3825 = vld [vmem:[%s2 + $0x40] sm:$0xff]
      %v3827 = vsel %vm1943, %v3785, 0
      %v3830 = vsel %vm1943, %v3786, 0
      %v3833 = vsel %vm1943, %v3787, 0
      %v3836 = vsel %vm1943, %v3788, 0
      %v3839 = vsel %vm1943, %v3789, 0
      %v3842 = vsel %vm1943, %v3790, 0
      %v3845 = vsel %vm1943, %v3791, 0
      %v3848 = vsel %vm1943, %v3792, 0
      %v3851 = vsel %vm1943, %v3793, 0
      %v3854 = vsel %vm1943, %v3794, 0
      %v3857 = vsel %vm1943, %v3795, 0
      %v3860 = vsel %vm1943, %v3796, 0
      %v3863 = vsel %vm1943, %v3797, 0
      %v3866 = vsel %vm1943, %v3798, 0
      %v3869 = vsel %vm1943, %v3799, 0
      %v3872 = vsel %vm1943, %v3800, 0
      %v3875 = vsel %vm1943, %v3801, 0
      %v3878 = vsel %vm1943, %v3802, 0
      %v3881 = vsel %vm1943, %v3803, 0
      %v3884 = vsel %vm1943, %v3804, 0
      %v3887 = vsel %vm1943, %v3805, 0
      %v3890 = vsel %vm1943, %v3806, 0
      %v3893 = vsel %vm1943, %v3807, 0
      %v3896 = vsel %vm1943, %v3808, 0
      %v3899 = vsel %vm1943, %v3809, 0
      %v3902 = vsel %vm1943, %v3810, 0
      %v3905 = vsel %vm1943, %v3811, 0
      %v3908 = vsel %vm1943, %v3812, 0
      %v3911 = vsel %vm1943, %v3813, 0
      %v3914 = vsel %vm1943, %v3814, 0
      %v3917 = vsel %vm1943, %v3815, 0
      %v3920 = vsel %vm1943, %v3816, 0
      %3922 = vmatpush.msra.mxu0 0.0
      %3923 = vmatpush.msra.mxu0 0.0
      %3924 = vmatpush.msra.mxu0 0.0
      %3925 = vmatpush.msra.mxu0 0.0
      %3926 = vmatpush.msra.mxu0 0.0
      %3927 = vmatpush.msra.mxu0 0.0
      %3928 = vmatpush.msra.mxu0 0.0
      %3929 = vmatpush.msra.mxu0 %v3825
      %3930 = vmatpush.msra.mxu0 %v3824
      %3931 = vmatpush.msra.mxu0 %v3823
      %3932 = vmatpush.msra.mxu0 %v3822
      %3933 = vmatpush.msra.mxu0 %v3821
      %3934 = vmatpush.msra.mxu0 %v3820
      %3935 = vmatpush.msra.mxu0 %v3819
      %3936 = vmatpush.msra.mxu0 %v3818
      %3937 = vmatpush.msra.mxu0 %v3817
      %3938 = vmatmul.f32.gmra.mxu0 %v3827
      %v3939 = vpop.f32.mrf.mxu0
      %v3940 = vadd.f32 0.0, %v3939
      %3941 = vmatmul.f32.gmra.mxu0 %v3830
      %v3942 = vpop.f32.mrf.mxu0
      %v3943 = vadd.f32 0.0, %v3942
      %3944 = vmatmul.f32.gmra.mxu0 %v3833
      %v3945 = vpop.f32.mrf.mxu0
      %v3946 = vadd.f32 0.0, %v3945
      %3947 = vmatmul.f32.gmra.mxu0 %v3836
      %v3948 = vpop.f32.mrf.mxu0
      %v3949 = vadd.f32 0.0, %v3948
      %3950 = vmatmul.f32.gmra.mxu0 %v3839
      %v3951 = vpop.f32.mrf.mxu0
      %v3952 = vadd.f32 0.0, %v3951
      %3953 = vmatmul.f32.gmra.mxu0 %v3842
      %v3954 = vpop.f32.mrf.mxu0
      %v3955 = vadd.f32 0.0, %v3954
      %3956 = vmatmul.f32.gmra.mxu0 %v3845
      %v3957 = vpop.f32.mrf.mxu0
      %v3958 = vadd.f32 0.0, %v3957
      %3959 = vmatmul.f32.gmra.mxu0 %v3848
      %v3960 = vpop.f32.mrf.mxu0
      %v3961 = vadd.f32 0.0, %v3960
      %3962 = vmatmul.f32.gmra.mxu0 %v3851
      %v3963 = vpop.f32.mrf.mxu0
      %v3964 = vadd.f32 0.0, %v3963
      %3965 = vmatmul.f32.gmra.mxu0 %v3854
      %v3966 = vpop.f32.mrf.mxu0
      %v3967 = vadd.f32 0.0, %v3966
      %3968 = vmatmul.f32.gmra.mxu0 %v3857
      %v3969 = vpop.f32.mrf.mxu0
      %v3970 = vadd.f32 0.0, %v3969
      %3971 = vmatmul.f32.gmra.mxu0 %v3860
      %v3972 = vpop.f32.mrf.mxu0
      %v3973 = vadd.f32 0.0, %v3972
      %3974 = vmatmul.f32.gmra.mxu0 %v3863
      %v3975 = vpop.f32.mrf.mxu0
      %v3976 = vadd.f32 0.0, %v3975
      %3977 = vmatmul.f32.gmra.mxu0 %v3866
      %v3978 = vpop.f32.mrf.mxu0
      %v3979 = vadd.f32 0.0, %v3978
      %3980 = vmatmul.f32.gmra.mxu0 %v3869
      %v3981 = vpop.f32.mrf.mxu0
      %v3982 = vadd.f32 0.0, %v3981
      %3983 = vmatmul.f32.gmra.mxu0 %v3872
      %v3984 = vpop.f32.mrf.mxu0
      %v3985 = vadd.f32 0.0, %v3984
      %3986 = vmatmul.f32.gmra.mxu0 %v3875
      %v3987 = vpop.f32.mrf.mxu0
      %v3988 = vadd.f32 0.0, %v3987
      %3989 = vmatmul.f32.gmra.mxu0 %v3878
      %v3990 = vpop.f32.mrf.mxu0
      %v3991 = vadd.f32 0.0, %v3990
      %3992 = vmatmul.f32.gmra.mxu0 %v3881
      %v3993 = vpop.f32.mrf.mxu0
      %v3994 = vadd.f32 0.0, %v3993
      %3995 = vmatmul.f32.gmra.mxu0 %v3884
      %v3996 = vpop.f32.mrf.mxu0
      %v3997 = vadd.f32 0.0, %v3996
      %3998 = vmatmul.f32.gmra.mxu0 %v3887
      %v3999 = vpop.f32.mrf.mxu0
      %v4000 = vadd.f32 0.0, %v3999
      %4001 = vmatmul.f32.gmra.mxu0 %v3890
      %v4002 = vpop.f32.mrf.mxu0
      %v4003 = vadd.f32 0.0, %v4002
      %4004 = vmatmul.f32.gmra.mxu0 %v3893
      %v4005 = vpop.f32.mrf.mxu0
      %v4006 = vadd.f32 0.0, %v4005
      %4007 = vmatmul.f32.gmra.mxu0 %v3896
      %v4008 = vpop.f32.mrf.mxu0
      %v4009 = vadd.f32 0.0, %v4008
      %4010 = vmatmul.f32.gmra.mxu0 %v3899
      %v4011 = vpop.f32.mrf.mxu0
      %v4012 = vadd.f32 0.0, %v4011
      %4013 = vmatmul.f32.gmra.mxu0 %v3902
      %v4014 = vpop.f32.mrf.mxu0
      %v4015 = vadd.f32 0.0, %v4014
      %4016 = vmatmul.f32.gmra.mxu0 %v3905
      %v4017 = vpop.f32.mrf.mxu0
      %v4018 = vadd.f32 0.0, %v4017
      %4019 = vmatmul.f32.gmra.mxu0 %v3908
      %v4020 = vpop.f32.mrf.mxu0
      %v4021 = vadd.f32 0.0, %v4020
      %4022 = vmatmul.f32.gmra.mxu0 %v3911
      %v4023 = vpop.f32.mrf.mxu0
      %v4024 = vadd.f32 0.0, %v4023
      %4025 = vmatmul.f32.gmra.mxu0 %v3914
      %v4026 = vpop.f32.mrf.mxu0
      %v4027 = vadd.f32 0.0, %v4026
      %4028 = vmatmul.f32.gmra.mxu0 %v3917
      %v4029 = vpop.f32.mrf.mxu0
      %v4030 = vadd.f32 0.0, %v4029
      %4031 = vmatmul.f32.gmra.mxu0 %v3920
      %v4032 = vpop.f32.mrf.mxu0
      %v4033 = vadd.f32 0.0, %v4032
      %4034 = vdwg.mxu0
      %4035 = vst [vmem:[%s170] sm:$0xff] %v3940
      %4036 = vst [vmem:[%s170 + $0x8] sm:$0xff] %v3943
      %4037 = vst [vmem:[%s170 + $0x10] sm:$0xff] %v3946
      %4038 = vst [vmem:[%s170 + $0x18] sm:$0xff] %v3949
      %4039 = vst [vmem:[%s170 + $0x20] sm:$0xff] %v3952
      %4040 = vst [vmem:[%s170 + $0x28] sm:$0xff] %v3955
      %4041 = vst [vmem:[%s170 + $0x30] sm:$0xff] %v3958
      %4042 = vst [vmem:[%s170 + $0x38] sm:$0xff] %v3961
      %4043 = vst [vmem:[%s170 + $0x40] sm:$0xff] %v3964
      %4044 = vst [vmem:[%s170 + $0x48] sm:$0xff] %v3967
      %4045 = vst [vmem:[%s170 + $0x50] sm:$0xff] %v3970
      %4046 = vst [vmem:[%s170 + $0x58] sm:$0xff] %v3973
      %4047 = vst [vmem:[%s170 + $0x60] sm:$0xff] %v3976
      %4048 = vst [vmem:[%s170 + $0x68] sm:$0xff] %v3979
      %4049 = vst [vmem:[%s170 + $0x70] sm:$0xff] %v3982
      %4050 = vst [vmem:[%s170 + $0x78] sm:$0xff] %v3985
      %4051 = vst [vmem:[%s170 + $0x80] sm:$0xff] %v3988
      %4052 = vst [vmem:[%s170 + $0x88] sm:$0xff] %v3991
      %4053 = vst [vmem:[%s170 + $0x90] sm:$0xff] %v3994
      %4054 = vst [vmem:[%s170 + $0x98] sm:$0xff] %v3997
      %4055 = vst [vmem:[%s170 + $0xa0] sm:$0xff] %v4000
      %4056 = vst [vmem:[%s170 + $0xa8] sm:$0xff] %v4003
      %4057 = vst [vmem:[%s170 + $0xb0] sm:$0xff] %v4006
      %4058 = vst [vmem:[%s170 + $0xb8] sm:$0xff] %v4009
      %4059 = vst [vmem:[%s170 + $0xc0] sm:$0xff] %v4012
      %4060 = vst [vmem:[%s170 + $0xc8] sm:$0xff] %v4015
      %4061 = vst [vmem:[%s170 + $0xd0] sm:$0xff] %v4018
      %4062 = vst [vmem:[%s170 + $0xd8] sm:$0xff] %v4021
      %4063 = vst [vmem:[%s170 + $0xe0] sm:$0xff] %v4024
      %4064 = vst [vmem:[%s170 + $0xe8] sm:$0xff] %v4027
      %4065 = vst [vmem:[%s170 + $0xf0] sm:$0xff] %v4030
      %4066 = vst [vmem:[%s170 + $0xf8] sm:$0xff] %v4033
      %p4067 = scmp.lt.s32.totalorder %s14, 1
      %s4068 = scalar_select %p4067, %s14, 1
      %s4069 = smul.addr %s4068, 32
      %s4070 = smul.addr %s4069, 8
      %s4071 = scalar_lea.vmem %s3, %s4070
      // Predicated region
      $region33: #{same_conv_forward.1} parent=31 // pred_check
        %p4072 = pneg %p100
      $region34: #{same_conv_forward.1} parent=31 // pred_check_branch
        %4074 = sbr.rel (%p4072) target = $region36
      $region35: #{same_conv_forward.1} parent=31 // pred_region
        _
      $region36: #{same_conv_forward.1} parent=31 // pred_fallthru
        _
    $region32: #{same_conv_forward.1} parent=5 // pred_fallthru
      _
    %p4075 = scmp.le.s32.totalorder 2, %s9
    // Predicated region
    $region37: #{same_conv_forward.1} parent=5 // pred_check
      %p4076 = pneg %p4075
    $region38: #{same_conv_forward.1} parent=5 // pred_check_branch
      %4078 = sbr.rel (%p4076) target = $region40
    $region39: #{same_conv_forward.1} parent=5 // pred_region
      %s4079 = ssub.s32 %s9, 2
      // Predicated region
      $region41: #{same_conv_forward.1} parent=39 // pred_check
        %p4080 = pneg %p106
      $region42: #{same_conv_forward.1} parent=39 // pred_check_branch
        %4082 = sbr.rel (%p4080) target = $region44
      $region43: #{same_conv_forward.1} parent=39 // pred_region
        %p4083 = scmp.lt.s32.totalorder %s15, 1
        %s4084 = scalar_select %p4083, %s15, 1
        %s4085 = smul.addr %s4084, 32
        %s4086 = smul.addr %s4085, 8
        %s4087 = scalar_lea.vmem %s3, %s4086
      $region44: #{same_conv_forward.1} parent=39 // pred_fallthru
        _
    $region40: #{same_conv_forward.1} parent=5 // pred_fallthru
      _
  $region6: #{same_conv_forward.1} parent=0 // loop_footer
    %s13 = sadd.s32 1, %s9
  $region7: #{same_conv_forward.1} parent=0 // loop_footer_branch
    %8 = sbr.rel target = $region3
  $region8: #{same_conv_forward.1} parent=0 // loop_exit
    _

</llo_original>
